<compile_context>
chip_gen: v6e
topology: v6e:2x2x1
jax: 0.10.0
libtpu: 0.0.40
codegen_flags: <defaults>
</compile_context>

<pallas_src>
import functools

import jax
import jax.numpy as jnp
from jax import lax
from jax.experimental import pallas as pl
from jax.experimental.pallas import tpu as pltpu


def _round_up(x, m):
    return ((x + m - 1) // m) * m


# -----------------------------------------------------------------------------
# Pallas kernel: one (batch-tile, time-chunk) grid step of the Vnet forward
# -----------------------------------------------------------------------------
def vnet_kernel(x_ref,        # (Bt, TC, D)  batch-first input chunk
                len_ref,      # (Bt, 1)      int32 sequence lengths
                wih_r_ref, wih_z_ref, wih_n_ref,   # (D, H) each (pre-transposed)
                whh_r_ref, whh_z_ref, whh_n_ref,   # (H, H) each (pre-transposed)
                b_r_ref, b_z_ref, b_in_ref, b_hn_ref,   # (1, H) each
                fc1w_ref,     # (H, H) (pre-transposed)
                fc1b_ref,     # (1, H)
                fc2w_ref,     # (1, H) row vector (lane reduction, not matmul)
                fc2b_ref,     # (1, 1)
                out_ref,      # (Bt, 1)
                h_scr):       # VMEM scratch (Bt, H) f32 — hidden carry
    Bt, TC, D = x_ref.shape
    H = h_scr.shape[1]
    c = pl.program_id(1)                     # time-chunk index (inner / arbitrary)

    @pl.when(c == 0)
    def _():
        h_scr[...] = jnp.zeros_like(h_scr)

    # ---- bulk input projection for the whole chunk: 3 MXU matmuls, off the
    #      serial critical path.  r/z input+hidden biases are pre-folded. ----
    x_flat = x_ref[...].reshape(Bt * TC, D)
    gi_r = (jnp.dot(x_flat, wih_r_ref[...], preferred_element_type=jnp.float32)
            + b_r_ref[...]).reshape(Bt, TC, H)
    gi_z = (jnp.dot(x_flat, wih_z_ref[...], preferred_element_type=jnp.float32)
            + b_z_ref[...]).reshape(Bt, TC, H)
    gi_n = (jnp.dot(x_flat, wih_n_ref[...], preferred_element_type=jnp.float32)
            + b_in_ref[...]).reshape(Bt, TC, H)

    # hoisted loop invariants (JAX does not CSE broadcasts inside the loop)
    whh_r = whh_r_ref[...]
    whh_z = whh_z_ref[...]
    whh_n = whh_n_ref[...]
    wdt = whh_r.dtype
    b_hn = jnp.broadcast_to(b_hn_ref[...], (Bt, H)).astype(jnp.float32)
    lens = len_ref[...]                      # (Bt, 1) int32
    t0 = c * TC

    # ---- serial GRU recurrence over the chunk (statically unrolled) ----
    h = h_scr[...]
    for tt in range(TC):
        hc = h.astype(wdt)
        gh_r = jnp.dot(hc, whh_r, preferred_element_type=jnp.float32)
        gh_z = jnp.dot(hc, whh_z, preferred_element_type=jnp.float32)
        gh_n = jnp.dot(hc, whh_n, preferred_element_type=jnp.float32) + b_hn
        r = jax.nn.sigmoid(gi_r[:, tt, :] + gh_r)
        z = jax.nn.sigmoid(gi_z[:, tt, :] + gh_z)
        n = jnp.tanh(gi_n[:, tt, :] + r * gh_n)
        h_cand = (1.0 - z) * n + z * h
        # Freeze h once t >= length: the final h equals h_{length-1}, which is
        # exactly the mask-then-gather of the PyTorch forward (lengths in [1,T]).
        h = jnp.where((t0 + tt) < lens, h_cand, h)
    h_scr[...] = h

    # ---- MLP head, only after the last time chunk of this batch tile ----
    @pl.when(c == pl.num_programs(1) - 1)
    def _():
        hid = jnp.maximum(
            jnp.dot(h.astype(fc1w_ref.dtype), fc1w_ref[...],
                    preferred_element_type=jnp.float32) + fc1b_ref[...], 0.0)
        # fc2 is H -> 1: VPU lane reduction instead of an N=1 MXU matmul.
        out_ref[...] = (jnp.sum(hid * fc2w_ref[...], axis=-1, keepdims=True)
                        + fc2b_ref[...])


# -----------------------------------------------------------------------------
# Wrapper
# -----------------------------------------------------------------------------
@functools.partial(jax.jit, static_argnames=("compute_dtype",))
def vnet_forward(x_padded, lengths, params, *, compute_dtype=jnp.float32):
    """x_padded: (B, T, D) batch-first (PyTorch pad_sequence layout), zero padded.
    lengths:  (B,) ints in [1, T].  Returns (B, 1) float32."""
    B, T, D = x_padded.shape
    H = params["fc1_w"].shape[0]

    # batch tile: sublane-aligned (>=8), capped at 128 (MXU M dimension)
    b_tile = min(_round_up(B, 8), 128)
    Bp = _round_up(B, b_tile)
    # time chunk: statically unrolled in-kernel; streamed via the grid
    t_chunk = min(_round_up(T, 8), 32)
    Tp = _round_up(T, t_chunk)
    n_b, n_c = Bp // b_tile, Tp // t_chunk

    cdt = compute_dtype
    x_p = (jnp.zeros((Bp, Tp, D), jnp.float32)
           .at[:B, :T, :].set(x_padded.astype(jnp.float32))).astype(cdt)
    # padded rows get length 1 (any valid value); their outputs are sliced away
    len_p = jnp.ones((Bp, 1), jnp.int32).at[:B, 0].set(lengths.astype(jnp.int32))

    w_ih, w_hh = params["w_ih"], params["w_hh"]          # (3H, D), (3H, H)
    b_ih, b_hh = params["b_ih"], params["b_hh"]          # (3H,),  (3H,)

    # per-gate, pre-transposed weights (contraction on the lane dim)
    wih_r, wih_z, wih_n = (w_ih[0:H].T.astype(cdt),
                           w_ih[H:2 * H].T.astype(cdt),
                           w_ih[2 * H:3 * H].T.astype(cdt))
    whh_r, whh_z, whh_n = (w_hh[0:H].T.astype(cdt),
                           w_hh[H:2 * H].T.astype(cdt),
                           w_hh[2 * H:3 * H].T.astype(cdt))
    # r/z biases fold additively; the n-gate hidden bias stays separate because
    # it sits inside the r * (...) term.
    b_r = (b_ih[0:H] + b_hh[0:H]).reshape(1, H).astype(jnp.float32)
    b_z = (b_ih[H:2 * H] + b_hh[H:2 * H]).reshape(1, H).astype(jnp.float32)
    b_in = b_ih[2 * H:3 * H].reshape(1, H).astype(jnp.float32)
    b_hn = b_hh[2 * H:3 * H].reshape(1, H).astype(jnp.float32)

    fc1w = params["fc1_w"].T.astype(cdt)                 # (H, H)
    fc1b = params["fc1_b"].reshape(1, H).astype(jnp.float32)
    fc2w = params["fc2_w"].reshape(1, H).astype(jnp.float32)
    fc2b = params["fc2_b"].reshape(1, 1).astype(jnp.float32)

    weights = (wih_r, wih_z, wih_n, whh_r, whh_z, whh_n,
               b_r, b_z, b_in, b_hn, fc1w, fc1b, fc2w, fc2b)

    in_specs = (
        [pl.BlockSpec((b_tile, t_chunk, D), lambda b, c: (b, c, 0)),   # x chunk
         pl.BlockSpec((b_tile, 1), lambda b, c: (b, 0))]               # lengths
        + [pl.BlockSpec(w.shape, lambda b, c: (0, 0)) for w in weights]
    )

    out = pl.pallas_call(
        vnet_kernel,
        out_shape=jax.ShapeDtypeStruct((Bp, 1), jnp.float32),
        grid=(n_b, n_c),
        in_specs=in_specs,
        out_specs=pl.BlockSpec((b_tile, 1), lambda b, c: (b, 0)),
        scratch_shapes=[pltpu.VMEM((b_tile, H), jnp.float32)],
        compiler_params=pltpu.CompilerParams(
            # batch tiles independent (megacore on v7x); time is a carried chain
            dimension_semantics=("parallel", "arbitrary"),
            # explicit budget, comfortably under v7x's 64 MiB/TC
            vmem_limit_bytes=32 * 1024 * 1024),
    )(x_p, len_p, *weights)

    return out[:B]


# -----------------------------------------------------------------------------
# Pure-JAX reference (mirrors the PyTorch forward) for a correctness check
# -----------------------------------------------------------------------------
def vnet_reference(x_padded, lengths, params):
    B, T, D = x_padded.shape
    H = params["fc1_w"].shape[0]
    w_ih, w_hh = params["w_ih"], params["w_hh"]
    b_ih, b_hh = params["b_ih"], params["b_hh"]

    def cell(h, x_t):
        gi = x_t @ w_ih.T + b_ih
        gh = h @ w_hh.T + b_hh
        r = jax.nn.sigmoid(gi[:, 0:H] + gh[:, 0:H])
        z = jax.nn.sigmoid(gi[:, H:2 * H] + gh[:, H:2 * H])
        n = jnp.tanh(gi[:, 2 * H:] + r * gh[:, 2 * H:])
        h_new = (1.0 - z) * n + z * h
        return h_new, h_new

    h0 = jnp.zeros((B, H), jnp.float32)
    _, hs = lax.scan(cell, h0, jnp.transpose(x_padded, (1, 0, 2)))
    hs = jnp.transpose(hs, (1, 0, 2))                       # (B, T, H)
    mask = (jnp.arange(T)[None, :] < lengths[:, None]).astype(jnp.float32)
    hs = hs * mask[:, :, None]
    h_last = hs[jnp.arange(B), lengths - 1]                 # (B, H)
    hid = jax.nn.relu(h_last @ params["fc1_w"].T + params["fc1_b"])
    return hid @ params["fc2_w"].T + params["fc2_b"]


# -----------------------------------------------------------------------------
# Deterministic parameter construction
# -----------------------------------------------------------------------------
def make_params(key, obs_dim, hidden_dim):
    ks = jax.random.split(key, 8)
    s = 0.1
    return {
        "w_ih": s * jax.random.normal(ks[0], (3 * hidden_dim, obs_dim), jnp.float32),
        "w_hh": s * jax.random.normal(ks[1], (3 * hidden_dim, hidden_dim), jnp.float32),
        "b_ih": s * jax.random.normal(ks[2], (3 * hidden_dim,), jnp.float32),
        "b_hh": s * jax.random.normal(ks[3], (3 * hidden_dim,), jnp.float32),
        "fc1_w": s * jax.random.normal(ks[4], (hidden_dim, hidden_dim), jnp.float32),
        "fc1_b": s * jax.random.normal(ks[5], (hidden_dim,), jnp.float32),
        "fc2_w": s * jax.random.normal(ks[6], (1, hidden_dim), jnp.float32),
        "fc2_b": s * jax.random.normal(ks[7], (1,), jnp.float32),
    }


if __name__ == "__main__":
    key = jax.random.PRNGKey(0)
    B, T, OBS_DIM, HIDDEN = 2, 8, 4, 32

    kp, kx = jax.random.split(key)
    params = make_params(kp, OBS_DIM, HIDDEN)

    # Variable-length sequences, zero padded (= torch pad_sequence behavior).
    # TODO(synk): the PyTorch module pads a Python list of ragged tensors in
    # forward(); here pre-padded input + lengths are supplied explicitly.
    lengths = jnp.array([8, 5], dtype=jnp.int32)
    x_full = jax.random.normal(kx, (B, T, OBS_DIM), jnp.float32)
    pad_mask = (jnp.arange(T)[None, :] < lengths[:, None]).astype(jnp.float32)
    x_padded = x_full * pad_mask[:, :, None]

    out = vnet_forward(x_padded, lengths, params)
    out = jax.block_until_ready(out)

    ref = vnet_reference(x_padded, lengths, params)
    assert out.shape == (B, 1)
    assert jnp.max(jnp.abs(out - ref)) < 1e-4, (out, ref)

    print("KERNEL_OK")
</pallas_src>

<mosaic_0001>
module attributes {stable_mosaic.version = 11 : i64} {
  func.func @vnet_kernel(%arg0: i32, %arg1: i32, %arg2: memref<8x8x4xf32, #tpu.memory_space<vmem>>, %arg3: memref<8x1xi32, #tpu.memory_space<vmem>>, %arg4: memref<4x32xf32, #tpu.memory_space<vmem>>, %arg5: memref<4x32xf32, #tpu.memory_space<vmem>>, %arg6: memref<4x32xf32, #tpu.memory_space<vmem>>, %arg7: memref<32x32xf32, #tpu.memory_space<vmem>>, %arg8: memref<32x32xf32, #tpu.memory_space<vmem>>, %arg9: memref<32x32xf32, #tpu.memory_space<vmem>>, %arg10: memref<1x32xf32, #tpu.memory_space<vmem>>, %arg11: memref<1x32xf32, #tpu.memory_space<vmem>>, %arg12: memref<1x32xf32, #tpu.memory_space<vmem>>, %arg13: memref<1x32xf32, #tpu.memory_space<vmem>>, %arg14: memref<32x32xf32, #tpu.memory_space<vmem>>, %arg15: memref<1x32xf32, #tpu.memory_space<vmem>>, %arg16: memref<1x32xf32, #tpu.memory_space<vmem>>, %arg17: memref<1x1xf32, #tpu.memory_space<vmem>>, %arg18: memref<8x1xf32, #tpu.memory_space<vmem>>, %arg19: memref<8x32xf32, #tpu.memory_space<vmem>>) attributes {dimension_semantics = [#tpu.dimension_semantics<parallel>, #tpu.dimension_semantics<arbitrary>], iteration_bounds = array<i64: 1, 1>, scalar_prefetch = 0 : i64, scratch_operands = 1 : i64, tpu.core_type = #tpu.core_type<tc>, window_params = [{transform_indices = @transform_0, window_bounds = array<i64: 8, 8, 4>}, {transform_indices = @transform_1, window_bounds = array<i64: 8, 1>}, {pipeline_mode = #tpu.pipeline_mode<synchronous>, transform_indices = @transform_2, window_bounds = array<i64: 4, 32>}, {pipeline_mode = #tpu.pipeline_mode<synchronous>, transform_indices = @transform_3, window_bounds = array<i64: 4, 32>}, {pipeline_mode = #tpu.pipeline_mode<synchronous>, transform_indices = @transform_4, window_bounds = array<i64: 4, 32>}, {pipeline_mode = #tpu.pipeline_mode<synchronous>, transform_indices = @transform_5, window_bounds = array<i64: 32, 32>}, {pipeline_mode = #tpu.pipeline_mode<synchronous>, transform_indices = @transform_6, window_bounds = array<i64: 32, 32>}, {pipeline_mode = #tpu.pipeline_mode<synchronous>, transform_indices = @transform_7, window_bounds = array<i64: 32, 32>}, {pipeline_mode = #tpu.pipeline_mode<synchronous>, transform_indices = @transform_8, window_bounds = array<i64: 1, 32>}, {pipeline_mode = #tpu.pipeline_mode<synchronous>, transform_indices = @transform_9, window_bounds = array<i64: 1, 32>}, {pipeline_mode = #tpu.pipeline_mode<synchronous>, transform_indices = @transform_10, window_bounds = array<i64: 1, 32>}, {pipeline_mode = #tpu.pipeline_mode<synchronous>, transform_indices = @transform_11, window_bounds = array<i64: 1, 32>}, {pipeline_mode = #tpu.pipeline_mode<synchronous>, transform_indices = @transform_12, window_bounds = array<i64: 32, 32>}, {pipeline_mode = #tpu.pipeline_mode<synchronous>, transform_indices = @transform_13, window_bounds = array<i64: 1, 32>}, {pipeline_mode = #tpu.pipeline_mode<synchronous>, transform_indices = @transform_14, window_bounds = array<i64: 1, 32>}, {pipeline_mode = #tpu.pipeline_mode<synchronous>, transform_indices = @transform_15, window_bounds = array<i64: 1, 1>}, {transform_indices = @transform_16, window_bounds = array<i64: 8, 1>}]} {
    %c0_i32 = arith.constant 0 : i32
    %0 = arith.cmpi eq, %arg1, %c0_i32 : i32
    %1 = arith.extui %0 : i1 to i32
    %c0_i32_0 = arith.constant 0 : i32
    %2 = arith.cmpi ne, %1, %c0_i32_0 : i32
    scf.if %2 {
      %cst_82 = arith.constant 0.000000e+00 : f32
      %324 = vector.broadcast %cst_82 : f32 to vector<8x32xf32>
      %c0_83 = arith.constant 0 : index
      %c0_84 = arith.constant 0 : index
      %325 = vector.load %arg19[%c0_83, %c0_84] : memref<8x32xf32, #tpu.memory_space<vmem>>, vector<8x32xf32>
      tpu.vector_store %arg19[%c0_83, %c0_84], %324 {strides = array<i32>} : memref<8x32xf32, #tpu.memory_space<vmem>>, vector<8x32xf32>,
    } else {
    }
    %c0 = arith.constant 0 : index
    %c0_1 = arith.constant 0 : index
    %c0_2 = arith.constant 0 : index
    %3 = vector.load %arg2[%c0, %c0_1, %c0_2] : memref<8x8x4xf32, #tpu.memory_space<vmem>>, vector<8x8x4xf32>
    %4 = vector.shape_cast %3 : vector<8x8x4xf32> to vector<64x4xf32>
    %c0_3 = arith.constant 0 : index
    %c0_4 = arith.constant 0 : index
    %5 = vector.load %arg4[%c0_3, %c0_4] : memref<4x32xf32, #tpu.memory_space<vmem>>, vector<4x32xf32>
    %cst = arith.constant dense<0.000000e+00> : vector<64x32xf32>
    %6 = tpu.matmul %4, %5, %cst {dimension_numbers = #tpu.dot_dimension_numbers<[1], [0], [0], [1], [0, 0, 1, 1], [], []>} : vector<64x4xf32>, vector<4x32xf32>, vector<64x32xf32> -> vector<64x32xf32>
    %c0_5 = arith.constant 0 : index
    %c0_6 = arith.constant 0 : index
    %7 = vector.load %arg10[%c0_5, %c0_6] : memref<1x32xf32, #tpu.memory_space<vmem>>, vector<1x32xf32>
    %8 = vector.broadcast %7 : vector<1x32xf32> to vector<64x32xf32>
    %9 = arith.addf %6, %8 : vector<64x32xf32>
    %10 = vector.shape_cast %9 : vector<64x32xf32> to vector<8x8x32xf32>
    %c0_7 = arith.constant 0 : index
    %c0_8 = arith.constant 0 : index
    %11 = vector.load %arg5[%c0_7, %c0_8] : memref<4x32xf32, #tpu.memory_space<vmem>>, vector<4x32xf32>
    %cst_9 = arith.constant dense<0.000000e+00> : vector<64x32xf32>
    %12 = tpu.matmul %4, %11, %cst_9 {dimension_numbers = #tpu.dot_dimension_numbers<[1], [0], [0], [1], [0, 0, 1, 1], [], []>} : vector<64x4xf32>, vector<4x32xf32>, vector<64x32xf32> -> vector<64x32xf32>
    %c0_10 = arith.constant 0 : index
    %c0_11 = arith.constant 0 : index
    %13 = vector.load %arg11[%c0_10, %c0_11] : memref<1x32xf32, #tpu.memory_space<vmem>>, vector<1x32xf32>
    %14 = vector.broadcast %13 : vector<1x32xf32> to vector<64x32xf32>
    %15 = arith.addf %12, %14 : vector<64x32xf32>
    %16 = vector.shape_cast %15 : vector<64x32xf32> to vector<8x8x32xf32>
    %c0_12 = arith.constant 0 : index
    %c0_13 = arith.constant 0 : index
    %17 = vector.load %arg6[%c0_12, %c0_13] : memref<4x32xf32, #tpu.memory_space<vmem>>, vector<4x32xf32>
    %cst_14 = arith.constant dense<0.000000e+00> : vector<64x32xf32>
    %18 = tpu.matmul %4, %17, %cst_14 {dimension_numbers = #tpu.dot_dimension_numbers<[1], [0], [0], [1], [0, 0, 1, 1], [], []>} : vector<64x4xf32>, vector<4x32xf32>, vector<64x32xf32> -> vector<64x32xf32>
    %c0_15 = arith.constant 0 : index
    %c0_16 = arith.constant 0 : index
    %19 = vector.load %arg12[%c0_15, %c0_16] : memref<1x32xf32, #tpu.memory_space<vmem>>, vector<1x32xf32>
    %20 = vector.broadcast %19 : vector<1x32xf32> to vector<64x32xf32>
    %21 = arith.addf %18, %20 : vector<64x32xf32>
    %22 = vector.shape_cast %21 : vector<64x32xf32> to vector<8x8x32xf32>
    %c0_17 = arith.constant 0 : index
    %c0_18 = arith.constant 0 : index
    %23 = vector.load %arg7[%c0_17, %c0_18] : memref<32x32xf32, #tpu.memory_space<vmem>>, vector<32x32xf32>
    %c0_19 = arith.constant 0 : index
    %c0_20 = arith.constant 0 : index
    %24 = vector.load %arg8[%c0_19, %c0_20] : memref<32x32xf32, #tpu.memory_space<vmem>>, vector<32x32xf32>
    %c0_21 = arith.constant 0 : index
    %c0_22 = arith.constant 0 : index
    %25 = vector.load %arg9[%c0_21, %c0_22] : memref<32x32xf32, #tpu.memory_space<vmem>>, vector<32x32xf32>
    %c0_23 = arith.constant 0 : index
    %c0_24 = arith.constant 0 : index
    %26 = vector.load %arg13[%c0_23, %c0_24] : memref<1x32xf32, #tpu.memory_space<vmem>>, vector<1x32xf32>
    %27 = vector.shape_cast %26 : vector<1x32xf32> to vector<1x32xf32>
    %28 = vector.broadcast %27 : vector<1x32xf32> to vector<8x32xf32>
    %c0_25 = arith.constant 0 : index
    %c0_26 = arith.constant 0 : index
    %29 = vector.load %arg3[%c0_25, %c0_26] : memref<8x1xi32, #tpu.memory_space<vmem>>, vector<8x1xi32>
    %c8_i32 = arith.constant 8 : i32
    %30 = arith.muli %arg1, %c8_i32 : i32
    %c0_27 = arith.constant 0 : index
    %c0_28 = arith.constant 0 : index
    %31 = vector.load %arg19[%c0_27, %c0_28] : memref<8x32xf32, #tpu.memory_space<vmem>>, vector<8x32xf32>
    %cst_29 = arith.constant dense<0.000000e+00> : vector<8x32xf32>
    %32 = tpu.matmul %31, %23, %cst_29 {dimension_numbers = #tpu.dot_dimension_numbers<[1], [0], [0], [1], [0, 0, 1, 1], [], []>} : vector<8x32xf32>, vector<32x32xf32>, vector<8x32xf32> -> vector<8x32xf32>
    %cst_30 = arith.constant dense<0.000000e+00> : vector<8x32xf32>
    %33 = tpu.matmul %31, %24, %cst_30 {dimension_numbers = #tpu.dot_dimension_numbers<[1], [0], [0], [1], [0, 0, 1, 1], [], []>} : vector<8x32xf32>, vector<32x32xf32>, vector<8x32xf32> -> vector<8x32xf32>
    %cst_31 = arith.constant dense<0.000000e+00> : vector<8x32xf32>
    %34 = tpu.matmul %31, %25, %cst_31 {dimension_numbers = #tpu.dot_dimension_numbers<[1], [0], [0], [1], [0, 0, 1, 1], [], []>} : vector<8x32xf32>, vector<32x32xf32>, vector<8x32xf32> -> vector<8x32xf32>
    %35 = arith.addf %34, %28 : vector<8x32xf32>
    %36 = vector.extract_strided_slice %10 {offsets = [0, 0, 0], sizes = [8, 1, 32], strides = [1, 1, 1]} : vector<8x8x32xf32> to vector<8x1x32xf32>
    %37 = vector.shape_cast %36 : vector<8x1x32xf32> to vector<8x32xf32>
    %38 = arith.addf %37, %32 : vector<8x32xf32>
    %39 = arith.negf %38 : vector<8x32xf32>
    %40 = math.exp %39 : vector<8x32xf32>
    %cst_32 = arith.constant 1.000000e+00 : f32
    %41 = vector.broadcast %cst_32 : f32 to vector<8x32xf32>
    %42 = arith.addf %41, %40 : vector<8x32xf32>
    %43 = arith.divf %41, %42 : vector<8x32xf32>
    %44 = vector.extract_strided_slice %16 {offsets = [0, 0, 0], sizes = [8, 1, 32], strides = [1, 1, 1]} : vector<8x8x32xf32> to vector<8x1x32xf32>
    %45 = vector.shape_cast %44 : vector<8x1x32xf32> to vector<8x32xf32>
    %46 = arith.addf %45, %33 : vector<8x32xf32>
    %47 = arith.negf %46 : vector<8x32xf32>
    %48 = math.exp %47 : vector<8x32xf32>
    %cst_33 = arith.constant 1.000000e+00 : f32
    %49 = vector.broadcast %cst_33 : f32 to vector<8x32xf32>
    %50 = arith.addf %49, %48 : vector<8x32xf32>
    %51 = arith.divf %49, %50 : vector<8x32xf32>
    %52 = vector.extract_strided_slice %22 {offsets = [0, 0, 0], sizes = [8, 1, 32], strides = [1, 1, 1]} : vector<8x8x32xf32> to vector<8x1x32xf32>
    %53 = vector.shape_cast %52 : vector<8x1x32xf32> to vector<8x32xf32>
    %54 = arith.mulf %43, %35 : vector<8x32xf32>
    %55 = arith.addf %53, %54 : vector<8x32xf32>
    %56 = math.tanh %55 : vector<8x32xf32>
    %cst_34 = arith.constant 1.000000e+00 : f32
    %57 = vector.broadcast %cst_34 : f32 to vector<8x32xf32>
    %58 = arith.subf %57, %51 : vector<8x32xf32>
    %59 = arith.mulf %58, %56 : vector<8x32xf32>
    %60 = arith.mulf %51, %31 : vector<8x32xf32>
    %61 = arith.addf %59, %60 : vector<8x32xf32>
    %c0_i32_35 = arith.constant 0 : i32
    %62 = arith.addi %30, %c0_i32_35 : i32
    %63 = vector.broadcast %62 : i32 to vector<8x1xi32>
    %64 = arith.cmpi slt, %63, %29 : vector<8x1xi32>
    %65 = vector.shape_cast %64 : vector<8x1xi1> to vector<8x1xi1>
    %66 = vector.broadcast %65 : vector<8x1xi1> to vector<8x32xi1>
    %67 = arith.select %66, %61, %31 : vector<8x32xi1>, vector<8x32xf32>
    %cst_36 = arith.constant dense<0.000000e+00> : vector<8x32xf32>
    %68 = tpu.matmul %67, %23, %cst_36 {dimension_numbers = #tpu.dot_dimension_numbers<[1], [0], [0], [1], [0, 0, 1, 1], [], []>} : vector<8x32xf32>, vector<32x32xf32>, vector<8x32xf32> -> vector<8x32xf32>
    %cst_37 = arith.constant dense<0.000000e+00> : vector<8x32xf32>
    %69 = tpu.matmul %67, %24, %cst_37 {dimension_numbers = #tpu.dot_dimension_numbers<[1], [0], [0], [1], [0, 0, 1, 1], [], []>} : vector<8x32xf32>, vector<32x32xf32>, vector<8x32xf32> -> vector<8x32xf32>
    %cst_38 = arith.constant dense<0.000000e+00> : vector<8x32xf32>
    %70 = tpu.matmul %67, %25, %cst_38 {dimension_numbers = #tpu.dot_dimension_numbers<[1], [0], [0], [1], [0, 0, 1, 1], [], []>} : vector<8x32xf32>, vector<32x32xf32>, vector<8x32xf32> -> vector<8x32xf32>
    %71 = arith.addf %70, %28 : vector<8x32xf32>
    %72 = vector.extract_strided_slice %10 {offsets = [0, 1, 0], sizes = [8, 1, 32], strides = [1, 1, 1]} : vector<8x8x32xf32> to vector<8x1x32xf32>
    %73 = vector.shape_cast %72 : vector<8x1x32xf32> to vector<8x32xf32>
    %74 = arith.addf %73, %68 : vector<8x32xf32>
    %75 = arith.negf %74 : vector<8x32xf32>
    %76 = math.exp %75 : vector<8x32xf32>
    %cst_39 = arith.constant 1.000000e+00 : f32
    %77 = vector.broadcast %cst_39 : f32 to vector<8x32xf32>
    %78 = arith.addf %77, %76 : vector<8x32xf32>
    %79 = arith.divf %77, %78 : vector<8x32xf32>
    %80 = vector.extract_strided_slice %16 {offsets = [0, 1, 0], sizes = [8, 1, 32], strides = [1, 1, 1]} : vector<8x8x32xf32> to vector<8x1x32xf32>
    %81 = vector.shape_cast %80 : vector<8x1x32xf32> to vector<8x32xf32>
    %82 = arith.addf %81, %69 : vector<8x32xf32>
    %83 = arith.negf %82 : vector<8x32xf32>
    %84 = math.exp %83 : vector<8x32xf32>
    %cst_40 = arith.constant 1.000000e+00 : f32
    %85 = vector.broadcast %cst_40 : f32 to vector<8x32xf32>
    %86 = arith.addf %85, %84 : vector<8x32xf32>
    %87 = arith.divf %85, %86 : vector<8x32xf32>
    %88 = vector.extract_strided_slice %22 {offsets = [0, 1, 0], sizes = [8, 1, 32], strides = [1, 1, 1]} : vector<8x8x32xf32> to vector<8x1x32xf32>
    %89 = vector.shape_cast %88 : vector<8x1x32xf32> to vector<8x32xf32>
    %90 = arith.mulf %79, %71 : vector<8x32xf32>
    %91 = arith.addf %89, %90 : vector<8x32xf32>
    %92 = math.tanh %91 : vector<8x32xf32>
    %cst_41 = arith.constant 1.000000e+00 : f32
    %93 = vector.broadcast %cst_41 : f32 to vector<8x32xf32>
    %94 = arith.subf %93, %87 : vector<8x32xf32>
    %95 = arith.mulf %94, %92 : vector<8x32xf32>
    %96 = arith.mulf %87, %67 : vector<8x32xf32>
    %97 = arith.addf %95, %96 : vector<8x32xf32>
    %c1_i32 = arith.constant 1 : i32
    %98 = arith.addi %30, %c1_i32 : i32
    %99 = vector.broadcast %98 : i32 to vector<8x1xi32>
    %100 = arith.cmpi slt, %99, %29 : vector<8x1xi32>
    %101 = vector.shape_cast %100 : vector<8x1xi1> to vector<8x1xi1>
    %102 = vector.broadcast %101 : vector<8x1xi1> to vector<8x32xi1>
    %103 = arith.select %102, %97, %67 : vector<8x32xi1>, vector<8x32xf32>
    %cst_42 = arith.constant dense<0.000000e+00> : vector<8x32xf32>
    %104 = tpu.matmul %103, %23, %cst_42 {dimension_numbers = #tpu.dot_dimension_numbers<[1], [0], [0], [1], [0, 0, 1, 1], [], []>} : vector<8x32xf32>, vector<32x32xf32>, vector<8x32xf32> -> vector<8x32xf32>
    %cst_43 = arith.constant dense<0.000000e+00> : vector<8x32xf32>
    %105 = tpu.matmul %103, %24, %cst_43 {dimension_numbers = #tpu.dot_dimension_numbers<[1], [0], [0], [1], [0, 0, 1, 1], [], []>} : vector<8x32xf32>, vector<32x32xf32>, vector<8x32xf32> -> vector<8x32xf32>
    %cst_44 = arith.constant dense<0.000000e+00> : vector<8x32xf32>
    %106 = tpu.matmul %103, %25, %cst_44 {dimension_numbers = #tpu.dot_dimension_numbers<[1], [0], [0], [1], [0, 0, 1, 1], [], []>} : vector<8x32xf32>, vector<32x32xf32>, vector<8x32xf32> -> vector<8x32xf32>
    %107 = arith.addf %106, %28 : vector<8x32xf32>
    %108 = vector.extract_strided_slice %10 {offsets = [0, 2, 0], sizes = [8, 1, 32], strides = [1, 1, 1]} : vector<8x8x32xf32> to vector<8x1x32xf32>
    %109 = vector.shape_cast %108 : vector<8x1x32xf32> to vector<8x32xf32>
    %110 = arith.addf %109, %104 : vector<8x32xf32>
    %111 = arith.negf %110 : vector<8x32xf32>
    %112 = math.exp %111 : vector<8x32xf32>
    %cst_45 = arith.constant 1.000000e+00 : f32
    %113 = vector.broadcast %cst_45 : f32 to vector<8x32xf32>
    %114 = arith.addf %113, %112 : vector<8x32xf32>
    %115 = arith.divf %113, %114 : vector<8x32xf32>
    %116 = vector.extract_strided_slice %16 {offsets = [0, 2, 0], sizes = [8, 1, 32], strides = [1, 1, 1]} : vector<8x8x32xf32> to vector<8x1x32xf32>
    %117 = vector.shape_cast %116 : vector<8x1x32xf32> to vector<8x32xf32>
    %118 = arith.addf %117, %105 : vector<8x32xf32>
    %119 = arith.negf %118 : vector<8x32xf32>
    %120 = math.exp %119 : vector<8x32xf32>
    %cst_46 = arith.constant 1.000000e+00 : f32
    %121 = vector.broadcast %cst_46 : f32 to vector<8x32xf32>
    %122 = arith.addf %121, %120 : vector<8x32xf32>
    %123 = arith.divf %121, %122 : vector<8x32xf32>
    %124 = vector.extract_strided_slice %22 {offsets = [0, 2, 0], sizes = [8, 1, 32], strides = [1, 1, 1]} : vector<8x8x32xf32> to vector<8x1x32xf32>
    %125 = vector.shape_cast %124 : vector<8x1x32xf32> to vector<8x32xf32>
    %126 = arith.mulf %115, %107 : vector<8x32xf32>
    %127 = arith.addf %125, %126 : vector<8x32xf32>
    %128 = math.tanh %127 : vector<8x32xf32>
    %cst_47 = arith.constant 1.000000e+00 : f32
    %129 = vector.broadcast %cst_47 : f32 to vector<8x32xf32>
    %130 = arith.subf %129, %123 : vector<8x32xf32>
    %131 = arith.mulf %130, %128 : vector<8x32xf32>
    %132 = arith.mulf %123, %103 : vector<8x32xf32>
    %133 = arith.addf %131, %132 : vector<8x32xf32>
    %c2_i32 = arith.constant 2 : i32
    %134 = arith.addi %30, %c2_i32 : i32
    %135 = vector.broadcast %134 : i32 to vector<8x1xi32>
    %136 = arith.cmpi slt, %135, %29 : vector<8x1xi32>
    %137 = vector.shape_cast %136 : vector<8x1xi1> to vector<8x1xi1>
    %138 = vector.broadcast %137 : vector<8x1xi1> to vector<8x32xi1>
    %139 = arith.select %138, %133, %103 : vector<8x32xi1>, vector<8x32xf32>
    %cst_48 = arith.constant dense<0.000000e+00> : vector<8x32xf32>
    %140 = tpu.matmul %139, %23, %cst_48 {dimension_numbers = #tpu.dot_dimension_numbers<[1], [0], [0], [1], [0, 0, 1, 1], [], []>} : vector<8x32xf32>, vector<32x32xf32>, vector<8x32xf32> -> vector<8x32xf32>
    %cst_49 = arith.constant dense<0.000000e+00> : vector<8x32xf32>
    %141 = tpu.matmul %139, %24, %cst_49 {dimension_numbers = #tpu.dot_dimension_numbers<[1], [0], [0], [1], [0, 0, 1, 1], [], []>} : vector<8x32xf32>, vector<32x32xf32>, vector<8x32xf32> -> vector<8x32xf32>
    %cst_50 = arith.constant dense<0.000000e+00> : vector<8x32xf32>
    %142 = tpu.matmul %139, %25, %cst_50 {dimension_numbers = #tpu.dot_dimension_numbers<[1], [0], [0], [1], [0, 0, 1, 1], [], []>} : vector<8x32xf32>, vector<32x32xf32>, vector<8x32xf32> -> vector<8x32xf32>
    %143 = arith.addf %142, %28 : vector<8x32xf32>
    %144 = vector.extract_strided_slice %10 {offsets = [0, 3, 0], sizes = [8, 1, 32], strides = [1, 1, 1]} : vector<8x8x32xf32> to vector<8x1x32xf32>
    %145 = vector.shape_cast %144 : vector<8x1x32xf32> to vector<8x32xf32>
    %146 = arith.addf %145, %140 : vector<8x32xf32>
    %147 = arith.negf %146 : vector<8x32xf32>
    %148 = math.exp %147 : vector<8x32xf32>
    %cst_51 = arith.constant 1.000000e+00 : f32
    %149 = vector.broadcast %cst_51 : f32 to vector<8x32xf32>
    %150 = arith.addf %149, %148 : vector<8x32xf32>
    %151 = arith.divf %149, %150 : vector<8x32xf32>
    %152 = vector.extract_strided_slice %16 {offsets = [0, 3, 0], sizes = [8, 1, 32], strides = [1, 1, 1]} : vector<8x8x32xf32> to vector<8x1x32xf32>
    %153 = vector.shape_cast %152 : vector<8x1x32xf32> to vector<8x32xf32>
    %154 = arith.addf %153, %141 : vector<8x32xf32>
    %155 = arith.negf %154 : vector<8x32xf32>
    %156 = math.exp %155 : vector<8x32xf32>
    %cst_52 = arith.constant 1.000000e+00 : f32
    %157 = vector.broadcast %cst_52 : f32 to vector<8x32xf32>
    %158 = arith.addf %157, %156 : vector<8x32xf32>
    %159 = arith.divf %157, %158 : vector<8x32xf32>
    %160 = vector.extract_strided_slice %22 {offsets = [0, 3, 0], sizes = [8, 1, 32], strides = [1, 1, 1]} : vector<8x8x32xf32> to vector<8x1x32xf32>
    %161 = vector.shape_cast %160 : vector<8x1x32xf32> to vector<8x32xf32>
    %162 = arith.mulf %151, %143 : vector<8x32xf32>
    %163 = arith.addf %161, %162 : vector<8x32xf32>
    %164 = math.tanh %163 : vector<8x32xf32>
    %cst_53 = arith.constant 1.000000e+00 : f32
    %165 = vector.broadcast %cst_53 : f32 to vector<8x32xf32>
    %166 = arith.subf %165, %159 : vector<8x32xf32>
    %167 = arith.mulf %166, %164 : vector<8x32xf32>
    %168 = arith.mulf %159, %139 : vector<8x32xf32>
    %169 = arith.addf %167, %168 : vector<8x32xf32>
    %c3_i32 = arith.constant 3 : i32
    %170 = arith.addi %30, %c3_i32 : i32
    %171 = vector.broadcast %170 : i32 to vector<8x1xi32>
    %172 = arith.cmpi slt, %171, %29 : vector<8x1xi32>
    %173 = vector.shape_cast %172 : vector<8x1xi1> to vector<8x1xi1>
    %174 = vector.broadcast %173 : vector<8x1xi1> to vector<8x32xi1>
    %175 = arith.select %174, %169, %139 : vector<8x32xi1>, vector<8x32xf32>
    %cst_54 = arith.constant dense<0.000000e+00> : vector<8x32xf32>
    %176 = tpu.matmul %175, %23, %cst_54 {dimension_numbers = #tpu.dot_dimension_numbers<[1], [0], [0], [1], [0, 0, 1, 1], [], []>} : vector<8x32xf32>, vector<32x32xf32>, vector<8x32xf32> -> vector<8x32xf32>
    %cst_55 = arith.constant dense<0.000000e+00> : vector<8x32xf32>
    %177 = tpu.matmul %175, %24, %cst_55 {dimension_numbers = #tpu.dot_dimension_numbers<[1], [0], [0], [1], [0, 0, 1, 1], [], []>} : vector<8x32xf32>, vector<32x32xf32>, vector<8x32xf32> -> vector<8x32xf32>
    %cst_56 = arith.constant dense<0.000000e+00> : vector<8x32xf32>
    %178 = tpu.matmul %175, %25, %cst_56 {dimension_numbers = #tpu.dot_dimension_numbers<[1], [0], [0], [1], [0, 0, 1, 1], [], []>} : vector<8x32xf32>, vector<32x32xf32>, vector<8x32xf32> -> vector<8x32xf32>
    %179 = arith.addf %178, %28 : vector<8x32xf32>
    %180 = vector.extract_strided_slice %10 {offsets = [0, 4, 0], sizes = [8, 1, 32], strides = [1, 1, 1]} : vector<8x8x32xf32> to vector<8x1x32xf32>
    %181 = vector.shape_cast %180 : vector<8x1x32xf32> to vector<8x32xf32>
    %182 = arith.addf %181, %176 : vector<8x32xf32>
    %183 = arith.negf %182 : vector<8x32xf32>
    %184 = math.exp %183 : vector<8x32xf32>
    %cst_57 = arith.constant 1.000000e+00 : f32
    %185 = vector.broadcast %cst_57 : f32 to vector<8x32xf32>
    %186 = arith.addf %185, %184 : vector<8x32xf32>
    %187 = arith.divf %185, %186 : vector<8x32xf32>
    %188 = vector.extract_strided_slice %16 {offsets = [0, 4, 0], sizes = [8, 1, 32], strides = [1, 1, 1]} : vector<8x8x32xf32> to vector<8x1x32xf32>
    %189 = vector.shape_cast %188 : vector<8x1x32xf32> to vector<8x32xf32>
    %190 = arith.addf %189, %177 : vector<8x32xf32>
    %191 = arith.negf %190 : vector<8x32xf32>
    %192 = math.exp %191 : vector<8x32xf32>
    %cst_58 = arith.constant 1.000000e+00 : f32
    %193 = vector.broadcast %cst_58 : f32 to vector<8x32xf32>
    %194 = arith.addf %193, %192 : vector<8x32xf32>
    %195 = arith.divf %193, %194 : vector<8x32xf32>
    %196 = vector.extract_strided_slice %22 {offsets = [0, 4, 0], sizes = [8, 1, 32], strides = [1, 1, 1]} : vector<8x8x32xf32> to vector<8x1x32xf32>
    %197 = vector.shape_cast %196 : vector<8x1x32xf32> to vector<8x32xf32>
    %198 = arith.mulf %187, %179 : vector<8x32xf32>
    %199 = arith.addf %197, %198 : vector<8x32xf32>
    %200 = math.tanh %199 : vector<8x32xf32>
    %cst_59 = arith.constant 1.000000e+00 : f32
    %201 = vector.broadcast %cst_59 : f32 to vector<8x32xf32>
    %202 = arith.subf %201, %195 : vector<8x32xf32>
    %203 = arith.mulf %202, %200 : vector<8x32xf32>
    %204 = arith.mulf %195, %175 : vector<8x32xf32>
    %205 = arith.addf %203, %204 : vector<8x32xf32>
    %c4_i32 = arith.constant 4 : i32
    %206 = arith.addi %30, %c4_i32 : i32
    %207 = vector.broadcast %206 : i32 to vector<8x1xi32>
    %208 = arith.cmpi slt, %207, %29 : vector<8x1xi32>
    %209 = vector.shape_cast %208 : vector<8x1xi1> to vector<8x1xi1>
    %210 = vector.broadcast %209 : vector<8x1xi1> to vector<8x32xi1>
    %211 = arith.select %210, %205, %175 : vector<8x32xi1>, vector<8x32xf32>
    %cst_60 = arith.constant dense<0.000000e+00> : vector<8x32xf32>
    %212 = tpu.matmul %211, %23, %cst_60 {dimension_numbers = #tpu.dot_dimension_numbers<[1], [0], [0], [1], [0, 0, 1, 1], [], []>} : vector<8x32xf32>, vector<32x32xf32>, vector<8x32xf32> -> vector<8x32xf32>
    %cst_61 = arith.constant dense<0.000000e+00> : vector<8x32xf32>
    %213 = tpu.matmul %211, %24, %cst_61 {dimension_numbers = #tpu.dot_dimension_numbers<[1], [0], [0], [1], [0, 0, 1, 1], [], []>} : vector<8x32xf32>, vector<32x32xf32>, vector<8x32xf32> -> vector<8x32xf32>
    %cst_62 = arith.constant dense<0.000000e+00> : vector<8x32xf32>
    %214 = tpu.matmul %211, %25, %cst_62 {dimension_numbers = #tpu.dot_dimension_numbers<[1], [0], [0], [1], [0, 0, 1, 1], [], []>} : vector<8x32xf32>, vector<32x32xf32>, vector<8x32xf32> -> vector<8x32xf32>
    %215 = arith.addf %214, %28 : vector<8x32xf32>
    %216 = vector.extract_strided_slice %10 {offsets = [0, 5, 0], sizes = [8, 1, 32], strides = [1, 1, 1]} : vector<8x8x32xf32> to vector<8x1x32xf32>
    %217 = vector.shape_cast %216 : vector<8x1x32xf32> to vector<8x32xf32>
    %218 = arith.addf %217, %212 : vector<8x32xf32>
    %219 = arith.negf %218 : vector<8x32xf32>
    %220 = math.exp %219 : vector<8x32xf32>
    %cst_63 = arith.constant 1.000000e+00 : f32
    %221 = vector.broadcast %cst_63 : f32 to vector<8x32xf32>
    %222 = arith.addf %221, %220 : vector<8x32xf32>
    %223 = arith.divf %221, %222 : vector<8x32xf32>
    %224 = vector.extract_strided_slice %16 {offsets = [0, 5, 0], sizes = [8, 1, 32], strides = [1, 1, 1]} : vector<8x8x32xf32> to vector<8x1x32xf32>
    %225 = vector.shape_cast %224 : vector<8x1x32xf32> to vector<8x32xf32>
    %226 = arith.addf %225, %213 : vector<8x32xf32>
    %227 = arith.negf %226 : vector<8x32xf32>
    %228 = math.exp %227 : vector<8x32xf32>
    %cst_64 = arith.constant 1.000000e+00 : f32
    %229 = vector.broadcast %cst_64 : f32 to vector<8x32xf32>
    %230 = arith.addf %229, %228 : vector<8x32xf32>
    %231 = arith.divf %229, %230 : vector<8x32xf32>
    %232 = vector.extract_strided_slice %22 {offsets = [0, 5, 0], sizes = [8, 1, 32], strides = [1, 1, 1]} : vector<8x8x32xf32> to vector<8x1x32xf32>
    %233 = vector.shape_cast %232 : vector<8x1x32xf32> to vector<8x32xf32>
    %234 = arith.mulf %223, %215 : vector<8x32xf32>
    %235 = arith.addf %233, %234 : vector<8x32xf32>
    %236 = math.tanh %235 : vector<8x32xf32>
    %cst_65 = arith.constant 1.000000e+00 : f32
    %237 = vector.broadcast %cst_65 : f32 to vector<8x32xf32>
    %238 = arith.subf %237, %231 : vector<8x32xf32>
    %239 = arith.mulf %238, %236 : vector<8x32xf32>
    %240 = arith.mulf %231, %211 : vector<8x32xf32>
    %241 = arith.addf %239, %240 : vector<8x32xf32>
    %c5_i32 = arith.constant 5 : i32
    %242 = arith.addi %30, %c5_i32 : i32
    %243 = vector.broadcast %242 : i32 to vector<8x1xi32>
    %244 = arith.cmpi slt, %243, %29 : vector<8x1xi32>
    %245 = vector.shape_cast %244 : vector<8x1xi1> to vector<8x1xi1>
    %246 = vector.broadcast %245 : vector<8x1xi1> to vector<8x32xi1>
    %247 = arith.select %246, %241, %211 : vector<8x32xi1>, vector<8x32xf32>
    %cst_66 = arith.constant dense<0.000000e+00> : vector<8x32xf32>
    %248 = tpu.matmul %247, %23, %cst_66 {dimension_numbers = #tpu.dot_dimension_numbers<[1], [0], [0], [1], [0, 0, 1, 1], [], []>} : vector<8x32xf32>, vector<32x32xf32>, vector<8x32xf32> -> vector<8x32xf32>
    %cst_67 = arith.constant dense<0.000000e+00> : vector<8x32xf32>
    %249 = tpu.matmul %247, %24, %cst_67 {dimension_numbers = #tpu.dot_dimension_numbers<[1], [0], [0], [1], [0, 0, 1, 1], [], []>} : vector<8x32xf32>, vector<32x32xf32>, vector<8x32xf32> -> vector<8x32xf32>
    %cst_68 = arith.constant dense<0.000000e+00> : vector<8x32xf32>
    %250 = tpu.matmul %247, %25, %cst_68 {dimension_numbers = #tpu.dot_dimension_numbers<[1], [0], [0], [1], [0, 0, 1, 1], [], []>} : vector<8x32xf32>, vector<32x32xf32>, vector<8x32xf32> -> vector<8x32xf32>
    %251 = arith.addf %250, %28 : vector<8x32xf32>
    %252 = vector.extract_strided_slice %10 {offsets = [0, 6, 0], sizes = [8, 1, 32], strides = [1, 1, 1]} : vector<8x8x32xf32> to vector<8x1x32xf32>
    %253 = vector.shape_cast %252 : vector<8x1x32xf32> to vector<8x32xf32>
    %254 = arith.addf %253, %248 : vector<8x32xf32>
    %255 = arith.negf %254 : vector<8x32xf32>
    %256 = math.exp %255 : vector<8x32xf32>
    %cst_69 = arith.constant 1.000000e+00 : f32
    %257 = vector.broadcast %cst_69 : f32 to vector<8x32xf32>
    %258 = arith.addf %257, %256 : vector<8x32xf32>
    %259 = arith.divf %257, %258 : vector<8x32xf32>
    %260 = vector.extract_strided_slice %16 {offsets = [0, 6, 0], sizes = [8, 1, 32], strides = [1, 1, 1]} : vector<8x8x32xf32> to vector<8x1x32xf32>
    %261 = vector.shape_cast %260 : vector<8x1x32xf32> to vector<8x32xf32>
    %262 = arith.addf %261, %249 : vector<8x32xf32>
    %263 = arith.negf %262 : vector<8x32xf32>
    %264 = math.exp %263 : vector<8x32xf32>
    %cst_70 = arith.constant 1.000000e+00 : f32
    %265 = vector.broadcast %cst_70 : f32 to vector<8x32xf32>
    %266 = arith.addf %265, %264 : vector<8x32xf32>
    %267 = arith.divf %265, %266 : vector<8x32xf32>
    %268 = vector.extract_strided_slice %22 {offsets = [0, 6, 0], sizes = [8, 1, 32], strides = [1, 1, 1]} : vector<8x8x32xf32> to vector<8x1x32xf32>
    %269 = vector.shape_cast %268 : vector<8x1x32xf32> to vector<8x32xf32>
    %270 = arith.mulf %259, %251 : vector<8x32xf32>
    %271 = arith.addf %269, %270 : vector<8x32xf32>
    %272 = math.tanh %271 : vector<8x32xf32>
    %cst_71 = arith.constant 1.000000e+00 : f32
    %273 = vector.broadcast %cst_71 : f32 to vector<8x32xf32>
    %274 = arith.subf %273, %267 : vector<8x32xf32>
    %275 = arith.mulf %274, %272 : vector<8x32xf32>
    %276 = arith.mulf %267, %247 : vector<8x32xf32>
    %277 = arith.addf %275, %276 : vector<8x32xf32>
    %c6_i32 = arith.constant 6 : i32
    %278 = arith.addi %30, %c6_i32 : i32
    %279 = vector.broadcast %278 : i32 to vector<8x1xi32>
    %280 = arith.cmpi slt, %279, %29 : vector<8x1xi32>
    %281 = vector.shape_cast %280 : vector<8x1xi1> to vector<8x1xi1>
    %282 = vector.broadcast %281 : vector<8x1xi1> to vector<8x32xi1>
    %283 = arith.select %282, %277, %247 : vector<8x32xi1>, vector<8x32xf32>
    %cst_72 = arith.constant dense<0.000000e+00> : vector<8x32xf32>
    %284 = tpu.matmul %283, %23, %cst_72 {dimension_numbers = #tpu.dot_dimension_numbers<[1], [0], [0], [1], [0, 0, 1, 1], [], []>} : vector<8x32xf32>, vector<32x32xf32>, vector<8x32xf32> -> vector<8x32xf32>
    %cst_73 = arith.constant dense<0.000000e+00> : vector<8x32xf32>
    %285 = tpu.matmul %283, %24, %cst_73 {dimension_numbers = #tpu.dot_dimension_numbers<[1], [0], [0], [1], [0, 0, 1, 1], [], []>} : vector<8x32xf32>, vector<32x32xf32>, vector<8x32xf32> -> vector<8x32xf32>
    %cst_74 = arith.constant dense<0.000000e+00> : vector<8x32xf32>
    %286 = tpu.matmul %283, %25, %cst_74 {dimension_numbers = #tpu.dot_dimension_numbers<[1], [0], [0], [1], [0, 0, 1, 1], [], []>} : vector<8x32xf32>, vector<32x32xf32>, vector<8x32xf32> -> vector<8x32xf32>
    %287 = arith.addf %286, %28 : vector<8x32xf32>
    %288 = vector.extract_strided_slice %10 {offsets = [0, 7, 0], sizes = [8, 1, 32], strides = [1, 1, 1]} : vector<8x8x32xf32> to vector<8x1x32xf32>
    %289 = vector.shape_cast %288 : vector<8x1x32xf32> to vector<8x32xf32>
    %290 = arith.addf %289, %284 : vector<8x32xf32>
    %291 = arith.negf %290 : vector<8x32xf32>
    %292 = math.exp %291 : vector<8x32xf32>
    %cst_75 = arith.constant 1.000000e+00 : f32
    %293 = vector.broadcast %cst_75 : f32 to vector<8x32xf32>
    %294 = arith.addf %293, %292 : vector<8x32xf32>
    %295 = arith.divf %293, %294 : vector<8x32xf32>
    %296 = vector.extract_strided_slice %16 {offsets = [0, 7, 0], sizes = [8, 1, 32], strides = [1, 1, 1]} : vector<8x8x32xf32> to vector<8x1x32xf32>
    %297 = vector.shape_cast %296 : vector<8x1x32xf32> to vector<8x32xf32>
    %298 = arith.addf %297, %285 : vector<8x32xf32>
    %299 = arith.negf %298 : vector<8x32xf32>
    %300 = math.exp %299 : vector<8x32xf32>
    %cst_76 = arith.constant 1.000000e+00 : f32
    %301 = vector.broadcast %cst_76 : f32 to vector<8x32xf32>
    %302 = arith.addf %301, %300 : vector<8x32xf32>
    %303 = arith.divf %301, %302 : vector<8x32xf32>
    %304 = vector.extract_strided_slice %22 {offsets = [0, 7, 0], sizes = [8, 1, 32], strides = [1, 1, 1]} : vector<8x8x32xf32> to vector<8x1x32xf32>
    %305 = vector.shape_cast %304 : vector<8x1x32xf32> to vector<8x32xf32>
    %306 = arith.mulf %295, %287 : vector<8x32xf32>
    %307 = arith.addf %305, %306 : vector<8x32xf32>
    %308 = math.tanh %307 : vector<8x32xf32>
    %cst_77 = arith.constant 1.000000e+00 : f32
    %309 = vector.broadcast %cst_77 : f32 to vector<8x32xf32>
    %310 = arith.subf %309, %303 : vector<8x32xf32>
    %311 = arith.mulf %310, %308 : vector<8x32xf32>
    %312 = arith.mulf %303, %283 : vector<8x32xf32>
    %313 = arith.addf %311, %312 : vector<8x32xf32>
    %c7_i32 = arith.constant 7 : i32
    %314 = arith.addi %30, %c7_i32 : i32
    %315 = vector.broadcast %314 : i32 to vector<8x1xi32>
    %316 = arith.cmpi slt, %315, %29 : vector<8x1xi32>
    %317 = vector.shape_cast %316 : vector<8x1xi1> to vector<8x1xi1>
    %318 = vector.broadcast %317 : vector<8x1xi1> to vector<8x32xi1>
    %319 = arith.select %318, %313, %283 : vector<8x32xi1>, vector<8x32xf32>
    %c0_78 = arith.constant 0 : index
    %c0_79 = arith.constant 0 : index
    %320 = vector.load %arg19[%c0_78, %c0_79] : memref<8x32xf32, #tpu.memory_space<vmem>>, vector<8x32xf32>
    tpu.vector_store %arg19[%c0_78, %c0_79], %319 {strides = array<i32>} : memref<8x32xf32, #tpu.memory_space<vmem>>, vector<8x32xf32>,
    %c0_i32_80 = arith.constant 0 : i32
    %321 = arith.cmpi eq, %arg1, %c0_i32_80 : i32
    %322 = arith.extui %321 : i1 to i32
    %c0_i32_81 = arith.constant 0 : i32
    %323 = arith.cmpi ne, %322, %c0_i32_81 : i32
    scf.if %323 {
      %c0_82 = arith.constant 0 : index
      %c0_83 = arith.constant 0 : index
      %324 = vector.load %arg14[%c0_82, %c0_83] : memref<32x32xf32, #tpu.memory_space<vmem>>, vector<32x32xf32>
      %cst_84 = arith.constant dense<0.000000e+00> : vector<8x32xf32>
      %325 = tpu.matmul %319, %324, %cst_84 {dimension_numbers = #tpu.dot_dimension_numbers<[1], [0], [0], [1], [0, 0, 1, 1], [], []>} : vector<8x32xf32>, vector<32x32xf32>, vector<8x32xf32> -> vector<8x32xf32>
      %c0_85 = arith.constant 0 : index
      %c0_86 = arith.constant 0 : index
      %326 = vector.load %arg15[%c0_85, %c0_86] : memref<1x32xf32, #tpu.memory_space<vmem>>, vector<1x32xf32>
      %327 = vector.broadcast %326 : vector<1x32xf32> to vector<8x32xf32>
      %328 = arith.addf %325, %327 : vector<8x32xf32>
      %cst_87 = arith.constant 0.000000e+00 : f32
      %329 = vector.broadcast %cst_87 : f32 to vector<8x32xf32>
      %330 = arith.maximumf %328, %329 : vector<8x32xf32>
      %c0_88 = arith.constant 0 : index
      %c0_89 = arith.constant 0 : index
      %331 = vector.load %arg16[%c0_88, %c0_89] : memref<1x32xf32, #tpu.memory_space<vmem>>, vector<1x32xf32>
      %332 = vector.broadcast %331 : vector<1x32xf32> to vector<8x32xf32>
      %333 = arith.mulf %330, %332 : vector<8x32xf32>
      %cst_90 = arith.constant dense<0.000000e+00> : vector<8xf32>
      %334 = vector.multi_reduction <add>, %333, %cst_90 [1] : vector<8x32xf32> to vector<8xf32>
      %335 = vector.shape_cast %334 : vector<8xf32> to vector<8x1xf32>
      %c0_91 = arith.constant 0 : index
      %c0_92 = arith.constant 0 : index
      %336 = vector.load %arg17[%c0_91, %c0_92] : memref<1x1xf32, #tpu.memory_space<vmem>>, vector<1x1xf32>
      %337 = vector.broadcast %336 : vector<1x1xf32> to vector<8x1xf32>
      %338 = arith.addf %335, %337 : vector<8x1xf32>
      %c0_93 = arith.constant 0 : index
      %c0_94 = arith.constant 0 : index
      %339 = vector.load %arg18[%c0_93, %c0_94] : memref<8x1xf32, #tpu.memory_space<vmem>>, vector<8x1xf32>
      tpu.vector_store %arg18[%c0_93, %c0_94], %338 {strides = array<i32>} : memref<8x1xf32, #tpu.memory_space<vmem>>, vector<8x1xf32>,
    } else {
    }
    return
  }
  func.func @transform_0(%arg0: i32, %arg1: i32) -> (i32, i32, i32) {
    %c0_i32 = arith.constant 0 : i32
    %c0_i32_0 = arith.constant 0 : i32
    return %arg0, %arg1, %c0_i32 : i32, i32, i32
  }
  func.func @transform_1(%arg0: i32, %arg1: i32) -> (i32, i32) {
    %c0_i32 = arith.constant 0 : i32
    %c0_i32_0 = arith.constant 0 : i32
    return %arg0, %c0_i32 : i32, i32
  }
  func.func @transform_2(%arg0: i32, %arg1: i32) -> (i32, i32) {
    %c0_i32 = arith.constant 0 : i32
    %c0_i32_0 = arith.constant 0 : i32
    %c0_i32_1 = arith.constant 0 : i32
    return %c0_i32, %c0_i32_0 : i32, i32
  }
  func.func @transform_3(%arg0: i32, %arg1: i32) -> (i32, i32) {
    %c0_i32 = arith.constant 0 : i32
    %c0_i32_0 = arith.constant 0 : i32
    %c0_i32_1 = arith.constant 0 : i32
    return %c0_i32, %c0_i32_0 : i32, i32
  }
  func.func @transform_4(%arg0: i32, %arg1: i32) -> (i32, i32) {
    %c0_i32 = arith.constant 0 : i32
    %c0_i32_0 = arith.constant 0 : i32
    %c0_i32_1 = arith.constant 0 : i32
    return %c0_i32, %c0_i32_0 : i32, i32
  }
  func.func @transform_5(%arg0: i32, %arg1: i32) -> (i32, i32) {
    %c0_i32 = arith.constant 0 : i32
    %c0_i32_0 = arith.constant 0 : i32
    %c0_i32_1 = arith.constant 0 : i32
    return %c0_i32, %c0_i32_0 : i32, i32
  }
  func.func @transform_6(%arg0: i32, %arg1: i32) -> (i32, i32) {
    %c0_i32 = arith.constant 0 : i32
    %c0_i32_0 = arith.constant 0 : i32
    %c0_i32_1 = arith.constant 0 : i32
    return %c0_i32, %c0_i32_0 : i32, i32
  }
  func.func @transform_7(%arg0: i32, %arg1: i32) -> (i32, i32) {
    %c0_i32 = arith.constant 0 : i32
    %c0_i32_0 = arith.constant 0 : i32
    %c0_i32_1 = arith.constant 0 : i32
    return %c0_i32, %c0_i32_0 : i32, i32
  }
  func.func @transform_8(%arg0: i32, %arg1: i32) -> (i32, i32) {
    %c0_i32 = arith.constant 0 : i32
    %c0_i32_0 = arith.constant 0 : i32
    %c0_i32_1 = arith.constant 0 : i32
    return %c0_i32, %c0_i32_0 : i32, i32
  }
  func.func @transform_9(%arg0: i32, %arg1: i32) -> (i32, i32) {
    %c0_i32 = arith.constant 0 : i32
    %c0_i32_0 = arith.constant 0 : i32
    %c0_i32_1 = arith.constant 0 : i32
    return %c0_i32, %c0_i32_0 : i32, i32
  }
  func.func @transform_10(%arg0: i32, %arg1: i32) -> (i32, i32) {
    %c0_i32 = arith.constant 0 : i32
    %c0_i32_0 = arith.constant 0 : i32
    %c0_i32_1 = arith.constant 0 : i32
    return %c0_i32, %c0_i32_0 : i32, i32
  }
  func.func @transform_11(%arg0: i32, %arg1: i32) -> (i32, i32) {
    %c0_i32 = arith.constant 0 : i32
    %c0_i32_0 = arith.constant 0 : i32
    %c0_i32_1 = arith.constant 0 : i32
    return %c0_i32, %c0_i32_0 : i32, i32
  }
  func.func @transform_12(%arg0: i32, %arg1: i32) -> (i32, i32) {
    %c0_i32 = arith.constant 0 : i32
    %c0_i32_0 = arith.constant 0 : i32
    %c0_i32_1 = arith.constant 0 : i32
    return %c0_i32, %c0_i32_0 : i32, i32
  }
  func.func @transform_13(%arg0: i32, %arg1: i32) -> (i32, i32) {
    %c0_i32 = arith.constant 0 : i32
    %c0_i32_0 = arith.constant 0 : i32
    %c0_i32_1 = arith.constant 0 : i32
    return %c0_i32, %c0_i32_0 : i32, i32
  }
  func.func @transform_14(%arg0: i32, %arg1: i32) -> (i32, i32) {
    %c0_i32 = arith.constant 0 : i32
    %c0_i32_0 = arith.constant 0 : i32
    %c0_i32_1 = arith.constant 0 : i32
    return %c0_i32, %c0_i32_0 : i32, i32
  }
  func.func @transform_15(%arg0: i32, %arg1: i32) -> (i32, i32) {
    %c0_i32 = arith.constant 0 : i32
    %c0_i32_0 = arith.constant 0 : i32
    %c0_i32_1 = arith.constant 0 : i32
    return %c0_i32, %c0_i32_0 : i32, i32
  }
  func.func @transform_16(%arg0: i32, %arg1: i32) -> (i32, i32) {
    %c0_i32 = arith.constant 0 : i32
    %c0_i32_0 = arith.constant 0 : i32
    return %arg0, %c0_i32 : i32, i32
  }
}

</mosaic_0001>

<llo_original>
// kernel: vnet_forward.1
$region0: #{vnet_forward.1}
  #allocation0 [shape = 'u32[]', space=smem, size = 0x4, offset = 0x4, fixed_abs, tag = 'smem constant byte address 0x4 - core index']
  #allocation1 [shape = 'u32[144,128]{1,0:T(1,128)}', space=vmem, size = 0x12000, scoped, tag = 'internal scratch']
  #allocation2 [shape = 'f32[8,32]{1,0:T(8,128)}', space=vmem, size = 0x1000, scoped, tag = 'scratch operand']
  #allocation3 [shape = 'f32[1,1]{1,0:T(1,128)S(1)}', space=vmem, size = 0x200, scoped, tag = 'scoped memory for vnet_forward.1']
  %s0 = inlined_call_operand.vmem [shape: f32[8,8,4], index: 0, kind: input, shape index: {}]
  %s1 = inlined_call_operand.vmem [shape: s32[8,1], index: 1, kind: input, shape index: {}]
  %s2 = inlined_call_operand.vmem [shape: f32[4,32], index: 2, kind: input, shape index: {}]
  %s3 = inlined_call_operand.vmem [shape: f32[4,32], index: 3, kind: input, shape index: {}]
  %s4 = inlined_call_operand.vmem [shape: f32[4,32], index: 4, kind: input, shape index: {}]
  %s5 = inlined_call_operand.vmem [shape: f32[32,32], index: 5, kind: input, shape index: {}]
  %s6 = inlined_call_operand.vmem [shape: f32[32,32], index: 6, kind: input, shape index: {}]
  %s7 = inlined_call_operand.vmem [shape: f32[32,32], index: 7, kind: input, shape index: {}]
  %s8 = inlined_call_operand.vmem [shape: f32[1,32], index: 8, kind: input, shape index: {}]
  %s9 = inlined_call_operand.vmem [shape: f32[1,32], index: 9, kind: input, shape index: {}]
  %s10 = inlined_call_operand.vmem [shape: f32[1,32], index: 10, kind: input, shape index: {}]
  %s11 = inlined_call_operand.vmem [shape: f32[1,32], index: 11, kind: input, shape index: {}]
  %s12 = inlined_call_operand.vmem [shape: f32[32,32], index: 12, kind: input, shape index: {}]
  %s13 = inlined_call_operand.vmem [shape: f32[1,32], index: 13, kind: input, shape index: {}]
  %s14 = inlined_call_operand.vmem [shape: f32[1,32], index: 14, kind: input, shape index: {}]
  %s15 = inlined_call_operand.<no memory space> [shape: f32[1,1], index: 15, kind: input, shape index: {}]
  %s16 = inlined_call_operand.vmem [shape: f32[8,1], index: 16, kind: output, shape index: {}]
  %s17 = sld [smem:[#allocation0]]
  $region82: #{vnet_forward.1} parent=0
    _
  %s19 = ssub.s32 1, %s17
  %s20 = scalar_select 0, %s19, %s17
  %v21 = vstv %s15
  %22 = vst [vmem:[#allocation3] sm:$0x1] %v21
  // Predicated region
  $region2: #{vnet_forward.1} parent=0 // pred_check
    _
  $region3: #{vnet_forward.1} parent=0 // pred_check_branch
    %24 = sbr.rel (0) target = $region5
  $region4: #{vnet_forward.1} parent=0 // pred_region
    _
  $region5: #{vnet_forward.1} parent=0 // pred_fallthru
    _
  // Predicated region
  $region6: #{vnet_forward.1} parent=0 // pred_check
    _
  $region7: #{vnet_forward.1} parent=0 // pred_check_branch
    %26 = sbr.rel (0) target = $region9
  $region8: #{vnet_forward.1} parent=0 // pred_region
    _
  $region9: #{vnet_forward.1} parent=0 // pred_fallthru
    _
  // Predicated region
  $region10: #{vnet_forward.1} parent=0 // pred_check
    _
  $region11: #{vnet_forward.1} parent=0 // pred_check_branch
    %28 = sbr.rel (0) target = $region13
  $region12: #{vnet_forward.1} parent=0 // pred_region
    _
  $region13: #{vnet_forward.1} parent=0 // pred_fallthru
    _
  // Predicated region
  $region14: #{vnet_forward.1} parent=0 // pred_check
    _
  $region15: #{vnet_forward.1} parent=0 // pred_check_branch
    %30 = sbr.rel (0) target = $region17
  $region16: #{vnet_forward.1} parent=0 // pred_region
    _
  $region17: #{vnet_forward.1} parent=0 // pred_fallthru
    _
  // Predicated region
  $region18: #{vnet_forward.1} parent=0 // pred_check
    _
  $region19: #{vnet_forward.1} parent=0 // pred_check_branch
    %32 = sbr.rel (0) target = $region21
  $region20: #{vnet_forward.1} parent=0 // pred_region
    _
  $region21: #{vnet_forward.1} parent=0 // pred_fallthru
    _
  // Predicated region
  $region22: #{vnet_forward.1} parent=0 // pred_check
    _
  $region23: #{vnet_forward.1} parent=0 // pred_check_branch
    %34 = sbr.rel (0) target = $region25
  $region24: #{vnet_forward.1} parent=0 // pred_region
    _
  $region25: #{vnet_forward.1} parent=0 // pred_fallthru
    _
  // Predicated region
  $region26: #{vnet_forward.1} parent=0 // pred_check
    _
  $region27: #{vnet_forward.1} parent=0 // pred_check_branch
    %36 = sbr.rel (0) target = $region29
  $region28: #{vnet_forward.1} parent=0 // pred_region
    _
  $region29: #{vnet_forward.1} parent=0 // pred_fallthru
    _
  // Predicated region
  $region30: #{vnet_forward.1} parent=0 // pred_check
    _
  $region31: #{vnet_forward.1} parent=0 // pred_check_branch
    %38 = sbr.rel (0) target = $region33
  $region32: #{vnet_forward.1} parent=0 // pred_region
    _
  $region33: #{vnet_forward.1} parent=0 // pred_fallthru
    _
  // Predicated region
  $region34: #{vnet_forward.1} parent=0 // pred_check
    _
  $region35: #{vnet_forward.1} parent=0 // pred_check_branch
    %40 = sbr.rel (0) target = $region37
  $region36: #{vnet_forward.1} parent=0 // pred_region
    _
  $region37: #{vnet_forward.1} parent=0 // pred_fallthru
    _
  // Predicated region
  $region38: #{vnet_forward.1} parent=0 // pred_check
    _
  $region39: #{vnet_forward.1} parent=0 // pred_check_branch
    %42 = sbr.rel (0) target = $region41
  $region40: #{vnet_forward.1} parent=0 // pred_region
    _
  $region41: #{vnet_forward.1} parent=0 // pred_fallthru
    _
  // Predicated region
  $region42: #{vnet_forward.1} parent=0 // pred_check
    _
  $region43: #{vnet_forward.1} parent=0 // pred_check_branch
    %44 = sbr.rel (0) target = $region45
  $region44: #{vnet_forward.1} parent=0 // pred_region
    _
  $region45: #{vnet_forward.1} parent=0 // pred_fallthru
    _
  // Predicated region
  $region46: #{vnet_forward.1} parent=0 // pred_check
    _
  $region47: #{vnet_forward.1} parent=0 // pred_check_branch
    %46 = sbr.rel (0) target = $region49
  $region48: #{vnet_forward.1} parent=0 // pred_region
    _
  $region49: #{vnet_forward.1} parent=0 // pred_fallthru
    _
  // Predicated region
  $region50: #{vnet_forward.1} parent=0 // pred_check
    _
  $region51: #{vnet_forward.1} parent=0 // pred_check_branch
    %48 = sbr.rel (0) target = $region53
  $region52: #{vnet_forward.1} parent=0 // pred_region
    _
  $region53: #{vnet_forward.1} parent=0 // pred_fallthru
    _
  // Predicated region
  $region54: #{vnet_forward.1} parent=0 // pred_check
    _
  $region55: #{vnet_forward.1} parent=0 // pred_check_branch
    %50 = sbr.rel (0) target = $region57
  $region56: #{vnet_forward.1} parent=0 // pred_region
    _
  $region57: #{vnet_forward.1} parent=0 // pred_fallthru
    _
  // Predicated region
  $region58: #{vnet_forward.1} parent=0 // pred_check
    _
  $region59: #{vnet_forward.1} parent=0 // pred_check_branch
    %52 = sbr.rel (0) target = $region61
  $region60: #{vnet_forward.1} parent=0 // pred_region
    _
  $region61: #{vnet_forward.1} parent=0 // pred_fallthru
    _
  // Predicated region
  $region62: #{vnet_forward.1} parent=0 // pred_check
    _
  $region63: #{vnet_forward.1} parent=0 // pred_check_branch
    %54 = sbr.rel (0) target = $region65
  $region64: #{vnet_forward.1} parent=0 // pred_region
    _
  $region65: #{vnet_forward.1} parent=0 // pred_fallthru
    _
  %p55 = scmp.eq.s32.totalorder 0, 0
  // Predicated region
  $region66: #{vnet_forward.1} parent=0 // pred_check
    %p56 = pneg %p55
  $region67: #{vnet_forward.1} parent=0 // pred_check_branch
    %58 = sbr.rel (%p56) target = $region69
  $region68: #{vnet_forward.1} parent=0 // pred_region
    %vm59 = vcmask 261120
    %60 = vst.msk [vmem:[#allocation2] sm:$0xff] %vm59, 0.0
  $region69: #{vnet_forward.1} parent=0 // pred_fallthru
    _
  %v61 = vld [vmem:[%s0] sm:$0xff]
  %v62 = vld [vmem:[%s0 + $0x8] sm:$0xff]
  %v63 = vld [vmem:[%s0 + $0x10] sm:$0xff]
  %v64 = vld [vmem:[%s0 + $0x18] sm:$0xff]
  %v65 = vld [vmem:[%s0 + $0x20] sm:$0xff]
  %v66 = vld [vmem:[%s0 + $0x28] sm:$0xff]
  %v67 = vld [vmem:[%s0 + $0x30] sm:$0xff]
  %v68 = vld [vmem:[%s0 + $0x38] sm:$0xff]
  %v69 = vld [vmem:[%s2] sm:$0xf]
  %v70 = vld [vmem:[%s8] sm:$0x1]
  %v72 = vlaneseq
  %v73 = vshrl.u32 %v72, 7
  %v74 = vsub.s32 0, %v73
  %v75 = vrot.slane %v70, %v74
  %vm77 = vcmask 31744
  %v79 = vsel %vm77, %v61, 0
  %v82 = vsel %vm77, %v62, 0
  %v85 = vsel %vm77, %v63, 0
  %v88 = vsel %vm77, %v64, 0
  %v91 = vsel %vm77, %v65, 0
  %v94 = vsel %vm77, %v66, 0
  %v97 = vsel %vm77, %v67, 0
  %v100 = vsel %vm77, %v68, 0
  %vm102 = vcmask 1043456
  %v104 = vsel %vm102, %v69, 0
  %106 = vmatprep.subr.mxu0 0.0
  %107 = vmatpush1.msra.mxu0 0.0
  %108 = vmatprep.subr.mxu0 0.0
  %109 = vmatpush1.msra.mxu0 0.0
  %110 = vmatprep.subr.mxu0 0.0
  %111 = vmatpush1.msra.mxu0 0.0
  %112 = vmatprep.subr.mxu0 0.0
  %113 = vmatpush1.msra.mxu0 0.0
  %114 = vmatprep.subr.mxu0 0.0
  %115 = vmatpush1.msra.mxu0 0.0
  %116 = vmatprep.subr.mxu0 0.0
  %117 = vmatpush1.msra.mxu0 0.0
  %118 = vmatprep.subr.mxu0 0.0
  %119 = vmatpush1.msra.mxu0 0.0
  %120 = vmatprep.subr.mxu0 0.0
  %121 = vmatpush1.msra.mxu0 0.0
  %122 = vmatprep.subr.mxu0 0.0
  %123 = vmatpush1.msra.mxu0 0.0
  %124 = vmatprep.subr.mxu0 0.0
  %125 = vmatpush1.msra.mxu0 0.0
  %126 = vmatprep.subr.mxu0 0.0
  %127 = vmatpush1.msra.mxu0 0.0
  %128 = vmatprep.subr.mxu0 0.0
  %129 = vmatpush1.msra.mxu0 0.0
  %130 = vmatprep.subr.mxu0 0.0
  %131 = vmatpush1.msra.mxu0 0.0
  %132 = vmatprep.subr.mxu0 0.0
  %133 = vmatpush1.msra.mxu0 0.0
  %134 = vmatprep.subr.mxu0 0.0
  %135 = vmatpush1.msra.mxu0 0.0
  %136 = vmatprep.subr.mxu0 0.0
  %137 = vmatpush1.msra.mxu0 %v104
  %138 = vmatprep.subr.mxu0 0.0
  %139 = vmatpush2.msra.mxu0 0.0
  %140 = vmatprep.subr.mxu0 0.0
  %141 = vmatpush2.msra.mxu0 0.0
  %142 = vmatprep.subr.mxu0 0.0
  %143 = vmatpush2.msra.mxu0 0.0
  %144 = vmatprep.subr.mxu0 0.0
  %145 = vmatpush2.msra.mxu0 0.0
  %146 = vmatprep.subr.mxu0 0.0
  %147 = vmatpush2.msra.mxu0 0.0
  %148 = vmatprep.subr.mxu0 0.0
  %149 = vmatpush2.msra.mxu0 0.0
  %150 = vmatprep.subr.mxu0 0.0
  %151 = vmatpush2.msra.mxu0 0.0
  %152 = vmatprep.subr.mxu0 0.0
  %153 = vmatpush2.msra.mxu0 0.0
  %154 = vmatprep.subr.mxu0 0.0
  %155 = vmatpush2.msra.mxu0 0.0
  %156 = vmatprep.subr.mxu0 0.0
  %157 = vmatpush2.msra.mxu0 0.0
  %158 = vmatprep.subr.mxu0 0.0
  %159 = vmatpush2.msra.mxu0 0.0
  %160 = vmatprep.subr.mxu0 0.0
  %161 = vmatpush2.msra.mxu0 0.0
  %162 = vmatprep.subr.mxu0 0.0
  %163 = vmatpush2.msra.mxu0 0.0
  %164 = vmatprep.subr.mxu0 0.0
  %165 = vmatpush2.msra.mxu0 0.0
  %166 = vmatprep.subr.mxu0 0.0
  %167 = vmatpush2.msra.mxu0 0.0
  %168 = vmatprep.subr.mxu0 0.0
  %169 = vmatpush2.msra.mxu0 0.0
  %170 = vmatprep.mubr.f32.mxu0 0.0
  %171 = vmatmul.mubr.f32.gmra.mxu0 %v79
  %v172 = vpop.f32.mrf.mxu0
  %v173 = vadd.f32 %v75, %v172
  %v174 = vpop.f32.mrf.mxu0
  %175 = vmatprep.mubr.f32.mxu0 0.0
  %176 = vmatmul.mubr.f32.gmra.mxu0 %v82
  %v177 = vpop.f32.mrf.mxu0
  %v178 = vadd.f32 %v75, %v177
  %v179 = vpop.f32.mrf.mxu0
  %180 = vmatprep.mubr.f32.mxu0 0.0
  %181 = vmatmul.mubr.f32.gmra.mxu0 %v85
  %v182 = vpop.f32.mrf.mxu0
  %v183 = vadd.f32 %v75, %v182
  %v184 = vpop.f32.mrf.mxu0
  %185 = vmatprep.mubr.f32.mxu0 0.0
  %186 = vmatmul.mubr.f32.gmra.mxu0 %v88
  %v187 = vpop.f32.mrf.mxu0
  %v188 = vadd.f32 %v75, %v187
  %v189 = vpop.f32.mrf.mxu0
  %190 = vmatprep.mubr.f32.mxu0 0.0
  %191 = vmatmul.mubr.f32.gmra.mxu0 %v91
  %v192 = vpop.f32.mrf.mxu0
  %v193 = vadd.f32 %v75, %v192
  %v194 = vpop.f32.mrf.mxu0
  %195 = vmatprep.mubr.f32.mxu0 0.0
  %196 = vmatmul.mubr.f32.gmra.mxu0 %v94
  %v197 = vpop.f32.mrf.mxu0
  %v198 = vadd.f32 %v75, %v197
  %v199 = vpop.f32.mrf.mxu0
  %200 = vmatprep.mubr.f32.mxu0 0.0
  %201 = vmatmul.mubr.f32.gmra.mxu0 %v97
  %v202 = vpop.f32.mrf.mxu0
  %v203 = vadd.f32 %v75, %v202
  %v204 = vpop.f32.mrf.mxu0
  %205 = vmatprep.mubr.f32.mxu0 0.0
  %206 = vmatmul.mubr.f32.gmra.mxu0 %v100
  %v207 = vpop.f32.mrf.mxu0
  %v208 = vadd.f32 %v75, %v207
  %v209 = vpop.f32.mrf.mxu0
  %210 = vdwg.mxu0
  %v211 = vld [vmem:[%s3] sm:$0xf]
  %v212 = vld [vmem:[%s9] sm:$0x1]
  %v214 = vlaneseq
  %v215 = vshrl.u32 %v214, 7
  %v216 = vsub.s32 0, %v215
  %v217 = vrot.slane %v212, %v216
  %v220 = vsel %vm102, %v211, 0
  %222 = vmatprep.subr.mxu0 0.0
  %223 = vmatpush1.msra.mxu0 0.0
  %224 = vmatprep.subr.mxu0 0.0
  %225 = vmatpush1.msra.mxu0 0.0
  %226 = vmatprep.subr.mxu0 0.0
  %227 = vmatpush1.msra.mxu0 0.0
  %228 = vmatprep.subr.mxu0 0.0
  %229 = vmatpush1.msra.mxu0 0.0
  %230 = vmatprep.subr.mxu0 0.0
  %231 = vmatpush1.msra.mxu0 0.0
  %232 = vmatprep.subr.mxu0 0.0
  %233 = vmatpush1.msra.mxu0 0.0
  %234 = vmatprep.subr.mxu0 0.0
  %235 = vmatpush1.msra.mxu0 0.0
  %236 = vmatprep.subr.mxu0 0.0
  %237 = vmatpush1.msra.mxu0 0.0
  %238 = vmatprep.subr.mxu0 0.0
  %239 = vmatpush1.msra.mxu0 0.0
  %240 = vmatprep.subr.mxu0 0.0
  %241 = vmatpush1.msra.mxu0 0.0
  %242 = vmatprep.subr.mxu0 0.0
  %243 = vmatpush1.msra.mxu0 0.0
  %244 = vmatprep.subr.mxu0 0.0
  %245 = vmatpush1.msra.mxu0 0.0
  %246 = vmatprep.subr.mxu0 0.0
  %247 = vmatpush1.msra.mxu0 0.0
  %248 = vmatprep.subr.mxu0 0.0
  %249 = vmatpush1.msra.mxu0 0.0
  %250 = vmatprep.subr.mxu0 0.0
  %251 = vmatpush1.msra.mxu0 0.0
  %252 = vmatprep.subr.mxu0 0.0
  %253 = vmatpush1.msra.mxu0 %v220
  %254 = vmatprep.subr.mxu0 0.0
  %255 = vmatpush2.msra.mxu0 0.0
  %256 = vmatprep.subr.mxu0 0.0
  %257 = vmatpush2.msra.mxu0 0.0
  %258 = vmatprep.subr.mxu0 0.0
  %259 = vmatpush2.msra.mxu0 0.0
  %260 = vmatprep.subr.mxu0 0.0
  %261 = vmatpush2.msra.mxu0 0.0
  %262 = vmatprep.subr.mxu0 0.0
  %263 = vmatpush2.msra.mxu0 0.0
  %264 = vmatprep.subr.mxu0 0.0
  %265 = vmatpush2.msra.mxu0 0.0
  %266 = vmatprep.subr.mxu0 0.0
  %267 = vmatpush2.msra.mxu0 0.0
  %268 = vmatprep.subr.mxu0 0.0
  %269 = vmatpush2.msra.mxu0 0.0
  %270 = vmatprep.subr.mxu0 0.0
  %271 = vmatpush2.msra.mxu0 0.0
  %272 = vmatprep.subr.mxu0 0.0
  %273 = vmatpush2.msra.mxu0 0.0
  %274 = vmatprep.subr.mxu0 0.0
  %275 = vmatpush2.msra.mxu0 0.0
  %276 = vmatprep.subr.mxu0 0.0
  %277 = vmatpush2.msra.mxu0 0.0
  %278 = vmatprep.subr.mxu0 0.0
  %279 = vmatpush2.msra.mxu0 0.0
  %280 = vmatprep.subr.mxu0 0.0
  %281 = vmatpush2.msra.mxu0 0.0
  %282 = vmatprep.subr.mxu0 0.0
  %283 = vmatpush2.msra.mxu0 0.0
  %284 = vmatprep.subr.mxu0 0.0
  %285 = vmatpush2.msra.mxu0 0.0
  %286 = vmatprep.mubr.f32.mxu0 0.0
  %287 = vmatmul.mubr.f32.gmra.mxu0 %v79
  %v288 = vpop.f32.mrf.mxu0
  %v289 = vadd.f32 %v217, %v288
  %v290 = vpop.f32.mrf.mxu0
  %291 = vmatprep.mubr.f32.mxu0 0.0
  %292 = vmatmul.mubr.f32.gmra.mxu0 %v82
  %v293 = vpop.f32.mrf.mxu0
  %v294 = vadd.f32 %v217, %v293
  %v295 = vpop.f32.mrf.mxu0
  %296 = vmatprep.mubr.f32.mxu0 0.0
  %297 = vmatmul.mubr.f32.gmra.mxu0 %v85
  %v298 = vpop.f32.mrf.mxu0
  %v299 = vadd.f32 %v217, %v298
  %v300 = vpop.f32.mrf.mxu0
  %301 = vmatprep.mubr.f32.mxu0 0.0
  %302 = vmatmul.mubr.f32.gmra.mxu0 %v88
  %v303 = vpop.f32.mrf.mxu0
  %v304 = vadd.f32 %v217, %v303
  %v305 = vpop.f32.mrf.mxu0
  %306 = vmatprep.mubr.f32.mxu0 0.0
  %307 = vmatmul.mubr.f32.gmra.mxu0 %v91
  %v308 = vpop.f32.mrf.mxu0
  %v309 = vadd.f32 %v217, %v308
  %v310 = vpop.f32.mrf.mxu0
  %311 = vmatprep.mubr.f32.mxu0 0.0
  %312 = vmatmul.mubr.f32.gmra.mxu0 %v94
  %v313 = vpop.f32.mrf.mxu0
  %v314 = vadd.f32 %v217, %v313
  %v315 = vpop.f32.mrf.mxu0
  %316 = vmatprep.mubr.f32.mxu0 0.0
  %317 = vmatmul.mubr.f32.gmra.mxu0 %v97
  %v318 = vpop.f32.mrf.mxu0
  %v319 = vadd.f32 %v217, %v318
  %v320 = vpop.f32.mrf.mxu0
  %321 = vmatprep.mubr.f32.mxu0 0.0
  %322 = vmatmul.mubr.f32.gmra.mxu0 %v100
  %v323 = vpop.f32.mrf.mxu0
  %v324 = vadd.f32 %v217, %v323
  %v325 = vpop.f32.mrf.mxu0
  %326 = vdwg.mxu0
  %v327 = vld [vmem:[%s4] sm:$0xf]
  %v328 = vld [vmem:[%s10] sm:$0x1]
  %v330 = vlaneseq
  %v331 = vshrl.u32 %v330, 7
  %v332 = vsub.s32 0, %v331
  %v333 = vrot.slane %v328, %v332
  %v336 = vsel %vm102, %v327, 0
  %338 = vmatprep.subr.mxu0 0.0
  %339 = vmatpush1.msra.mxu0 0.0
  %340 = vmatprep.subr.mxu0 0.0
  %341 = vmatpush1.msra.mxu0 0.0
  %342 = vmatprep.subr.mxu0 0.0
  %343 = vmatpush1.msra.mxu0 0.0
  %344 = vmatprep.subr.mxu0 0.0
  %345 = vmatpush1.msra.mxu0 0.0
  %346 = vmatprep.subr.mxu0 0.0
  %347 = vmatpush1.msra.mxu0 0.0
  %348 = vmatprep.subr.mxu0 0.0
  %349 = vmatpush1.msra.mxu0 0.0
  %350 = vmatprep.subr.mxu0 0.0
  %351 = vmatpush1.msra.mxu0 0.0
  %352 = vmatprep.subr.mxu0 0.0
  %353 = vmatpush1.msra.mxu0 0.0
  %354 = vmatprep.subr.mxu0 0.0
  %355 = vmatpush1.msra.mxu0 0.0
  %356 = vmatprep.subr.mxu0 0.0
  %357 = vmatpush1.msra.mxu0 0.0
  %358 = vmatprep.subr.mxu0 0.0
  %359 = vmatpush1.msra.mxu0 0.0
  %360 = vmatprep.subr.mxu0 0.0
  %361 = vmatpush1.msra.mxu0 0.0
  %362 = vmatprep.subr.mxu0 0.0
  %363 = vmatpush1.msra.mxu0 0.0
  %364 = vmatprep.subr.mxu0 0.0
  %365 = vmatpush1.msra.mxu0 0.0
  %366 = vmatprep.subr.mxu0 0.0
  %367 = vmatpush1.msra.mxu0 0.0
  %368 = vmatprep.subr.mxu0 0.0
  %369 = vmatpush1.msra.mxu0 %v336
  %370 = vmatprep.subr.mxu0 0.0
  %371 = vmatpush2.msra.mxu0 0.0
  %372 = vmatprep.subr.mxu0 0.0
  %373 = vmatpush2.msra.mxu0 0.0
  %374 = vmatprep.subr.mxu0 0.0
  %375 = vmatpush2.msra.mxu0 0.0
  %376 = vmatprep.subr.mxu0 0.0
  %377 = vmatpush2.msra.mxu0 0.0
  %378 = vmatprep.subr.mxu0 0.0
  %379 = vmatpush2.msra.mxu0 0.0
  %380 = vmatprep.subr.mxu0 0.0
  %381 = vmatpush2.msra.mxu0 0.0
  %382 = vmatprep.subr.mxu0 0.0
  %383 = vmatpush2.msra.mxu0 0.0
  %384 = vmatprep.subr.mxu0 0.0
  %385 = vmatpush2.msra.mxu0 0.0
  %386 = vmatprep.subr.mxu0 0.0
  %387 = vmatpush2.msra.mxu0 0.0
  %388 = vmatprep.subr.mxu0 0.0
  %389 = vmatpush2.msra.mxu0 0.0
  %390 = vmatprep.subr.mxu0 0.0
  %391 = vmatpush2.msra.mxu0 0.0
  %392 = vmatprep.subr.mxu0 0.0
  %393 = vmatpush2.msra.mxu0 0.0
  %394 = vmatprep.subr.mxu0 0.0
  %395 = vmatpush2.msra.mxu0 0.0
  %396 = vmatprep.subr.mxu0 0.0
  %397 = vmatpush2.msra.mxu0 0.0
  %398 = vmatprep.subr.mxu0 0.0
  %399 = vmatpush2.msra.mxu0 0.0
  %400 = vmatprep.subr.mxu0 0.0
  %401 = vmatpush2.msra.mxu0 0.0
  %402 = vmatprep.mubr.f32.mxu0 0.0
  %403 = vmatmul.mubr.f32.gmra.mxu0 %v79
  %v404 = vpop.f32.mrf.mxu0
  %v405 = vadd.f32 %v333, %v404
  %v406 = vpop.f32.mrf.mxu0
  %407 = vmatprep.mubr.f32.mxu0 0.0
  %408 = vmatmul.mubr.f32.gmra.mxu0 %v82
  %v409 = vpop.f32.mrf.mxu0
  %v410 = vadd.f32 %v333, %v409
  %v411 = vpop.f32.mrf.mxu0
  %412 = vmatprep.mubr.f32.mxu0 0.0
  %413 = vmatmul.mubr.f32.gmra.mxu0 %v85
  %v414 = vpop.f32.mrf.mxu0
  %v415 = vadd.f32 %v333, %v414
  %v416 = vpop.f32.mrf.mxu0
  %417 = vmatprep.mubr.f32.mxu0 0.0
  %418 = vmatmul.mubr.f32.gmra.mxu0 %v88
  %v419 = vpop.f32.mrf.mxu0
  %v420 = vadd.f32 %v333, %v419
  %v421 = vpop.f32.mrf.mxu0
  %422 = vmatprep.mubr.f32.mxu0 0.0
  %423 = vmatmul.mubr.f32.gmra.mxu0 %v91
  %v424 = vpop.f32.mrf.mxu0
  %v425 = vadd.f32 %v333, %v424
  %v426 = vpop.f32.mrf.mxu0
  %427 = vmatprep.mubr.f32.mxu0 0.0
  %428 = vmatmul.mubr.f32.gmra.mxu0 %v94
  %v429 = vpop.f32.mrf.mxu0
  %v430 = vadd.f32 %v333, %v429
  %v431 = vpop.f32.mrf.mxu0
  %432 = vmatprep.mubr.f32.mxu0 0.0
  %433 = vmatmul.mubr.f32.gmra.mxu0 %v97
  %v434 = vpop.f32.mrf.mxu0
  %v435 = vadd.f32 %v333, %v434
  %v436 = vpop.f32.mrf.mxu0
  %437 = vmatprep.mubr.f32.mxu0 0.0
  %438 = vmatmul.mubr.f32.gmra.mxu0 %v100
  %v439 = vpop.f32.mrf.mxu0
  %v440 = vadd.f32 %v333, %v439
  %v441 = vpop.f32.mrf.mxu0
  %442 = vdwg.mxu0
  %v443 = vld [vmem:[%s5] sm:$0xff]
  %v444 = vld [vmem:[%s5 + $0x8] sm:$0xff]
  %v445 = vld [vmem:[%s5 + $0x10] sm:$0xff]
  %v446 = vld [vmem:[%s5 + $0x18] sm:$0xff]
  %v447 = vld [vmem:[%s6] sm:$0xff]
  %v448 = vld [vmem:[%s6 + $0x8] sm:$0xff]
  %v449 = vld [vmem:[%s6 + $0x10] sm:$0xff]
  %v450 = vld [vmem:[%s6 + $0x18] sm:$0xff]
  %v451 = vld [vmem:[%s7] sm:$0xff]
  %v452 = vld [vmem:[%s7 + $0x8] sm:$0xff]
  %v453 = vld [vmem:[%s7 + $0x10] sm:$0xff]
  %v454 = vld [vmem:[%s7 + $0x18] sm:$0xff]
  %v455 = vld [vmem:[%s11] sm:$0x1]
  %v457 = vlaneseq
  %v458 = vshrl.u32 %v457, 7
  %v459 = vsub.s32 0, %v458
  %v460 = vrot.slane %v455, %v459
  %v462 = vld [vmem:[%s1] sm:$0xff]
  %s463 = smul.u32 0, 8
  %v464 = vld [vmem:[#allocation2] sm:$0xff]
  %vm465 = vcmask 261120
  %v467 = vsel %vm465, %v464, 0
  %469 = vmatprep.subr.mxu0 0.0
  %470 = vmatpush1.msra.mxu0 0.0
  %471 = vmatprep.subr.mxu0 0.0
  %472 = vmatpush1.msra.mxu0 0.0
  %473 = vmatprep.subr.mxu0 0.0
  %474 = vmatpush1.msra.mxu0 0.0
  %475 = vmatprep.subr.mxu0 0.0
  %476 = vmatpush1.msra.mxu0 0.0
  %477 = vmatprep.subr.mxu0 0.0
  %478 = vmatpush1.msra.mxu0 0.0
  %479 = vmatprep.subr.mxu0 0.0
  %480 = vmatpush1.msra.mxu0 0.0
  %481 = vmatprep.subr.mxu0 0.0
  %482 = vmatpush1.msra.mxu0 0.0
  %483 = vmatprep.subr.mxu0 0.0
  %484 = vmatpush1.msra.mxu0 0.0
  %485 = vmatprep.subr.mxu0 0.0
  %486 = vmatpush1.msra.mxu0 0.0
  %487 = vmatprep.subr.mxu0 0.0
  %488 = vmatpush1.msra.mxu0 0.0
  %489 = vmatprep.subr.mxu0 0.0
  %490 = vmatpush1.msra.mxu0 0.0
  %491 = vmatprep.subr.mxu0 0.0
  %492 = vmatpush1.msra.mxu0 0.0
  %493 = vmatprep.subr.mxu0 0.0
  %494 = vmatpush1.msra.mxu0 %v446
  %495 = vmatprep.subr.mxu0 0.0
  %496 = vmatpush1.msra.mxu0 %v445
  %497 = vmatprep.subr.mxu0 0.0
  %498 = vmatpush1.msra.mxu0 %v444
  %499 = vmatprep.subr.mxu0 0.0
  %500 = vmatpush1.msra.mxu0 %v443
  %501 = vmatprep.subr.mxu0 0.0
  %502 = vmatpush2.msra.mxu0 0.0
  %503 = vmatprep.subr.mxu0 0.0
  %504 = vmatpush2.msra.mxu0 0.0
  %505 = vmatprep.subr.mxu0 0.0
  %506 = vmatpush2.msra.mxu0 0.0
  %507 = vmatprep.subr.mxu0 0.0
  %508 = vmatpush2.msra.mxu0 0.0
  %509 = vmatprep.subr.mxu0 0.0
  %510 = vmatpush2.msra.mxu0 0.0
  %511 = vmatprep.subr.mxu0 0.0
  %512 = vmatpush2.msra.mxu0 0.0
  %513 = vmatprep.subr.mxu0 0.0
  %514 = vmatpush2.msra.mxu0 0.0
  %515 = vmatprep.subr.mxu0 0.0
  %516 = vmatpush2.msra.mxu0 0.0
  %517 = vmatprep.subr.mxu0 0.0
  %518 = vmatpush2.msra.mxu0 0.0
  %519 = vmatprep.subr.mxu0 0.0
  %520 = vmatpush2.msra.mxu0 0.0
  %521 = vmatprep.subr.mxu0 0.0
  %522 = vmatpush2.msra.mxu0 0.0
  %523 = vmatprep.subr.mxu0 0.0
  %524 = vmatpush2.msra.mxu0 0.0
  %525 = vmatprep.subr.mxu0 0.0
  %526 = vmatpush2.msra.mxu0 0.0
  %527 = vmatprep.subr.mxu0 0.0
  %528 = vmatpush2.msra.mxu0 0.0
  %529 = vmatprep.subr.mxu0 0.0
  %530 = vmatpush2.msra.mxu0 0.0
  %531 = vmatprep.subr.mxu0 0.0
  %532 = vmatpush2.msra.mxu0 0.0
  %533 = vmatprep.mubr.f32.mxu0 0.0
  %534 = vmatmul.mubr.f32.gmra.mxu0 %v467
  %v535 = vpop.f32.mrf.mxu0
  %v536 = vadd.f32 0.0, %v535
  %v537 = vpop.f32.mrf.mxu0
  %538 = vdwg.mxu0
  %539 = vmatprep.subr.mxu0 0.0
  %540 = vmatpush1.msra.mxu0 0.0
  %541 = vmatprep.subr.mxu0 0.0
  %542 = vmatpush1.msra.mxu0 0.0
  %543 = vmatprep.subr.mxu0 0.0
  %544 = vmatpush1.msra.mxu0 0.0
  %545 = vmatprep.subr.mxu0 0.0
  %546 = vmatpush1.msra.mxu0 0.0
  %547 = vmatprep.subr.mxu0 0.0
  %548 = vmatpush1.msra.mxu0 0.0
  %549 = vmatprep.subr.mxu0 0.0
  %550 = vmatpush1.msra.mxu0 0.0
  %551 = vmatprep.subr.mxu0 0.0
  %552 = vmatpush1.msra.mxu0 0.0
  %553 = vmatprep.subr.mxu0 0.0
  %554 = vmatpush1.msra.mxu0 0.0
  %555 = vmatprep.subr.mxu0 0.0
  %556 = vmatpush1.msra.mxu0 0.0
  %557 = vmatprep.subr.mxu0 0.0
  %558 = vmatpush1.msra.mxu0 0.0
  %559 = vmatprep.subr.mxu0 0.0
  %560 = vmatpush1.msra.mxu0 0.0
  %561 = vmatprep.subr.mxu0 0.0
  %562 = vmatpush1.msra.mxu0 0.0
  %563 = vmatprep.subr.mxu0 0.0
  %564 = vmatpush1.msra.mxu0 %v450
  %565 = vmatprep.subr.mxu0 0.0
  %566 = vmatpush1.msra.mxu0 %v449
  %567 = vmatprep.subr.mxu0 0.0
  %568 = vmatpush1.msra.mxu0 %v448
  %569 = vmatprep.subr.mxu0 0.0
  %570 = vmatpush1.msra.mxu0 %v447
  %571 = vmatprep.subr.mxu0 0.0
  %572 = vmatpush2.msra.mxu0 0.0
  %573 = vmatprep.subr.mxu0 0.0
  %574 = vmatpush2.msra.mxu0 0.0
  %575 = vmatprep.subr.mxu0 0.0
  %576 = vmatpush2.msra.mxu0 0.0
  %577 = vmatprep.subr.mxu0 0.0
  %578 = vmatpush2.msra.mxu0 0.0
  %579 = vmatprep.subr.mxu0 0.0
  %580 = vmatpush2.msra.mxu0 0.0
  %581 = vmatprep.subr.mxu0 0.0
  %582 = vmatpush2.msra.mxu0 0.0
  %583 = vmatprep.subr.mxu0 0.0
  %584 = vmatpush2.msra.mxu0 0.0
  %585 = vmatprep.subr.mxu0 0.0
  %586 = vmatpush2.msra.mxu0 0.0
  %587 = vmatprep.subr.mxu0 0.0
  %588 = vmatpush2.msra.mxu0 0.0
  %589 = vmatprep.subr.mxu0 0.0
  %590 = vmatpush2.msra.mxu0 0.0
  %591 = vmatprep.subr.mxu0 0.0
  %592 = vmatpush2.msra.mxu0 0.0
  %593 = vmatprep.subr.mxu0 0.0
  %594 = vmatpush2.msra.mxu0 0.0
  %595 = vmatprep.subr.mxu0 0.0
  %596 = vmatpush2.msra.mxu0 0.0
  %597 = vmatprep.subr.mxu0 0.0
  %598 = vmatpush2.msra.mxu0 0.0
  %599 = vmatprep.subr.mxu0 0.0
  %600 = vmatpush2.msra.mxu0 0.0
  %601 = vmatprep.subr.mxu0 0.0
  %602 = vmatpush2.msra.mxu0 0.0
  %603 = vmatprep.mubr.f32.mxu0 0.0
  %604 = vmatmul.mubr.f32.gmra.mxu0 %v467
  %v605 = vpop.f32.mrf.mxu0
  %v606 = vadd.f32 0.0, %v605
  %v607 = vpop.f32.mrf.mxu0
  %608 = vdwg.mxu0
  %609 = vmatprep.subr.mxu0 0.0
  %610 = vmatpush1.msra.mxu0 0.0
  %611 = vmatprep.subr.mxu0 0.0
  %612 = vmatpush1.msra.mxu0 0.0
  %613 = vmatprep.subr.mxu0 0.0
  %614 = vmatpush1.msra.mxu0 0.0
  %615 = vmatprep.subr.mxu0 0.0
  %616 = vmatpush1.msra.mxu0 0.0
  %617 = vmatprep.subr.mxu0 0.0
  %618 = vmatpush1.msra.mxu0 0.0
  %619 = vmatprep.subr.mxu0 0.0
  %620 = vmatpush1.msra.mxu0 0.0
  %621 = vmatprep.subr.mxu0 0.0
  %622 = vmatpush1.msra.mxu0 0.0
  %623 = vmatprep.subr.mxu0 0.0
  %624 = vmatpush1.msra.mxu0 0.0
  %625 = vmatprep.subr.mxu0 0.0
  %626 = vmatpush1.msra.mxu0 0.0
  %627 = vmatprep.subr.mxu0 0.0
  %628 = vmatpush1.msra.mxu0 0.0
  %629 = vmatprep.subr.mxu0 0.0
  %630 = vmatpush1.msra.mxu0 0.0
  %631 = vmatprep.subr.mxu0 0.0
  %632 = vmatpush1.msra.mxu0 0.0
  %633 = vmatprep.subr.mxu0 0.0
  %634 = vmatpush1.msra.mxu0 %v454
  %635 = vmatprep.subr.mxu0 0.0
  %636 = vmatpush1.msra.mxu0 %v453
  %637 = vmatprep.subr.mxu0 0.0
  %638 = vmatpush1.msra.mxu0 %v452
  %639 = vmatprep.subr.mxu0 0.0
  %640 = vmatpush1.msra.mxu0 %v451
  %641 = vmatprep.subr.mxu0 0.0
  %642 = vmatpush2.msra.mxu0 0.0
  %643 = vmatprep.subr.mxu0 0.0
  %644 = vmatpush2.msra.mxu0 0.0
  %645 = vmatprep.subr.mxu0 0.0
  %646 = vmatpush2.msra.mxu0 0.0
  %647 = vmatprep.subr.mxu0 0.0
  %648 = vmatpush2.msra.mxu0 0.0
  %649 = vmatprep.subr.mxu0 0.0
  %650 = vmatpush2.msra.mxu0 0.0
  %651 = vmatprep.subr.mxu0 0.0
  %652 = vmatpush2.msra.mxu0 0.0
  %653 = vmatprep.subr.mxu0 0.0
  %654 = vmatpush2.msra.mxu0 0.0
  %655 = vmatprep.subr.mxu0 0.0
  %656 = vmatpush2.msra.mxu0 0.0
  %657 = vmatprep.subr.mxu0 0.0
  %658 = vmatpush2.msra.mxu0 0.0
  %659 = vmatprep.subr.mxu0 0.0
  %660 = vmatpush2.msra.mxu0 0.0
  %661 = vmatprep.subr.mxu0 0.0
  %662 = vmatpush2.msra.mxu0 0.0
  %663 = vmatprep.subr.mxu0 0.0
  %664 = vmatpush2.msra.mxu0 0.0
  %665 = vmatprep.subr.mxu0 0.0
  %666 = vmatpush2.msra.mxu0 0.0
  %667 = vmatprep.subr.mxu0 0.0
  %668 = vmatpush2.msra.mxu0 0.0
  %669 = vmatprep.subr.mxu0 0.0
  %670 = vmatpush2.msra.mxu0 0.0
  %671 = vmatprep.subr.mxu0 0.0
  %672 = vmatpush2.msra.mxu0 0.0
  %673 = vmatprep.mubr.f32.mxu0 0.0
  %674 = vmatmul.mubr.f32.gmra.mxu0 %v467
  %v675 = vpop.f32.mrf.mxu0
  %v676 = vadd.f32 %v460, %v675
  %v677 = vpop.f32.mrf.mxu0
  %678 = vdwg.mxu0
  %v680 = vrot.slane %v536, 1
  %v681 = vrot.slane %v536, 2
  %v682 = vrot.slane %v536, 3
  %v683 = vrot.slane %v536, 4
  %v684 = vrot.slane %v536, 5
  %v685 = vrot.slane %v536, 6
  %v686 = vrot.slane %v536, 7
  %v695 = vadd.f32 %v173, %v536
  %v696 = vadd.f32 %v178, %v680
  %v697 = vadd.f32 %v183, %v681
  %v698 = vadd.f32 %v188, %v682
  %v699 = vadd.f32 %v193, %v683
  %v700 = vadd.f32 %v198, %v684
  %v701 = vadd.f32 %v203, %v685
  %v702 = vadd.f32 %v208, %v686
  %v703 = vxor.u32 %v695, 2147483648
  %v704 = vxor.u32 %v696, 2147483648
  %v705 = vxor.u32 %v697, 2147483648
  %v706 = vxor.u32 %v698, 2147483648
  %v707 = vxor.u32 %v699, 2147483648
  %v708 = vxor.u32 %v700, 2147483648
  %v709 = vxor.u32 %v701, 2147483648
  %v710 = vxor.u32 %v702, 2147483648
  %v711 = vmul.f32 %v703, 1.442695
  %v712 = vpow.pop %v711
  %v713 = vmul.f32 %v704, 1.442695
  %v714 = vpow.pop %v713
  %v715 = vmul.f32 %v705, 1.442695
  %v716 = vpow.pop %v715
  %v717 = vmul.f32 %v706, 1.442695
  %v718 = vpow.pop %v717
  %v719 = vmul.f32 %v707, 1.442695
  %v720 = vpow.pop %v719
  %v721 = vmul.f32 %v708, 1.442695
  %v722 = vpow.pop %v721
  %v723 = vmul.f32 %v709, 1.442695
  %v724 = vpow.pop %v723
  %v725 = vmul.f32 %v710, 1.442695
  %v726 = vpow.pop %v725
  %v727 = vadd.f32 %v712, 1.0
  %v728 = vadd.f32 %v714, 1.0
  %v729 = vadd.f32 %v716, 1.0
  %v730 = vadd.f32 %v718, 1.0
  %v731 = vadd.f32 %v720, 1.0
  %v732 = vadd.f32 %v722, 1.0
  %v733 = vadd.f32 %v724, 1.0
  %v734 = vadd.f32 %v726, 1.0
  %v735 = vrcp.pop %v727
  %v736 = vmul.f32 1.0, %v735
  %v737 = vrcp.pop %v728
  %v738 = vmul.f32 1.0, %v737
  %v739 = vrcp.pop %v729
  %v740 = vmul.f32 1.0, %v739
  %v741 = vrcp.pop %v730
  %v742 = vmul.f32 1.0, %v741
  %v743 = vrcp.pop %v731
  %v744 = vmul.f32 1.0, %v743
  %v745 = vrcp.pop %v732
  %v746 = vmul.f32 1.0, %v745
  %v747 = vrcp.pop %v733
  %v748 = vmul.f32 1.0, %v747
  %v749 = vrcp.pop %v734
  %v750 = vmul.f32 1.0, %v749
  %v752 = vrot.slane %v606, 1
  %v753 = vrot.slane %v606, 2
  %v754 = vrot.slane %v606, 3
  %v755 = vrot.slane %v606, 4
  %v756 = vrot.slane %v606, 5
  %v757 = vrot.slane %v606, 6
  %v758 = vrot.slane %v606, 7
  %v767 = vadd.f32 %v289, %v606
  %v768 = vadd.f32 %v294, %v752
  %v769 = vadd.f32 %v299, %v753
  %v770 = vadd.f32 %v304, %v754
  %v771 = vadd.f32 %v309, %v755
  %v772 = vadd.f32 %v314, %v756
  %v773 = vadd.f32 %v319, %v757
  %v774 = vadd.f32 %v324, %v758
  %v775 = vxor.u32 %v767, 2147483648
  %v776 = vxor.u32 %v768, 2147483648
  %v777 = vxor.u32 %v769, 2147483648
  %v778 = vxor.u32 %v770, 2147483648
  %v779 = vxor.u32 %v771, 2147483648
  %v780 = vxor.u32 %v772, 2147483648
  %v781 = vxor.u32 %v773, 2147483648
  %v782 = vxor.u32 %v774, 2147483648
  %v783 = vmul.f32 %v775, 1.442695
  %v784 = vpow.pop %v783
  %v785 = vmul.f32 %v776, 1.442695
  %v786 = vpow.pop %v785
  %v787 = vmul.f32 %v777, 1.442695
  %v788 = vpow.pop %v787
  %v789 = vmul.f32 %v778, 1.442695
  %v790 = vpow.pop %v789
  %v791 = vmul.f32 %v779, 1.442695
  %v792 = vpow.pop %v791
  %v793 = vmul.f32 %v780, 1.442695
  %v794 = vpow.pop %v793
  %v795 = vmul.f32 %v781, 1.442695
  %v796 = vpow.pop %v795
  %v797 = vmul.f32 %v782, 1.442695
  %v798 = vpow.pop %v797
  %v799 = vadd.f32 %v784, 1.0
  %v800 = vadd.f32 %v786, 1.0
  %v801 = vadd.f32 %v788, 1.0
  %v802 = vadd.f32 %v790, 1.0
  %v803 = vadd.f32 %v792, 1.0
  %v804 = vadd.f32 %v794, 1.0
  %v805 = vadd.f32 %v796, 1.0
  %v806 = vadd.f32 %v798, 1.0
  %v807 = vrcp.pop %v799
  %v808 = vmul.f32 1.0, %v807
  %v809 = vrcp.pop %v800
  %v810 = vmul.f32 1.0, %v809
  %v811 = vrcp.pop %v801
  %v812 = vmul.f32 1.0, %v811
  %v813 = vrcp.pop %v802
  %v814 = vmul.f32 1.0, %v813
  %v815 = vrcp.pop %v803
  %v816 = vmul.f32 1.0, %v815
  %v817 = vrcp.pop %v804
  %v818 = vmul.f32 1.0, %v817
  %v819 = vrcp.pop %v805
  %v820 = vmul.f32 1.0, %v819
  %v821 = vrcp.pop %v806
  %v822 = vmul.f32 1.0, %v821
  %v824 = vrot.slane %v676, 1
  %v825 = vrot.slane %v676, 2
  %v826 = vrot.slane %v676, 3
  %v827 = vrot.slane %v676, 4
  %v828 = vrot.slane %v676, 5
  %v829 = vrot.slane %v676, 6
  %v830 = vrot.slane %v676, 7
  %v839 = vmul.f32 %v736, %v676
  %v840 = vmul.f32 %v738, %v824
  %v841 = vmul.f32 %v740, %v825
  %v842 = vmul.f32 %v742, %v826
  %v843 = vmul.f32 %v744, %v827
  %v844 = vmul.f32 %v746, %v828
  %v845 = vmul.f32 %v748, %v829
  %v846 = vmul.f32 %v750, %v830
  %v847 = vadd.f32 %v405, %v839
  %v848 = vadd.f32 %v410, %v840
  %v849 = vadd.f32 %v415, %v841
  %v850 = vadd.f32 %v420, %v842
  %v851 = vadd.f32 %v425, %v843
  %v852 = vadd.f32 %v430, %v844
  %v853 = vadd.f32 %v435, %v845
  %v854 = vadd.f32 %v440, %v846
  %v855 = vtanh.pop %v847
  %v856 = vtanh.pop %v848
  %v857 = vtanh.pop %v849
  %v858 = vtanh.pop %v850
  %v859 = vtanh.pop %v851
  %v860 = vtanh.pop %v852
  %v861 = vtanh.pop %v853
  %v862 = vtanh.pop %v854
  %v863 = vsub.f32 1.0, %v808
  %v864 = vsub.f32 1.0, %v810
  %v865 = vsub.f32 1.0, %v812
  %v866 = vsub.f32 1.0, %v814
  %v867 = vsub.f32 1.0, %v816
  %v868 = vsub.f32 1.0, %v818
  %v869 = vsub.f32 1.0, %v820
  %v870 = vsub.f32 1.0, %v822
  %v871 = vmul.f32 %v863, %v855
  %v872 = vmul.f32 %v864, %v856
  %v873 = vmul.f32 %v865, %v857
  %v874 = vmul.f32 %v866, %v858
  %v875 = vmul.f32 %v867, %v859
  %v876 = vmul.f32 %v868, %v860
  %v877 = vmul.f32 %v869, %v861
  %v878 = vmul.f32 %v870, %v862
  %v879 = vrot.slane %v464, 1
  %v880 = vrot.slane %v464, 2
  %v881 = vrot.slane %v464, 3
  %v882 = vrot.slane %v464, 4
  %v883 = vrot.slane %v464, 5
  %v884 = vrot.slane %v464, 6
  %v885 = vrot.slane %v464, 7
  %v894 = vmul.f32 %v808, %v464
  %v895 = vmul.f32 %v810, %v879
  %v896 = vmul.f32 %v812, %v880
  %v897 = vmul.f32 %v814, %v881
  %v898 = vmul.f32 %v816, %v882
  %v899 = vmul.f32 %v818, %v883
  %v900 = vmul.f32 %v820, %v884
  %v901 = vmul.f32 %v822, %v885
  %v902 = vadd.f32 %v871, %v894
  %v903 = vadd.f32 %v872, %v895
  %v904 = vadd.f32 %v873, %v896
  %v905 = vadd.f32 %v874, %v897
  %v906 = vadd.f32 %v875, %v898
  %v907 = vadd.f32 %v876, %v899
  %v908 = vadd.f32 %v877, %v900
  %v909 = vadd.f32 %v878, %v901
  %v910 = vstv %s463
  %vm911 = vcmp.lt.s32.totalorder %v910, %v462
  %v912 = vsel %vm911, 1, 0
  %913 = vset.pattern.permute.xlu0 0
  %914 = vperm.xlu0 %913, %v912
  %v915 = vpop.permute.xlu0 %914
  %vm916 = vcmp.eq.s32.totalorder %v915, 1
  %v925 = vrot.slane %v903, 7
  %vm926 = vcmask 1041409
  %v927 = vsel %vm926, %v925, %v902
  %v928 = vrot.slane %v904, 6
  %vm929 = vcmask 1042434
  %v930 = vsel %vm929, %v928, %v927
  %v931 = vrot.slane %v905, 5
  %vm932 = vcmask 1043459
  %v933 = vsel %vm932, %v931, %v930
  %v934 = vrot.slane %v906, 4
  %vm935 = vcmask 1044484
  %v936 = vsel %vm935, %v934, %v933
  %v937 = vrot.slane %v907, 3
  %vm938 = vcmask 1045509
  %v939 = vsel %vm938, %v937, %v936
  %v940 = vrot.slane %v908, 2
  %vm941 = vcmask 1046534
  %v942 = vsel %vm941, %v940, %v939
  %v943 = vrot.slane %v909, 1
  %vm944 = vcmask 1047559
  %v945 = vsel %vm944, %v943, %v942
  %v947 = vsel %vm916, %v945, %v464
  %v949 = vsel %vm465, %v947, 0
  %951 = vmatprep.subr.mxu0 0.0
  %952 = vmatpush1.msra.mxu0 0.0
  %953 = vmatprep.subr.mxu0 0.0
  %954 = vmatpush1.msra.mxu0 0.0
  %955 = vmatprep.subr.mxu0 0.0
  %956 = vmatpush1.msra.mxu0 0.0
  %957 = vmatprep.subr.mxu0 0.0
  %958 = vmatpush1.msra.mxu0 0.0
  %959 = vmatprep.subr.mxu0 0.0
  %960 = vmatpush1.msra.mxu0 0.0
  %961 = vmatprep.subr.mxu0 0.0
  %962 = vmatpush1.msra.mxu0 0.0
  %963 = vmatprep.subr.mxu0 0.0
  %964 = vmatpush1.msra.mxu0 0.0
  %965 = vmatprep.subr.mxu0 0.0
  %966 = vmatpush1.msra.mxu0 0.0
  %967 = vmatprep.subr.mxu0 0.0
  %968 = vmatpush1.msra.mxu0 0.0
  %969 = vmatprep.subr.mxu0 0.0
  %970 = vmatpush1.msra.mxu0 0.0
  %971 = vmatprep.subr.mxu0 0.0
  %972 = vmatpush1.msra.mxu0 0.0
  %973 = vmatprep.subr.mxu0 0.0
  %974 = vmatpush1.msra.mxu0 0.0
  %975 = vmatprep.subr.mxu0 0.0
  %976 = vmatpush1.msra.mxu0 %v446
  %977 = vmatprep.subr.mxu0 0.0
  %978 = vmatpush1.msra.mxu0 %v445
  %979 = vmatprep.subr.mxu0 0.0
  %980 = vmatpush1.msra.mxu0 %v444
  %981 = vmatprep.subr.mxu0 0.0
  %982 = vmatpush1.msra.mxu0 %v443
  %983 = vmatprep.subr.mxu0 0.0
  %984 = vmatpush2.msra.mxu0 0.0
  %985 = vmatprep.subr.mxu0 0.0
  %986 = vmatpush2.msra.mxu0 0.0
  %987 = vmatprep.subr.mxu0 0.0
  %988 = vmatpush2.msra.mxu0 0.0
  %989 = vmatprep.subr.mxu0 0.0
  %990 = vmatpush2.msra.mxu0 0.0
  %991 = vmatprep.subr.mxu0 0.0
  %992 = vmatpush2.msra.mxu0 0.0
  %993 = vmatprep.subr.mxu0 0.0
  %994 = vmatpush2.msra.mxu0 0.0
  %995 = vmatprep.subr.mxu0 0.0
  %996 = vmatpush2.msra.mxu0 0.0
  %997 = vmatprep.subr.mxu0 0.0
  %998 = vmatpush2.msra.mxu0 0.0
  %999 = vmatprep.subr.mxu0 0.0
  %1000 = vmatpush2.msra.mxu0 0.0
  %1001 = vmatprep.subr.mxu0 0.0
  %1002 = vmatpush2.msra.mxu0 0.0
  %1003 = vmatprep.subr.mxu0 0.0
  %1004 = vmatpush2.msra.mxu0 0.0
  %1005 = vmatprep.subr.mxu0 0.0
  %1006 = vmatpush2.msra.mxu0 0.0
  %1007 = vmatprep.subr.mxu0 0.0
  %1008 = vmatpush2.msra.mxu0 0.0
  %1009 = vmatprep.subr.mxu0 0.0
  %1010 = vmatpush2.msra.mxu0 0.0
  %1011 = vmatprep.subr.mxu0 0.0
  %1012 = vmatpush2.msra.mxu0 0.0
  %1013 = vmatprep.subr.mxu0 0.0
  %1014 = vmatpush2.msra.mxu0 0.0
  %1015 = vmatprep.mubr.f32.mxu0 0.0
  %1016 = vmatmul.mubr.f32.gmra.mxu0 %v949
  %v1017 = vpop.f32.mrf.mxu0
  %v1018 = vadd.f32 0.0, %v1017
  %v1019 = vpop.f32.mrf.mxu0
  %1020 = vdwg.mxu0
  %1021 = vmatprep.subr.mxu0 0.0
  %1022 = vmatpush1.msra.mxu0 0.0
  %1023 = vmatprep.subr.mxu0 0.0
  %1024 = vmatpush1.msra.mxu0 0.0
  %1025 = vmatprep.subr.mxu0 0.0
  %1026 = vmatpush1.msra.mxu0 0.0
  %1027 = vmatprep.subr.mxu0 0.0
  %1028 = vmatpush1.msra.mxu0 0.0
  %1029 = vmatprep.subr.mxu0 0.0
  %1030 = vmatpush1.msra.mxu0 0.0
  %1031 = vmatprep.subr.mxu0 0.0
  %1032 = vmatpush1.msra.mxu0 0.0
  %1033 = vmatprep.subr.mxu0 0.0
  %1034 = vmatpush1.msra.mxu0 0.0
  %1035 = vmatprep.subr.mxu0 0.0
  %1036 = vmatpush1.msra.mxu0 0.0
  %1037 = vmatprep.subr.mxu0 0.0
  %1038 = vmatpush1.msra.mxu0 0.0
  %1039 = vmatprep.subr.mxu0 0.0
  %1040 = vmatpush1.msra.mxu0 0.0
  %1041 = vmatprep.subr.mxu0 0.0
  %1042 = vmatpush1.msra.mxu0 0.0
  %1043 = vmatprep.subr.mxu0 0.0
  %1044 = vmatpush1.msra.mxu0 0.0
  %1045 = vmatprep.subr.mxu0 0.0
  %1046 = vmatpush1.msra.mxu0 %v450
  %1047 = vmatprep.subr.mxu0 0.0
  %1048 = vmatpush1.msra.mxu0 %v449
  %1049 = vmatprep.subr.mxu0 0.0
  %1050 = vmatpush1.msra.mxu0 %v448
  %1051 = vmatprep.subr.mxu0 0.0
  %1052 = vmatpush1.msra.mxu0 %v447
  %1053 = vmatprep.subr.mxu0 0.0
  %1054 = vmatpush2.msra.mxu0 0.0
  %1055 = vmatprep.subr.mxu0 0.0
  %1056 = vmatpush2.msra.mxu0 0.0
  %1057 = vmatprep.subr.mxu0 0.0
  %1058 = vmatpush2.msra.mxu0 0.0
  %1059 = vmatprep.subr.mxu0 0.0
  %1060 = vmatpush2.msra.mxu0 0.0
  %1061 = vmatprep.subr.mxu0 0.0
  %1062 = vmatpush2.msra.mxu0 0.0
  %1063 = vmatprep.subr.mxu0 0.0
  %1064 = vmatpush2.msra.mxu0 0.0
  %1065 = vmatprep.subr.mxu0 0.0
  %1066 = vmatpush2.msra.mxu0 0.0
  %1067 = vmatprep.subr.mxu0 0.0
  %1068 = vmatpush2.msra.mxu0 0.0
  %1069 = vmatprep.subr.mxu0 0.0
  %1070 = vmatpush2.msra.mxu0 0.0
  %1071 = vmatprep.subr.mxu0 0.0
  %1072 = vmatpush2.msra.mxu0 0.0
  %1073 = vmatprep.subr.mxu0 0.0
  %1074 = vmatpush2.msra.mxu0 0.0
  %1075 = vmatprep.subr.mxu0 0.0
  %1076 = vmatpush2.msra.mxu0 0.0
  %1077 = vmatprep.subr.mxu0 0.0
  %1078 = vmatpush2.msra.mxu0 0.0
  %1079 = vmatprep.subr.mxu0 0.0
  %1080 = vmatpush2.msra.mxu0 0.0
  %1081 = vmatprep.subr.mxu0 0.0
  %1082 = vmatpush2.msra.mxu0 0.0
  %1083 = vmatprep.subr.mxu0 0.0
  %1084 = vmatpush2.msra.mxu0 0.0
  %1085 = vmatprep.mubr.f32.mxu0 0.0
  %1086 = vmatmul.mubr.f32.gmra.mxu0 %v949
  %v1087 = vpop.f32.mrf.mxu0
  %v1088 = vadd.f32 0.0, %v1087
  %v1089 = vpop.f32.mrf.mxu0
  %1090 = vdwg.mxu0
  %1091 = vmatprep.subr.mxu0 0.0
  %1092 = vmatpush1.msra.mxu0 0.0
  %1093 = vmatprep.subr.mxu0 0.0
  %1094 = vmatpush1.msra.mxu0 0.0
  %1095 = vmatprep.subr.mxu0 0.0
  %1096 = vmatpush1.msra.mxu0 0.0
  %1097 = vmatprep.subr.mxu0 0.0
  %1098 = vmatpush1.msra.mxu0 0.0
  %1099 = vmatprep.subr.mxu0 0.0
  %1100 = vmatpush1.msra.mxu0 0.0
  %1101 = vmatprep.subr.mxu0 0.0
  %1102 = vmatpush1.msra.mxu0 0.0
  %1103 = vmatprep.subr.mxu0 0.0
  %1104 = vmatpush1.msra.mxu0 0.0
  %1105 = vmatprep.subr.mxu0 0.0
  %1106 = vmatpush1.msra.mxu0 0.0
  %1107 = vmatprep.subr.mxu0 0.0
  %1108 = vmatpush1.msra.mxu0 0.0
  %1109 = vmatprep.subr.mxu0 0.0
  %1110 = vmatpush1.msra.mxu0 0.0
  %1111 = vmatprep.subr.mxu0 0.0
  %1112 = vmatpush1.msra.mxu0 0.0
  %1113 = vmatprep.subr.mxu0 0.0
  %1114 = vmatpush1.msra.mxu0 0.0
  %1115 = vmatprep.subr.mxu0 0.0
  %1116 = vmatpush1.msra.mxu0 %v454
  %1117 = vmatprep.subr.mxu0 0.0
  %1118 = vmatpush1.msra.mxu0 %v453
  %1119 = vmatprep.subr.mxu0 0.0
  %1120 = vmatpush1.msra.mxu0 %v452
  %1121 = vmatprep.subr.mxu0 0.0
  %1122 = vmatpush1.msra.mxu0 %v451
  %1123 = vmatprep.subr.mxu0 0.0
  %1124 = vmatpush2.msra.mxu0 0.0
  %1125 = vmatprep.subr.mxu0 0.0
  %1126 = vmatpush2.msra.mxu0 0.0
  %1127 = vmatprep.subr.mxu0 0.0
  %1128 = vmatpush2.msra.mxu0 0.0
  %1129 = vmatprep.subr.mxu0 0.0
  %1130 = vmatpush2.msra.mxu0 0.0
  %1131 = vmatprep.subr.mxu0 0.0
  %1132 = vmatpush2.msra.mxu0 0.0
  %1133 = vmatprep.subr.mxu0 0.0
  %1134 = vmatpush2.msra.mxu0 0.0
  %1135 = vmatprep.subr.mxu0 0.0
  %1136 = vmatpush2.msra.mxu0 0.0
  %1137 = vmatprep.subr.mxu0 0.0
  %1138 = vmatpush2.msra.mxu0 0.0
  %1139 = vmatprep.subr.mxu0 0.0
  %1140 = vmatpush2.msra.mxu0 0.0
  %1141 = vmatprep.subr.mxu0 0.0
  %1142 = vmatpush2.msra.mxu0 0.0
  %1143 = vmatprep.subr.mxu0 0.0
  %1144 = vmatpush2.msra.mxu0 0.0
  %1145 = vmatprep.subr.mxu0 0.0
  %1146 = vmatpush2.msra.mxu0 0.0
  %1147 = vmatprep.subr.mxu0 0.0
  %1148 = vmatpush2.msra.mxu0 0.0
  %1149 = vmatprep.subr.mxu0 0.0
  %1150 = vmatpush2.msra.mxu0 0.0
  %1151 = vmatprep.subr.mxu0 0.0
  %1152 = vmatpush2.msra.mxu0 0.0
  %1153 = vmatprep.subr.mxu0 0.0
  %1154 = vmatpush2.msra.mxu0 0.0
  %1155 = vmatprep.mubr.f32.mxu0 0.0
  %1156 = vmatmul.mubr.f32.gmra.mxu0 %v949
  %v1157 = vpop.f32.mrf.mxu0
  %v1158 = vadd.f32 %v460, %v1157
  %v1159 = vpop.f32.mrf.mxu0
  %1160 = vdwg.mxu0
  %v1162 = vrot.slane %v1018, 7
  %v1163 = vrot.slane %v1018, 1
  %v1164 = vrot.slane %v1018, 2
  %v1165 = vrot.slane %v1018, 3
  %v1166 = vrot.slane %v1018, 4
  %v1167 = vrot.slane %v1018, 5
  %v1168 = vrot.slane %v1018, 6
  %v1177 = vadd.f32 %v173, %v1162
  %v1178 = vadd.f32 %v178, %v1018
  %v1179 = vadd.f32 %v183, %v1163
  %v1180 = vadd.f32 %v188, %v1164
  %v1181 = vadd.f32 %v193, %v1165
  %v1182 = vadd.f32 %v198, %v1166
  %v1183 = vadd.f32 %v203, %v1167
  %v1184 = vadd.f32 %v208, %v1168
  %v1185 = vxor.u32 %v1177, 2147483648
  %v1186 = vxor.u32 %v1178, 2147483648
  %v1187 = vxor.u32 %v1179, 2147483648
  %v1188 = vxor.u32 %v1180, 2147483648
  %v1189 = vxor.u32 %v1181, 2147483648
  %v1190 = vxor.u32 %v1182, 2147483648
  %v1191 = vxor.u32 %v1183, 2147483648
  %v1192 = vxor.u32 %v1184, 2147483648
  %v1193 = vmul.f32 %v1185, 1.442695
  %v1194 = vpow.pop %v1193
  %v1195 = vmul.f32 %v1186, 1.442695
  %v1196 = vpow.pop %v1195
  %v1197 = vmul.f32 %v1187, 1.442695
  %v1198 = vpow.pop %v1197
  %v1199 = vmul.f32 %v1188, 1.442695
  %v1200 = vpow.pop %v1199
  %v1201 = vmul.f32 %v1189, 1.442695
  %v1202 = vpow.pop %v1201
  %v1203 = vmul.f32 %v1190, 1.442695
  %v1204 = vpow.pop %v1203
  %v1205 = vmul.f32 %v1191, 1.442695
  %v1206 = vpow.pop %v1205
  %v1207 = vmul.f32 %v1192, 1.442695
  %v1208 = vpow.pop %v1207
  %v1209 = vadd.f32 %v1194, 1.0
  %v1210 = vadd.f32 %v1196, 1.0
  %v1211 = vadd.f32 %v1198, 1.0
  %v1212 = vadd.f32 %v1200, 1.0
  %v1213 = vadd.f32 %v1202, 1.0
  %v1214 = vadd.f32 %v1204, 1.0
  %v1215 = vadd.f32 %v1206, 1.0
  %v1216 = vadd.f32 %v1208, 1.0
  %v1217 = vrcp.pop %v1209
  %v1218 = vmul.f32 1.0, %v1217
  %v1219 = vrcp.pop %v1210
  %v1220 = vmul.f32 1.0, %v1219
  %v1221 = vrcp.pop %v1211
  %v1222 = vmul.f32 1.0, %v1221
  %v1223 = vrcp.pop %v1212
  %v1224 = vmul.f32 1.0, %v1223
  %v1225 = vrcp.pop %v1213
  %v1226 = vmul.f32 1.0, %v1225
  %v1227 = vrcp.pop %v1214
  %v1228 = vmul.f32 1.0, %v1227
  %v1229 = vrcp.pop %v1215
  %v1230 = vmul.f32 1.0, %v1229
  %v1231 = vrcp.pop %v1216
  %v1232 = vmul.f32 1.0, %v1231
  %v1234 = vrot.slane %v1088, 7
  %v1235 = vrot.slane %v1088, 1
  %v1236 = vrot.slane %v1088, 2
  %v1237 = vrot.slane %v1088, 3
  %v1238 = vrot.slane %v1088, 4
  %v1239 = vrot.slane %v1088, 5
  %v1240 = vrot.slane %v1088, 6
  %v1249 = vadd.f32 %v289, %v1234
  %v1250 = vadd.f32 %v294, %v1088
  %v1251 = vadd.f32 %v299, %v1235
  %v1252 = vadd.f32 %v304, %v1236
  %v1253 = vadd.f32 %v309, %v1237
  %v1254 = vadd.f32 %v314, %v1238
  %v1255 = vadd.f32 %v319, %v1239
  %v1256 = vadd.f32 %v324, %v1240
  %v1257 = vxor.u32 %v1249, 2147483648
  %v1258 = vxor.u32 %v1250, 2147483648
  %v1259 = vxor.u32 %v1251, 2147483648
  %v1260 = vxor.u32 %v1252, 2147483648
  %v1261 = vxor.u32 %v1253, 2147483648
  %v1262 = vxor.u32 %v1254, 2147483648
  %v1263 = vxor.u32 %v1255, 2147483648
  %v1264 = vxor.u32 %v1256, 2147483648
  %v1265 = vmul.f32 %v1257, 1.442695
  %v1266 = vpow.pop %v1265
  %v1267 = vmul.f32 %v1258, 1.442695
  %v1268 = vpow.pop %v1267
  %v1269 = vmul.f32 %v1259, 1.442695
  %v1270 = vpow.pop %v1269
  %v1271 = vmul.f32 %v1260, 1.442695
  %v1272 = vpow.pop %v1271
  %v1273 = vmul.f32 %v1261, 1.442695
  %v1274 = vpow.pop %v1273
  %v1275 = vmul.f32 %v1262, 1.442695
  %v1276 = vpow.pop %v1275
  %v1277 = vmul.f32 %v1263, 1.442695
  %v1278 = vpow.pop %v1277
  %v1279 = vmul.f32 %v1264, 1.442695
  %v1280 = vpow.pop %v1279
  %v1281 = vadd.f32 %v1266, 1.0
  %v1282 = vadd.f32 %v1268, 1.0
  %v1283 = vadd.f32 %v1270, 1.0
  %v1284 = vadd.f32 %v1272, 1.0
  %v1285 = vadd.f32 %v1274, 1.0
  %v1286 = vadd.f32 %v1276, 1.0
  %v1287 = vadd.f32 %v1278, 1.0
  %v1288 = vadd.f32 %v1280, 1.0
  %v1289 = vrcp.pop %v1281
  %v1290 = vmul.f32 1.0, %v1289
  %v1291 = vrcp.pop %v1282
  %v1292 = vmul.f32 1.0, %v1291
  %v1293 = vrcp.pop %v1283
  %v1294 = vmul.f32 1.0, %v1293
  %v1295 = vrcp.pop %v1284
  %v1296 = vmul.f32 1.0, %v1295
  %v1297 = vrcp.pop %v1285
  %v1298 = vmul.f32 1.0, %v1297
  %v1299 = vrcp.pop %v1286
  %v1300 = vmul.f32 1.0, %v1299
  %v1301 = vrcp.pop %v1287
  %v1302 = vmul.f32 1.0, %v1301
  %v1303 = vrcp.pop %v1288
  %v1304 = vmul.f32 1.0, %v1303
  %v1306 = vrot.slane %v1158, 7
  %v1307 = vrot.slane %v1158, 1
  %v1308 = vrot.slane %v1158, 2
  %v1309 = vrot.slane %v1158, 3
  %v1310 = vrot.slane %v1158, 4
  %v1311 = vrot.slane %v1158, 5
  %v1312 = vrot.slane %v1158, 6
  %v1321 = vmul.f32 %v1218, %v1306
  %v1322 = vmul.f32 %v1220, %v1158
  %v1323 = vmul.f32 %v1222, %v1307
  %v1324 = vmul.f32 %v1224, %v1308
  %v1325 = vmul.f32 %v1226, %v1309
  %v1326 = vmul.f32 %v1228, %v1310
  %v1327 = vmul.f32 %v1230, %v1311
  %v1328 = vmul.f32 %v1232, %v1312
  %v1329 = vadd.f32 %v405, %v1321
  %v1330 = vadd.f32 %v410, %v1322
  %v1331 = vadd.f32 %v415, %v1323
  %v1332 = vadd.f32 %v420, %v1324
  %v1333 = vadd.f32 %v425, %v1325
  %v1334 = vadd.f32 %v430, %v1326
  %v1335 = vadd.f32 %v435, %v1327
  %v1336 = vadd.f32 %v440, %v1328
  %v1337 = vtanh.pop %v1329
  %v1338 = vtanh.pop %v1330
  %v1339 = vtanh.pop %v1331
  %v1340 = vtanh.pop %v1332
  %v1341 = vtanh.pop %v1333
  %v1342 = vtanh.pop %v1334
  %v1343 = vtanh.pop %v1335
  %v1344 = vtanh.pop %v1336
  %v1345 = vsub.f32 1.0, %v1290
  %v1346 = vsub.f32 1.0, %v1292
  %v1347 = vsub.f32 1.0, %v1294
  %v1348 = vsub.f32 1.0, %v1296
  %v1349 = vsub.f32 1.0, %v1298
  %v1350 = vsub.f32 1.0, %v1300
  %v1351 = vsub.f32 1.0, %v1302
  %v1352 = vsub.f32 1.0, %v1304
  %v1353 = vmul.f32 %v1345, %v1337
  %v1354 = vmul.f32 %v1346, %v1338
  %v1355 = vmul.f32 %v1347, %v1339
  %v1356 = vmul.f32 %v1348, %v1340
  %v1357 = vmul.f32 %v1349, %v1341
  %v1358 = vmul.f32 %v1350, %v1342
  %v1359 = vmul.f32 %v1351, %v1343
  %v1360 = vmul.f32 %v1352, %v1344
  %v1361 = vrot.slane %v947, 7
  %v1362 = vrot.slane %v947, 1
  %v1363 = vrot.slane %v947, 2
  %v1364 = vrot.slane %v947, 3
  %v1365 = vrot.slane %v947, 4
  %v1366 = vrot.slane %v947, 5
  %v1367 = vrot.slane %v947, 6
  %v1376 = vmul.f32 %v1290, %v1361
  %v1377 = vmul.f32 %v1292, %v947
  %v1378 = vmul.f32 %v1294, %v1362
  %v1379 = vmul.f32 %v1296, %v1363
  %v1380 = vmul.f32 %v1298, %v1364
  %v1381 = vmul.f32 %v1300, %v1365
  %v1382 = vmul.f32 %v1302, %v1366
  %v1383 = vmul.f32 %v1304, %v1367
  %v1384 = vadd.f32 %v1353, %v1376
  %v1385 = vadd.f32 %v1354, %v1377
  %v1386 = vadd.f32 %v1355, %v1378
  %v1387 = vadd.f32 %v1356, %v1379
  %v1388 = vadd.f32 %v1357, %v1380
  %v1389 = vadd.f32 %v1358, %v1381
  %v1390 = vadd.f32 %v1359, %v1382
  %v1391 = vadd.f32 %v1360, %v1383
  %s1392 = sadd.s32 %s463, 1
  %v1393 = vstv %s1392
  %vm1394 = vcmp.lt.s32.totalorder %v1393, %v462
  %v1395 = vsel %vm1394, 1, 0
  %1396 = vset.pattern.permute.xlu0 0
  %1397 = vperm.xlu0 %1396, %v1395
  %v1398 = vpop.permute.xlu0 %1397
  %vm1399 = vcmp.eq.s32.totalorder %v1398, 1
  %v1408 = vrot.slane %v1384, 1
  %v1409 = vsel %vm926, %v1385, %v1408
  %v1410 = vrot.slane %v1386, 7
  %v1411 = vsel %vm929, %v1410, %v1409
  %v1412 = vrot.slane %v1387, 6
  %v1413 = vsel %vm932, %v1412, %v1411
  %v1414 = vrot.slane %v1388, 5
  %v1415 = vsel %vm935, %v1414, %v1413
  %v1416 = vrot.slane %v1389, 4
  %v1417 = vsel %vm938, %v1416, %v1415
  %v1418 = vrot.slane %v1390, 3
  %v1419 = vsel %vm941, %v1418, %v1417
  %v1420 = vrot.slane %v1391, 2
  %v1421 = vsel %vm944, %v1420, %v1419
  %v1423 = vsel %vm1399, %v1421, %v947
  %v1425 = vsel %vm465, %v1423, 0
  %1427 = vmatprep.subr.mxu0 0.0
  %1428 = vmatpush1.msra.mxu0 0.0
  %1429 = vmatprep.subr.mxu0 0.0
  %1430 = vmatpush1.msra.mxu0 0.0
  %1431 = vmatprep.subr.mxu0 0.0
  %1432 = vmatpush1.msra.mxu0 0.0
  %1433 = vmatprep.subr.mxu0 0.0
  %1434 = vmatpush1.msra.mxu0 0.0
  %1435 = vmatprep.subr.mxu0 0.0
  %1436 = vmatpush1.msra.mxu0 0.0
  %1437 = vmatprep.subr.mxu0 0.0
  %1438 = vmatpush1.msra.mxu0 0.0
  %1439 = vmatprep.subr.mxu0 0.0
  %1440 = vmatpush1.msra.mxu0 0.0
  %1441 = vmatprep.subr.mxu0 0.0
  %1442 = vmatpush1.msra.mxu0 0.0
  %1443 = vmatprep.subr.mxu0 0.0
  %1444 = vmatpush1.msra.mxu0 0.0
  %1445 = vmatprep.subr.mxu0 0.0
  %1446 = vmatpush1.msra.mxu0 0.0
  %1447 = vmatprep.subr.mxu0 0.0
  %1448 = vmatpush1.msra.mxu0 0.0
  %1449 = vmatprep.subr.mxu0 0.0
  %1450 = vmatpush1.msra.mxu0 0.0
  %1451 = vmatprep.subr.mxu0 0.0
  %1452 = vmatpush1.msra.mxu0 %v446
  %1453 = vmatprep.subr.mxu0 0.0
  %1454 = vmatpush1.msra.mxu0 %v445
  %1455 = vmatprep.subr.mxu0 0.0
  %1456 = vmatpush1.msra.mxu0 %v444
  %1457 = vmatprep.subr.mxu0 0.0
  %1458 = vmatpush1.msra.mxu0 %v443
  %1459 = vmatprep.subr.mxu0 0.0
  %1460 = vmatpush2.msra.mxu0 0.0
  %1461 = vmatprep.subr.mxu0 0.0
  %1462 = vmatpush2.msra.mxu0 0.0
  %1463 = vmatprep.subr.mxu0 0.0
  %1464 = vmatpush2.msra.mxu0 0.0
  %1465 = vmatprep.subr.mxu0 0.0
  %1466 = vmatpush2.msra.mxu0 0.0
  %1467 = vmatprep.subr.mxu0 0.0
  %1468 = vmatpush2.msra.mxu0 0.0
  %1469 = vmatprep.subr.mxu0 0.0
  %1470 = vmatpush2.msra.mxu0 0.0
  %1471 = vmatprep.subr.mxu0 0.0
  %1472 = vmatpush2.msra.mxu0 0.0
  %1473 = vmatprep.subr.mxu0 0.0
  %1474 = vmatpush2.msra.mxu0 0.0
  %1475 = vmatprep.subr.mxu0 0.0
  %1476 = vmatpush2.msra.mxu0 0.0
  %1477 = vmatprep.subr.mxu0 0.0
  %1478 = vmatpush2.msra.mxu0 0.0
  %1479 = vmatprep.subr.mxu0 0.0
  %1480 = vmatpush2.msra.mxu0 0.0
  %1481 = vmatprep.subr.mxu0 0.0
  %1482 = vmatpush2.msra.mxu0 0.0
  %1483 = vmatprep.subr.mxu0 0.0
  %1484 = vmatpush2.msra.mxu0 0.0
  %1485 = vmatprep.subr.mxu0 0.0
  %1486 = vmatpush2.msra.mxu0 0.0
  %1487 = vmatprep.subr.mxu0 0.0
  %1488 = vmatpush2.msra.mxu0 0.0
  %1489 = vmatprep.subr.mxu0 0.0
  %1490 = vmatpush2.msra.mxu0 0.0
  %1491 = vmatprep.mubr.f32.mxu0 0.0
  %1492 = vmatmul.mubr.f32.gmra.mxu0 %v1425
  %v1493 = vpop.f32.mrf.mxu0
  %v1494 = vadd.f32 0.0, %v1493
  %v1495 = vpop.f32.mrf.mxu0
  %1496 = vdwg.mxu0
  %1497 = vmatprep.subr.mxu0 0.0
  %1498 = vmatpush1.msra.mxu0 0.0
  %1499 = vmatprep.subr.mxu0 0.0
  %1500 = vmatpush1.msra.mxu0 0.0
  %1501 = vmatprep.subr.mxu0 0.0
  %1502 = vmatpush1.msra.mxu0 0.0
  %1503 = vmatprep.subr.mxu0 0.0
  %1504 = vmatpush1.msra.mxu0 0.0
  %1505 = vmatprep.subr.mxu0 0.0
  %1506 = vmatpush1.msra.mxu0 0.0
  %1507 = vmatprep.subr.mxu0 0.0
  %1508 = vmatpush1.msra.mxu0 0.0
  %1509 = vmatprep.subr.mxu0 0.0
  %1510 = vmatpush1.msra.mxu0 0.0
  %1511 = vmatprep.subr.mxu0 0.0
  %1512 = vmatpush1.msra.mxu0 0.0
  %1513 = vmatprep.subr.mxu0 0.0
  %1514 = vmatpush1.msra.mxu0 0.0
  %1515 = vmatprep.subr.mxu0 0.0
  %1516 = vmatpush1.msra.mxu0 0.0
  %1517 = vmatprep.subr.mxu0 0.0
  %1518 = vmatpush1.msra.mxu0 0.0
  %1519 = vmatprep.subr.mxu0 0.0
  %1520 = vmatpush1.msra.mxu0 0.0
  %1521 = vmatprep.subr.mxu0 0.0
  %1522 = vmatpush1.msra.mxu0 %v450
  %1523 = vmatprep.subr.mxu0 0.0
  %1524 = vmatpush1.msra.mxu0 %v449
  %1525 = vmatprep.subr.mxu0 0.0
  %1526 = vmatpush1.msra.mxu0 %v448
  %1527 = vmatprep.subr.mxu0 0.0
  %1528 = vmatpush1.msra.mxu0 %v447
  %1529 = vmatprep.subr.mxu0 0.0
  %1530 = vmatpush2.msra.mxu0 0.0
  %1531 = vmatprep.subr.mxu0 0.0
  %1532 = vmatpush2.msra.mxu0 0.0
  %1533 = vmatprep.subr.mxu0 0.0
  %1534 = vmatpush2.msra.mxu0 0.0
  %1535 = vmatprep.subr.mxu0 0.0
  %1536 = vmatpush2.msra.mxu0 0.0
  %1537 = vmatprep.subr.mxu0 0.0
  %1538 = vmatpush2.msra.mxu0 0.0
  %1539 = vmatprep.subr.mxu0 0.0
  %1540 = vmatpush2.msra.mxu0 0.0
  %1541 = vmatprep.subr.mxu0 0.0
  %1542 = vmatpush2.msra.mxu0 0.0
  %1543 = vmatprep.subr.mxu0 0.0
  %1544 = vmatpush2.msra.mxu0 0.0
  %1545 = vmatprep.subr.mxu0 0.0
  %1546 = vmatpush2.msra.mxu0 0.0
  %1547 = vmatprep.subr.mxu0 0.0
  %1548 = vmatpush2.msra.mxu0 0.0
  %1549 = vmatprep.subr.mxu0 0.0
  %1550 = vmatpush2.msra.mxu0 0.0
  %1551 = vmatprep.subr.mxu0 0.0
  %1552 = vmatpush2.msra.mxu0 0.0
  %1553 = vmatprep.subr.mxu0 0.0
  %1554 = vmatpush2.msra.mxu0 0.0
  %1555 = vmatprep.subr.mxu0 0.0
  %1556 = vmatpush2.msra.mxu0 0.0
  %1557 = vmatprep.subr.mxu0 0.0
  %1558 = vmatpush2.msra.mxu0 0.0
  %1559 = vmatprep.subr.mxu0 0.0
  %1560 = vmatpush2.msra.mxu0 0.0
  %1561 = vmatprep.mubr.f32.mxu0 0.0
  %1562 = vmatmul.mubr.f32.gmra.mxu0 %v1425
  %v1563 = vpop.f32.mrf.mxu0
  %v1564 = vadd.f32 0.0, %v1563
  %v1565 = vpop.f32.mrf.mxu0
  %1566 = vdwg.mxu0
  %1567 = vmatprep.subr.mxu0 0.0
  %1568 = vmatpush1.msra.mxu0 0.0
  %1569 = vmatprep.subr.mxu0 0.0
  %1570 = vmatpush1.msra.mxu0 0.0
  %1571 = vmatprep.subr.mxu0 0.0
  %1572 = vmatpush1.msra.mxu0 0.0
  %1573 = vmatprep.subr.mxu0 0.0
  %1574 = vmatpush1.msra.mxu0 0.0
  %1575 = vmatprep.subr.mxu0 0.0
  %1576 = vmatpush1.msra.mxu0 0.0
  %1577 = vmatprep.subr.mxu0 0.0
  %1578 = vmatpush1.msra.mxu0 0.0
  %1579 = vmatprep.subr.mxu0 0.0
  %1580 = vmatpush1.msra.mxu0 0.0
  %1581 = vmatprep.subr.mxu0 0.0
  %1582 = vmatpush1.msra.mxu0 0.0
  %1583 = vmatprep.subr.mxu0 0.0
  %1584 = vmatpush1.msra.mxu0 0.0
  %1585 = vmatprep.subr.mxu0 0.0
  %1586 = vmatpush1.msra.mxu0 0.0
  %1587 = vmatprep.subr.mxu0 0.0
  %1588 = vmatpush1.msra.mxu0 0.0
  %1589 = vmatprep.subr.mxu0 0.0
  %1590 = vmatpush1.msra.mxu0 0.0
  %1591 = vmatprep.subr.mxu0 0.0
  %1592 = vmatpush1.msra.mxu0 %v454
  %1593 = vmatprep.subr.mxu0 0.0
  %1594 = vmatpush1.msra.mxu0 %v453
  %1595 = vmatprep.subr.mxu0 0.0
  %1596 = vmatpush1.msra.mxu0 %v452
  %1597 = vmatprep.subr.mxu0 0.0
  %1598 = vmatpush1.msra.mxu0 %v451
  %1599 = vmatprep.subr.mxu0 0.0
  %1600 = vmatpush2.msra.mxu0 0.0
  %1601 = vmatprep.subr.mxu0 0.0
  %1602 = vmatpush2.msra.mxu0 0.0
  %1603 = vmatprep.subr.mxu0 0.0
  %1604 = vmatpush2.msra.mxu0 0.0
  %1605 = vmatprep.subr.mxu0 0.0
  %1606 = vmatpush2.msra.mxu0 0.0
  %1607 = vmatprep.subr.mxu0 0.0
  %1608 = vmatpush2.msra.mxu0 0.0
  %1609 = vmatprep.subr.mxu0 0.0
  %1610 = vmatpush2.msra.mxu0 0.0
  %1611 = vmatprep.subr.mxu0 0.0
  %1612 = vmatpush2.msra.mxu0 0.0
  %1613 = vmatprep.subr.mxu0 0.0
  %1614 = vmatpush2.msra.mxu0 0.0
  %1615 = vmatprep.subr.mxu0 0.0
  %1616 = vmatpush2.msra.mxu0 0.0
  %1617 = vmatprep.subr.mxu0 0.0
  %1618 = vmatpush2.msra.mxu0 0.0
  %1619 = vmatprep.subr.mxu0 0.0
  %1620 = vmatpush2.msra.mxu0 0.0
  %1621 = vmatprep.subr.mxu0 0.0
  %1622 = vmatpush2.msra.mxu0 0.0
  %1623 = vmatprep.subr.mxu0 0.0
  %1624 = vmatpush2.msra.mxu0 0.0
  %1625 = vmatprep.subr.mxu0 0.0
  %1626 = vmatpush2.msra.mxu0 0.0
  %1627 = vmatprep.subr.mxu0 0.0
  %1628 = vmatpush2.msra.mxu0 0.0
  %1629 = vmatprep.subr.mxu0 0.0
  %1630 = vmatpush2.msra.mxu0 0.0
  %1631 = vmatprep.mubr.f32.mxu0 0.0
  %1632 = vmatmul.mubr.f32.gmra.mxu0 %v1425
  %v1633 = vpop.f32.mrf.mxu0
  %v1634 = vadd.f32 %v460, %v1633
  %v1635 = vpop.f32.mrf.mxu0
  %1636 = vdwg.mxu0
  %v1638 = vrot.slane %v1494, 6
  %v1639 = vrot.slane %v1494, 7
  %v1640 = vrot.slane %v1494, 1
  %v1641 = vrot.slane %v1494, 2
  %v1642 = vrot.slane %v1494, 3
  %v1643 = vrot.slane %v1494, 4
  %v1644 = vrot.slane %v1494, 5
  %v1653 = vadd.f32 %v173, %v1638
  %v1654 = vadd.f32 %v178, %v1639
  %v1655 = vadd.f32 %v183, %v1494
  %v1656 = vadd.f32 %v188, %v1640
  %v1657 = vadd.f32 %v193, %v1641
  %v1658 = vadd.f32 %v198, %v1642
  %v1659 = vadd.f32 %v203, %v1643
  %v1660 = vadd.f32 %v208, %v1644
  %v1661 = vxor.u32 %v1653, 2147483648
  %v1662 = vxor.u32 %v1654, 2147483648
  %v1663 = vxor.u32 %v1655, 2147483648
  %v1664 = vxor.u32 %v1656, 2147483648
  %v1665 = vxor.u32 %v1657, 2147483648
  %v1666 = vxor.u32 %v1658, 2147483648
  %v1667 = vxor.u32 %v1659, 2147483648
  %v1668 = vxor.u32 %v1660, 2147483648
  %v1669 = vmul.f32 %v1661, 1.442695
  %v1670 = vpow.pop %v1669
  %v1671 = vmul.f32 %v1662, 1.442695
  %v1672 = vpow.pop %v1671
  %v1673 = vmul.f32 %v1663, 1.442695
  %v1674 = vpow.pop %v1673
  %v1675 = vmul.f32 %v1664, 1.442695
  %v1676 = vpow.pop %v1675
  %v1677 = vmul.f32 %v1665, 1.442695
  %v1678 = vpow.pop %v1677
  %v1679 = vmul.f32 %v1666, 1.442695
  %v1680 = vpow.pop %v1679
  %v1681 = vmul.f32 %v1667, 1.442695
  %v1682 = vpow.pop %v1681
  %v1683 = vmul.f32 %v1668, 1.442695
  %v1684 = vpow.pop %v1683
  %v1685 = vadd.f32 %v1670, 1.0
  %v1686 = vadd.f32 %v1672, 1.0
  %v1687 = vadd.f32 %v1674, 1.0
  %v1688 = vadd.f32 %v1676, 1.0
  %v1689 = vadd.f32 %v1678, 1.0
  %v1690 = vadd.f32 %v1680, 1.0
  %v1691 = vadd.f32 %v1682, 1.0
  %v1692 = vadd.f32 %v1684, 1.0
  %v1693 = vrcp.pop %v1685
  %v1694 = vmul.f32 1.0, %v1693
  %v1695 = vrcp.pop %v1686
  %v1696 = vmul.f32 1.0, %v1695
  %v1697 = vrcp.pop %v1687
  %v1698 = vmul.f32 1.0, %v1697
  %v1699 = vrcp.pop %v1688
  %v1700 = vmul.f32 1.0, %v1699
  %v1701 = vrcp.pop %v1689
  %v1702 = vmul.f32 1.0, %v1701
  %v1703 = vrcp.pop %v1690
  %v1704 = vmul.f32 1.0, %v1703
  %v1705 = vrcp.pop %v1691
  %v1706 = vmul.f32 1.0, %v1705
  %v1707 = vrcp.pop %v1692
  %v1708 = vmul.f32 1.0, %v1707
  %v1710 = vrot.slane %v1564, 6
  %v1711 = vrot.slane %v1564, 7
  %v1712 = vrot.slane %v1564, 1
  %v1713 = vrot.slane %v1564, 2
  %v1714 = vrot.slane %v1564, 3
  %v1715 = vrot.slane %v1564, 4
  %v1716 = vrot.slane %v1564, 5
  %v1725 = vadd.f32 %v289, %v1710
  %v1726 = vadd.f32 %v294, %v1711
  %v1727 = vadd.f32 %v299, %v1564
  %v1728 = vadd.f32 %v304, %v1712
  %v1729 = vadd.f32 %v309, %v1713
  %v1730 = vadd.f32 %v314, %v1714
  %v1731 = vadd.f32 %v319, %v1715
  %v1732 = vadd.f32 %v324, %v1716
  %v1733 = vxor.u32 %v1725, 2147483648
  %v1734 = vxor.u32 %v1726, 2147483648
  %v1735 = vxor.u32 %v1727, 2147483648
  %v1736 = vxor.u32 %v1728, 2147483648
  %v1737 = vxor.u32 %v1729, 2147483648
  %v1738 = vxor.u32 %v1730, 2147483648
  %v1739 = vxor.u32 %v1731, 2147483648
  %v1740 = vxor.u32 %v1732, 2147483648
  %v1741 = vmul.f32 %v1733, 1.442695
  %v1742 = vpow.pop %v1741
  %v1743 = vmul.f32 %v1734, 1.442695
  %v1744 = vpow.pop %v1743
  %v1745 = vmul.f32 %v1735, 1.442695
  %v1746 = vpow.pop %v1745
  %v1747 = vmul.f32 %v1736, 1.442695
  %v1748 = vpow.pop %v1747
  %v1749 = vmul.f32 %v1737, 1.442695
  %v1750 = vpow.pop %v1749
  %v1751 = vmul.f32 %v1738, 1.442695
  %v1752 = vpow.pop %v1751
  %v1753 = vmul.f32 %v1739, 1.442695
  %v1754 = vpow.pop %v1753
  %v1755 = vmul.f32 %v1740, 1.442695
  %v1756 = vpow.pop %v1755
  %v1757 = vadd.f32 %v1742, 1.0
  %v1758 = vadd.f32 %v1744, 1.0
  %v1759 = vadd.f32 %v1746, 1.0
  %v1760 = vadd.f32 %v1748, 1.0
  %v1761 = vadd.f32 %v1750, 1.0
  %v1762 = vadd.f32 %v1752, 1.0
  %v1763 = vadd.f32 %v1754, 1.0
  %v1764 = vadd.f32 %v1756, 1.0
  %v1765 = vrcp.pop %v1757
  %v1766 = vmul.f32 1.0, %v1765
  %v1767 = vrcp.pop %v1758
  %v1768 = vmul.f32 1.0, %v1767
  %v1769 = vrcp.pop %v1759
  %v1770 = vmul.f32 1.0, %v1769
  %v1771 = vrcp.pop %v1760
  %v1772 = vmul.f32 1.0, %v1771
  %v1773 = vrcp.pop %v1761
  %v1774 = vmul.f32 1.0, %v1773
  %v1775 = vrcp.pop %v1762
  %v1776 = vmul.f32 1.0, %v1775
  %v1777 = vrcp.pop %v1763
  %v1778 = vmul.f32 1.0, %v1777
  %v1779 = vrcp.pop %v1764
  %v1780 = vmul.f32 1.0, %v1779
  %v1782 = vrot.slane %v1634, 6
  %v1783 = vrot.slane %v1634, 7
  %v1784 = vrot.slane %v1634, 1
  %v1785 = vrot.slane %v1634, 2
  %v1786 = vrot.slane %v1634, 3
  %v1787 = vrot.slane %v1634, 4
  %v1788 = vrot.slane %v1634, 5
  %v1797 = vmul.f32 %v1694, %v1782
  %v1798 = vmul.f32 %v1696, %v1783
  %v1799 = vmul.f32 %v1698, %v1634
  %v1800 = vmul.f32 %v1700, %v1784
  %v1801 = vmul.f32 %v1702, %v1785
  %v1802 = vmul.f32 %v1704, %v1786
  %v1803 = vmul.f32 %v1706, %v1787
  %v1804 = vmul.f32 %v1708, %v1788
  %v1805 = vadd.f32 %v405, %v1797
  %v1806 = vadd.f32 %v410, %v1798
  %v1807 = vadd.f32 %v415, %v1799
  %v1808 = vadd.f32 %v420, %v1800
  %v1809 = vadd.f32 %v425, %v1801
  %v1810 = vadd.f32 %v430, %v1802
  %v1811 = vadd.f32 %v435, %v1803
  %v1812 = vadd.f32 %v440, %v1804
  %v1813 = vtanh.pop %v1805
  %v1814 = vtanh.pop %v1806
  %v1815 = vtanh.pop %v1807
  %v1816 = vtanh.pop %v1808
  %v1817 = vtanh.pop %v1809
  %v1818 = vtanh.pop %v1810
  %v1819 = vtanh.pop %v1811
  %v1820 = vtanh.pop %v1812
  %v1821 = vsub.f32 1.0, %v1766
  %v1822 = vsub.f32 1.0, %v1768
  %v1823 = vsub.f32 1.0, %v1770
  %v1824 = vsub.f32 1.0, %v1772
  %v1825 = vsub.f32 1.0, %v1774
  %v1826 = vsub.f32 1.0, %v1776
  %v1827 = vsub.f32 1.0, %v1778
  %v1828 = vsub.f32 1.0, %v1780
  %v1829 = vmul.f32 %v1821, %v1813
  %v1830 = vmul.f32 %v1822, %v1814
  %v1831 = vmul.f32 %v1823, %v1815
  %v1832 = vmul.f32 %v1824, %v1816
  %v1833 = vmul.f32 %v1825, %v1817
  %v1834 = vmul.f32 %v1826, %v1818
  %v1835 = vmul.f32 %v1827, %v1819
  %v1836 = vmul.f32 %v1828, %v1820
  %v1837 = vrot.slane %v1423, 6
  %v1838 = vrot.slane %v1423, 7
  %v1839 = vrot.slane %v1423, 1
  %v1840 = vrot.slane %v1423, 2
  %v1841 = vrot.slane %v1423, 3
  %v1842 = vrot.slane %v1423, 4
  %v1843 = vrot.slane %v1423, 5
  %v1852 = vmul.f32 %v1766, %v1837
  %v1853 = vmul.f32 %v1768, %v1838
  %v1854 = vmul.f32 %v1770, %v1423
  %v1855 = vmul.f32 %v1772, %v1839
  %v1856 = vmul.f32 %v1774, %v1840
  %v1857 = vmul.f32 %v1776, %v1841
  %v1858 = vmul.f32 %v1778, %v1842
  %v1859 = vmul.f32 %v1780, %v1843
  %v1860 = vadd.f32 %v1829, %v1852
  %v1861 = vadd.f32 %v1830, %v1853
  %v1862 = vadd.f32 %v1831, %v1854
  %v1863 = vadd.f32 %v1832, %v1855
  %v1864 = vadd.f32 %v1833, %v1856
  %v1865 = vadd.f32 %v1834, %v1857
  %v1866 = vadd.f32 %v1835, %v1858
  %v1867 = vadd.f32 %v1836, %v1859
  %s1868 = sadd.s32 %s463, 2
  %v1869 = vstv %s1868
  %vm1870 = vcmp.lt.s32.totalorder %v1869, %v462
  %v1871 = vsel %vm1870, 1, 0
  %1872 = vset.pattern.permute.xlu0 0
  %1873 = vperm.xlu0 %1872, %v1871
  %v1874 = vpop.permute.xlu0 %1873
  %vm1875 = vcmp.eq.s32.totalorder %v1874, 1
  %v1884 = vrot.slane %v1860, 2
  %v1885 = vrot.slane %v1861, 1
  %v1886 = vsel %vm926, %v1885, %v1884
  %v1887 = vsel %vm929, %v1862, %v1886
  %v1888 = vrot.slane %v1863, 7
  %v1889 = vsel %vm932, %v1888, %v1887
  %v1890 = vrot.slane %v1864, 6
  %v1891 = vsel %vm935, %v1890, %v1889
  %v1892 = vrot.slane %v1865, 5
  %v1893 = vsel %vm938, %v1892, %v1891
  %v1894 = vrot.slane %v1866, 4
  %v1895 = vsel %vm941, %v1894, %v1893
  %v1896 = vrot.slane %v1867, 3
  %v1897 = vsel %vm944, %v1896, %v1895
  %v1899 = vsel %vm1875, %v1897, %v1423
  %v1901 = vsel %vm465, %v1899, 0
  %1903 = vmatprep.subr.mxu0 0.0
  %1904 = vmatpush1.msra.mxu0 0.0
  %1905 = vmatprep.subr.mxu0 0.0
  %1906 = vmatpush1.msra.mxu0 0.0
  %1907 = vmatprep.subr.mxu0 0.0
  %1908 = vmatpush1.msra.mxu0 0.0
  %1909 = vmatprep.subr.mxu0 0.0
  %1910 = vmatpush1.msra.mxu0 0.0
  %1911 = vmatprep.subr.mxu0 0.0
  %1912 = vmatpush1.msra.mxu0 0.0
  %1913 = vmatprep.subr.mxu0 0.0
  %1914 = vmatpush1.msra.mxu0 0.0
  %1915 = vmatprep.subr.mxu0 0.0
  %1916 = vmatpush1.msra.mxu0 0.0
  %1917 = vmatprep.subr.mxu0 0.0
  %1918 = vmatpush1.msra.mxu0 0.0
  %1919 = vmatprep.subr.mxu0 0.0
  %1920 = vmatpush1.msra.mxu0 0.0
  %1921 = vmatprep.subr.mxu0 0.0
  %1922 = vmatpush1.msra.mxu0 0.0
  %1923 = vmatprep.subr.mxu0 0.0
  %1924 = vmatpush1.msra.mxu0 0.0
  %1925 = vmatprep.subr.mxu0 0.0
  %1926 = vmatpush1.msra.mxu0 0.0
  %1927 = vmatprep.subr.mxu0 0.0
  %1928 = vmatpush1.msra.mxu0 %v446
  %1929 = vmatprep.subr.mxu0 0.0
  %1930 = vmatpush1.msra.mxu0 %v445
  %1931 = vmatprep.subr.mxu0 0.0
  %1932 = vmatpush1.msra.mxu0 %v444
  %1933 = vmatprep.subr.mxu0 0.0
  %1934 = vmatpush1.msra.mxu0 %v443
  %1935 = vmatprep.subr.mxu0 0.0
  %1936 = vmatpush2.msra.mxu0 0.0
  %1937 = vmatprep.subr.mxu0 0.0
  %1938 = vmatpush2.msra.mxu0 0.0
  %1939 = vmatprep.subr.mxu0 0.0
  %1940 = vmatpush2.msra.mxu0 0.0
  %1941 = vmatprep.subr.mxu0 0.0
  %1942 = vmatpush2.msra.mxu0 0.0
  %1943 = vmatprep.subr.mxu0 0.0
  %1944 = vmatpush2.msra.mxu0 0.0
  %1945 = vmatprep.subr.mxu0 0.0
  %1946 = vmatpush2.msra.mxu0 0.0
  %1947 = vmatprep.subr.mxu0 0.0
  %1948 = vmatpush2.msra.mxu0 0.0
  %1949 = vmatprep.subr.mxu0 0.0
  %1950 = vmatpush2.msra.mxu0 0.0
  %1951 = vmatprep.subr.mxu0 0.0
  %1952 = vmatpush2.msra.mxu0 0.0
  %1953 = vmatprep.subr.mxu0 0.0
  %1954 = vmatpush2.msra.mxu0 0.0
  %1955 = vmatprep.subr.mxu0 0.0
  %1956 = vmatpush2.msra.mxu0 0.0
  %1957 = vmatprep.subr.mxu0 0.0
  %1958 = vmatpush2.msra.mxu0 0.0
  %1959 = vmatprep.subr.mxu0 0.0
  %1960 = vmatpush2.msra.mxu0 0.0
  %1961 = vmatprep.subr.mxu0 0.0
  %1962 = vmatpush2.msra.mxu0 0.0
  %1963 = vmatprep.subr.mxu0 0.0
  %1964 = vmatpush2.msra.mxu0 0.0
  %1965 = vmatprep.subr.mxu0 0.0
  %1966 = vmatpush2.msra.mxu0 0.0
  %1967 = vmatprep.mubr.f32.mxu0 0.0
  %1968 = vmatmul.mubr.f32.gmra.mxu0 %v1901
  %v1969 = vpop.f32.mrf.mxu0
  %v1970 = vadd.f32 0.0, %v1969
  %v1971 = vpop.f32.mrf.mxu0
  %1972 = vdwg.mxu0
  %1973 = vmatprep.subr.mxu0 0.0
  %1974 = vmatpush1.msra.mxu0 0.0
  %1975 = vmatprep.subr.mxu0 0.0
  %1976 = vmatpush1.msra.mxu0 0.0
  %1977 = vmatprep.subr.mxu0 0.0
  %1978 = vmatpush1.msra.mxu0 0.0
  %1979 = vmatprep.subr.mxu0 0.0
  %1980 = vmatpush1.msra.mxu0 0.0
  %1981 = vmatprep.subr.mxu0 0.0
  %1982 = vmatpush1.msra.mxu0 0.0
  %1983 = vmatprep.subr.mxu0 0.0
  %1984 = vmatpush1.msra.mxu0 0.0
  %1985 = vmatprep.subr.mxu0 0.0
  %1986 = vmatpush1.msra.mxu0 0.0
  %1987 = vmatprep.subr.mxu0 0.0
  %1988 = vmatpush1.msra.mxu0 0.0
  %1989 = vmatprep.subr.mxu0 0.0
  %1990 = vmatpush1.msra.mxu0 0.0
  %1991 = vmatprep.subr.mxu0 0.0
  %1992 = vmatpush1.msra.mxu0 0.0
  %1993 = vmatprep.subr.mxu0 0.0
  %1994 = vmatpush1.msra.mxu0 0.0
  %1995 = vmatprep.subr.mxu0 0.0
  %1996 = vmatpush1.msra.mxu0 0.0
  %1997 = vmatprep.subr.mxu0 0.0
  %1998 = vmatpush1.msra.mxu0 %v450
  %1999 = vmatprep.subr.mxu0 0.0
  %2000 = vmatpush1.msra.mxu0 %v449
  %2001 = vmatprep.subr.mxu0 0.0
  %2002 = vmatpush1.msra.mxu0 %v448
  %2003 = vmatprep.subr.mxu0 0.0
  %2004 = vmatpush1.msra.mxu0 %v447
  %2005 = vmatprep.subr.mxu0 0.0
  %2006 = vmatpush2.msra.mxu0 0.0
  %2007 = vmatprep.subr.mxu0 0.0
  %2008 = vmatpush2.msra.mxu0 0.0
  %2009 = vmatprep.subr.mxu0 0.0
  %2010 = vmatpush2.msra.mxu0 0.0
  %2011 = vmatprep.subr.mxu0 0.0
  %2012 = vmatpush2.msra.mxu0 0.0
  %2013 = vmatprep.subr.mxu0 0.0
  %2014 = vmatpush2.msra.mxu0 0.0
  %2015 = vmatprep.subr.mxu0 0.0
  %2016 = vmatpush2.msra.mxu0 0.0
  %2017 = vmatprep.subr.mxu0 0.0
  %2018 = vmatpush2.msra.mxu0 0.0
  %2019 = vmatprep.subr.mxu0 0.0
  %2020 = vmatpush2.msra.mxu0 0.0
  %2021 = vmatprep.subr.mxu0 0.0
  %2022 = vmatpush2.msra.mxu0 0.0
  %2023 = vmatprep.subr.mxu0 0.0
  %2024 = vmatpush2.msra.mxu0 0.0
  %2025 = vmatprep.subr.mxu0 0.0
  %2026 = vmatpush2.msra.mxu0 0.0
  %2027 = vmatprep.subr.mxu0 0.0
  %2028 = vmatpush2.msra.mxu0 0.0
  %2029 = vmatprep.subr.mxu0 0.0
  %2030 = vmatpush2.msra.mxu0 0.0
  %2031 = vmatprep.subr.mxu0 0.0
  %2032 = vmatpush2.msra.mxu0 0.0
  %2033 = vmatprep.subr.mxu0 0.0
  %2034 = vmatpush2.msra.mxu0 0.0
  %2035 = vmatprep.subr.mxu0 0.0
  %2036 = vmatpush2.msra.mxu0 0.0
  %2037 = vmatprep.mubr.f32.mxu0 0.0
  %2038 = vmatmul.mubr.f32.gmra.mxu0 %v1901
  %v2039 = vpop.f32.mrf.mxu0
  %v2040 = vadd.f32 0.0, %v2039
  %v2041 = vpop.f32.mrf.mxu0
  %2042 = vdwg.mxu0
  %2043 = vmatprep.subr.mxu0 0.0
  %2044 = vmatpush1.msra.mxu0 0.0
  %2045 = vmatprep.subr.mxu0 0.0
  %2046 = vmatpush1.msra.mxu0 0.0
  %2047 = vmatprep.subr.mxu0 0.0
  %2048 = vmatpush1.msra.mxu0 0.0
  %2049 = vmatprep.subr.mxu0 0.0
  %2050 = vmatpush1.msra.mxu0 0.0
  %2051 = vmatprep.subr.mxu0 0.0
  %2052 = vmatpush1.msra.mxu0 0.0
  %2053 = vmatprep.subr.mxu0 0.0
  %2054 = vmatpush1.msra.mxu0 0.0
  %2055 = vmatprep.subr.mxu0 0.0
  %2056 = vmatpush1.msra.mxu0 0.0
  %2057 = vmatprep.subr.mxu0 0.0
  %2058 = vmatpush1.msra.mxu0 0.0
  %2059 = vmatprep.subr.mxu0 0.0
  %2060 = vmatpush1.msra.mxu0 0.0
  %2061 = vmatprep.subr.mxu0 0.0
  %2062 = vmatpush1.msra.mxu0 0.0
  %2063 = vmatprep.subr.mxu0 0.0
  %2064 = vmatpush1.msra.mxu0 0.0
  %2065 = vmatprep.subr.mxu0 0.0
  %2066 = vmatpush1.msra.mxu0 0.0
  %2067 = vmatprep.subr.mxu0 0.0
  %2068 = vmatpush1.msra.mxu0 %v454
  %2069 = vmatprep.subr.mxu0 0.0
  %2070 = vmatpush1.msra.mxu0 %v453
  %2071 = vmatprep.subr.mxu0 0.0
  %2072 = vmatpush1.msra.mxu0 %v452
  %2073 = vmatprep.subr.mxu0 0.0
  %2074 = vmatpush1.msra.mxu0 %v451
  %2075 = vmatprep.subr.mxu0 0.0
  %2076 = vmatpush2.msra.mxu0 0.0
  %2077 = vmatprep.subr.mxu0 0.0
  %2078 = vmatpush2.msra.mxu0 0.0
  %2079 = vmatprep.subr.mxu0 0.0
  %2080 = vmatpush2.msra.mxu0 0.0
  %2081 = vmatprep.subr.mxu0 0.0
  %2082 = vmatpush2.msra.mxu0 0.0
  %2083 = vmatprep.subr.mxu0 0.0
  %2084 = vmatpush2.msra.mxu0 0.0
  %2085 = vmatprep.subr.mxu0 0.0
  %2086 = vmatpush2.msra.mxu0 0.0
  %2087 = vmatprep.subr.mxu0 0.0
  %2088 = vmatpush2.msra.mxu0 0.0
  %2089 = vmatprep.subr.mxu0 0.0
  %2090 = vmatpush2.msra.mxu0 0.0
  %2091 = vmatprep.subr.mxu0 0.0
  %2092 = vmatpush2.msra.mxu0 0.0
  %2093 = vmatprep.subr.mxu0 0.0
  %2094 = vmatpush2.msra.mxu0 0.0
  %2095 = vmatprep.subr.mxu0 0.0
  %2096 = vmatpush2.msra.mxu0 0.0
  %2097 = vmatprep.subr.mxu0 0.0
  %2098 = vmatpush2.msra.mxu0 0.0
  %2099 = vmatprep.subr.mxu0 0.0
  %2100 = vmatpush2.msra.mxu0 0.0
  %2101 = vmatprep.subr.mxu0 0.0
  %2102 = vmatpush2.msra.mxu0 0.0
  %2103 = vmatprep.subr.mxu0 0.0
  %2104 = vmatpush2.msra.mxu0 0.0
  %2105 = vmatprep.subr.mxu0 0.0
  %2106 = vmatpush2.msra.mxu0 0.0
  %2107 = vmatprep.mubr.f32.mxu0 0.0
  %2108 = vmatmul.mubr.f32.gmra.mxu0 %v1901
  %v2109 = vpop.f32.mrf.mxu0
  %v2110 = vadd.f32 %v460, %v2109
  %v2111 = vpop.f32.mrf.mxu0
  %2112 = vdwg.mxu0
  %v2114 = vrot.slane %v1970, 5
  %v2115 = vrot.slane %v1970, 6
  %v2116 = vrot.slane %v1970, 7
  %v2117 = vrot.slane %v1970, 1
  %v2118 = vrot.slane %v1970, 2
  %v2119 = vrot.slane %v1970, 3
  %v2120 = vrot.slane %v1970, 4
  %v2129 = vadd.f32 %v173, %v2114
  %v2130 = vadd.f32 %v178, %v2115
  %v2131 = vadd.f32 %v183, %v2116
  %v2132 = vadd.f32 %v188, %v1970
  %v2133 = vadd.f32 %v193, %v2117
  %v2134 = vadd.f32 %v198, %v2118
  %v2135 = vadd.f32 %v203, %v2119
  %v2136 = vadd.f32 %v208, %v2120
  %v2137 = vxor.u32 %v2129, 2147483648
  %v2138 = vxor.u32 %v2130, 2147483648
  %v2139 = vxor.u32 %v2131, 2147483648
  %v2140 = vxor.u32 %v2132, 2147483648
  %v2141 = vxor.u32 %v2133, 2147483648
  %v2142 = vxor.u32 %v2134, 2147483648
  %v2143 = vxor.u32 %v2135, 2147483648
  %v2144 = vxor.u32 %v2136, 2147483648
  %v2145 = vmul.f32 %v2137, 1.442695
  %v2146 = vpow.pop %v2145
  %v2147 = vmul.f32 %v2138, 1.442695
  %v2148 = vpow.pop %v2147
  %v2149 = vmul.f32 %v2139, 1.442695
  %v2150 = vpow.pop %v2149
  %v2151 = vmul.f32 %v2140, 1.442695
  %v2152 = vpow.pop %v2151
  %v2153 = vmul.f32 %v2141, 1.442695
  %v2154 = vpow.pop %v2153
  %v2155 = vmul.f32 %v2142, 1.442695
  %v2156 = vpow.pop %v2155
  %v2157 = vmul.f32 %v2143, 1.442695
  %v2158 = vpow.pop %v2157
  %v2159 = vmul.f32 %v2144, 1.442695
  %v2160 = vpow.pop %v2159
  %v2161 = vadd.f32 %v2146, 1.0
  %v2162 = vadd.f32 %v2148, 1.0
  %v2163 = vadd.f32 %v2150, 1.0
  %v2164 = vadd.f32 %v2152, 1.0
  %v2165 = vadd.f32 %v2154, 1.0
  %v2166 = vadd.f32 %v2156, 1.0
  %v2167 = vadd.f32 %v2158, 1.0
  %v2168 = vadd.f32 %v2160, 1.0
  %v2169 = vrcp.pop %v2161
  %v2170 = vmul.f32 1.0, %v2169
  %v2171 = vrcp.pop %v2162
  %v2172 = vmul.f32 1.0, %v2171
  %v2173 = vrcp.pop %v2163
  %v2174 = vmul.f32 1.0, %v2173
  %v2175 = vrcp.pop %v2164
  %v2176 = vmul.f32 1.0, %v2175
  %v2177 = vrcp.pop %v2165
  %v2178 = vmul.f32 1.0, %v2177
  %v2179 = vrcp.pop %v2166
  %v2180 = vmul.f32 1.0, %v2179
  %v2181 = vrcp.pop %v2167
  %v2182 = vmul.f32 1.0, %v2181
  %v2183 = vrcp.pop %v2168
  %v2184 = vmul.f32 1.0, %v2183
  %v2186 = vrot.slane %v2040, 5
  %v2187 = vrot.slane %v2040, 6
  %v2188 = vrot.slane %v2040, 7
  %v2189 = vrot.slane %v2040, 1
  %v2190 = vrot.slane %v2040, 2
  %v2191 = vrot.slane %v2040, 3
  %v2192 = vrot.slane %v2040, 4
  %v2201 = vadd.f32 %v289, %v2186
  %v2202 = vadd.f32 %v294, %v2187
  %v2203 = vadd.f32 %v299, %v2188
  %v2204 = vadd.f32 %v304, %v2040
  %v2205 = vadd.f32 %v309, %v2189
  %v2206 = vadd.f32 %v314, %v2190
  %v2207 = vadd.f32 %v319, %v2191
  %v2208 = vadd.f32 %v324, %v2192
  %v2209 = vxor.u32 %v2201, 2147483648
  %v2210 = vxor.u32 %v2202, 2147483648
  %v2211 = vxor.u32 %v2203, 2147483648
  %v2212 = vxor.u32 %v2204, 2147483648
  %v2213 = vxor.u32 %v2205, 2147483648
  %v2214 = vxor.u32 %v2206, 2147483648
  %v2215 = vxor.u32 %v2207, 2147483648
  %v2216 = vxor.u32 %v2208, 2147483648
  %v2217 = vmul.f32 %v2209, 1.442695
  %v2218 = vpow.pop %v2217
  %v2219 = vmul.f32 %v2210, 1.442695
  %v2220 = vpow.pop %v2219
  %v2221 = vmul.f32 %v2211, 1.442695
  %v2222 = vpow.pop %v2221
  %v2223 = vmul.f32 %v2212, 1.442695
  %v2224 = vpow.pop %v2223
  %v2225 = vmul.f32 %v2213, 1.442695
  %v2226 = vpow.pop %v2225
  %v2227 = vmul.f32 %v2214, 1.442695
  %v2228 = vpow.pop %v2227
  %v2229 = vmul.f32 %v2215, 1.442695
  %v2230 = vpow.pop %v2229
  %v2231 = vmul.f32 %v2216, 1.442695
  %v2232 = vpow.pop %v2231
  %v2233 = vadd.f32 %v2218, 1.0
  %v2234 = vadd.f32 %v2220, 1.0
  %v2235 = vadd.f32 %v2222, 1.0
  %v2236 = vadd.f32 %v2224, 1.0
  %v2237 = vadd.f32 %v2226, 1.0
  %v2238 = vadd.f32 %v2228, 1.0
  %v2239 = vadd.f32 %v2230, 1.0
  %v2240 = vadd.f32 %v2232, 1.0
  %v2241 = vrcp.pop %v2233
  %v2242 = vmul.f32 1.0, %v2241
  %v2243 = vrcp.pop %v2234
  %v2244 = vmul.f32 1.0, %v2243
  %v2245 = vrcp.pop %v2235
  %v2246 = vmul.f32 1.0, %v2245
  %v2247 = vrcp.pop %v2236
  %v2248 = vmul.f32 1.0, %v2247
  %v2249 = vrcp.pop %v2237
  %v2250 = vmul.f32 1.0, %v2249
  %v2251 = vrcp.pop %v2238
  %v2252 = vmul.f32 1.0, %v2251
  %v2253 = vrcp.pop %v2239
  %v2254 = vmul.f32 1.0, %v2253
  %v2255 = vrcp.pop %v2240
  %v2256 = vmul.f32 1.0, %v2255
  %v2258 = vrot.slane %v2110, 5
  %v2259 = vrot.slane %v2110, 6
  %v2260 = vrot.slane %v2110, 7
  %v2261 = vrot.slane %v2110, 1
  %v2262 = vrot.slane %v2110, 2
  %v2263 = vrot.slane %v2110, 3
  %v2264 = vrot.slane %v2110, 4
  %v2273 = vmul.f32 %v2170, %v2258
  %v2274 = vmul.f32 %v2172, %v2259
  %v2275 = vmul.f32 %v2174, %v2260
  %v2276 = vmul.f32 %v2176, %v2110
  %v2277 = vmul.f32 %v2178, %v2261
  %v2278 = vmul.f32 %v2180, %v2262
  %v2279 = vmul.f32 %v2182, %v2263
  %v2280 = vmul.f32 %v2184, %v2264
  %v2281 = vadd.f32 %v405, %v2273
  %v2282 = vadd.f32 %v410, %v2274
  %v2283 = vadd.f32 %v415, %v2275
  %v2284 = vadd.f32 %v420, %v2276
  %v2285 = vadd.f32 %v425, %v2277
  %v2286 = vadd.f32 %v430, %v2278
  %v2287 = vadd.f32 %v435, %v2279
  %v2288 = vadd.f32 %v440, %v2280
  %v2289 = vtanh.pop %v2281
  %v2290 = vtanh.pop %v2282
  %v2291 = vtanh.pop %v2283
  %v2292 = vtanh.pop %v2284
  %v2293 = vtanh.pop %v2285
  %v2294 = vtanh.pop %v2286
  %v2295 = vtanh.pop %v2287
  %v2296 = vtanh.pop %v2288
  %v2297 = vsub.f32 1.0, %v2242
  %v2298 = vsub.f32 1.0, %v2244
  %v2299 = vsub.f32 1.0, %v2246
  %v2300 = vsub.f32 1.0, %v2248
  %v2301 = vsub.f32 1.0, %v2250
  %v2302 = vsub.f32 1.0, %v2252
  %v2303 = vsub.f32 1.0, %v2254
  %v2304 = vsub.f32 1.0, %v2256
  %v2305 = vmul.f32 %v2297, %v2289
  %v2306 = vmul.f32 %v2298, %v2290
  %v2307 = vmul.f32 %v2299, %v2291
  %v2308 = vmul.f32 %v2300, %v2292
  %v2309 = vmul.f32 %v2301, %v2293
  %v2310 = vmul.f32 %v2302, %v2294
  %v2311 = vmul.f32 %v2303, %v2295
  %v2312 = vmul.f32 %v2304, %v2296
  %v2313 = vrot.slane %v1899, 5
  %v2314 = vrot.slane %v1899, 6
  %v2315 = vrot.slane %v1899, 7
  %v2316 = vrot.slane %v1899, 1
  %v2317 = vrot.slane %v1899, 2
  %v2318 = vrot.slane %v1899, 3
  %v2319 = vrot.slane %v1899, 4
  %v2328 = vmul.f32 %v2242, %v2313
  %v2329 = vmul.f32 %v2244, %v2314
  %v2330 = vmul.f32 %v2246, %v2315
  %v2331 = vmul.f32 %v2248, %v1899
  %v2332 = vmul.f32 %v2250, %v2316
  %v2333 = vmul.f32 %v2252, %v2317
  %v2334 = vmul.f32 %v2254, %v2318
  %v2335 = vmul.f32 %v2256, %v2319
  %v2336 = vadd.f32 %v2305, %v2328
  %v2337 = vadd.f32 %v2306, %v2329
  %v2338 = vadd.f32 %v2307, %v2330
  %v2339 = vadd.f32 %v2308, %v2331
  %v2340 = vadd.f32 %v2309, %v2332
  %v2341 = vadd.f32 %v2310, %v2333
  %v2342 = vadd.f32 %v2311, %v2334
  %v2343 = vadd.f32 %v2312, %v2335
  %s2344 = sadd.s32 %s463, 3
  %v2345 = vstv %s2344
  %vm2346 = vcmp.lt.s32.totalorder %v2345, %v462
  %v2347 = vsel %vm2346, 1, 0
  %2348 = vset.pattern.permute.xlu0 0
  %2349 = vperm.xlu0 %2348, %v2347
  %v2350 = vpop.permute.xlu0 %2349
  %vm2351 = vcmp.eq.s32.totalorder %v2350, 1
  %v2360 = vrot.slane %v2336, 3
  %v2361 = vrot.slane %v2337, 2
  %v2362 = vsel %vm926, %v2361, %v2360
  %v2363 = vrot.slane %v2338, 1
  %v2364 = vsel %vm929, %v2363, %v2362
  %v2365 = vsel %vm932, %v2339, %v2364
  %v2366 = vrot.slane %v2340, 7
  %v2367 = vsel %vm935, %v2366, %v2365
  %v2368 = vrot.slane %v2341, 6
  %v2369 = vsel %vm938, %v2368, %v2367
  %v2370 = vrot.slane %v2342, 5
  %v2371 = vsel %vm941, %v2370, %v2369
  %v2372 = vrot.slane %v2343, 4
  %v2373 = vsel %vm944, %v2372, %v2371
  %v2375 = vsel %vm2351, %v2373, %v1899
  %v2377 = vsel %vm465, %v2375, 0
  %2379 = vmatprep.subr.mxu0 0.0
  %2380 = vmatpush1.msra.mxu0 0.0
  %2381 = vmatprep.subr.mxu0 0.0
  %2382 = vmatpush1.msra.mxu0 0.0
  %2383 = vmatprep.subr.mxu0 0.0
  %2384 = vmatpush1.msra.mxu0 0.0
  %2385 = vmatprep.subr.mxu0 0.0
  %2386 = vmatpush1.msra.mxu0 0.0
  %2387 = vmatprep.subr.mxu0 0.0
  %2388 = vmatpush1.msra.mxu0 0.0
  %2389 = vmatprep.subr.mxu0 0.0
  %2390 = vmatpush1.msra.mxu0 0.0
  %2391 = vmatprep.subr.mxu0 0.0
  %2392 = vmatpush1.msra.mxu0 0.0
  %2393 = vmatprep.subr.mxu0 0.0
  %2394 = vmatpush1.msra.mxu0 0.0
  %2395 = vmatprep.subr.mxu0 0.0
  %2396 = vmatpush1.msra.mxu0 0.0
  %2397 = vmatprep.subr.mxu0 0.0
  %2398 = vmatpush1.msra.mxu0 0.0
  %2399 = vmatprep.subr.mxu0 0.0
  %2400 = vmatpush1.msra.mxu0 0.0
  %2401 = vmatprep.subr.mxu0 0.0
  %2402 = vmatpush1.msra.mxu0 0.0
  %2403 = vmatprep.subr.mxu0 0.0
  %2404 = vmatpush1.msra.mxu0 %v446
  %2405 = vmatprep.subr.mxu0 0.0
  %2406 = vmatpush1.msra.mxu0 %v445
  %2407 = vmatprep.subr.mxu0 0.0
  %2408 = vmatpush1.msra.mxu0 %v444
  %2409 = vmatprep.subr.mxu0 0.0
  %2410 = vmatpush1.msra.mxu0 %v443
  %2411 = vmatprep.subr.mxu0 0.0
  %2412 = vmatpush2.msra.mxu0 0.0
  %2413 = vmatprep.subr.mxu0 0.0
  %2414 = vmatpush2.msra.mxu0 0.0
  %2415 = vmatprep.subr.mxu0 0.0
  %2416 = vmatpush2.msra.mxu0 0.0
  %2417 = vmatprep.subr.mxu0 0.0
  %2418 = vmatpush2.msra.mxu0 0.0
  %2419 = vmatprep.subr.mxu0 0.0
  %2420 = vmatpush2.msra.mxu0 0.0
  %2421 = vmatprep.subr.mxu0 0.0
  %2422 = vmatpush2.msra.mxu0 0.0
  %2423 = vmatprep.subr.mxu0 0.0
  %2424 = vmatpush2.msra.mxu0 0.0
  %2425 = vmatprep.subr.mxu0 0.0
  %2426 = vmatpush2.msra.mxu0 0.0
  %2427 = vmatprep.subr.mxu0 0.0
  %2428 = vmatpush2.msra.mxu0 0.0
  %2429 = vmatprep.subr.mxu0 0.0
  %2430 = vmatpush2.msra.mxu0 0.0
  %2431 = vmatprep.subr.mxu0 0.0
  %2432 = vmatpush2.msra.mxu0 0.0
  %2433 = vmatprep.subr.mxu0 0.0
  %2434 = vmatpush2.msra.mxu0 0.0
  %2435 = vmatprep.subr.mxu0 0.0
  %2436 = vmatpush2.msra.mxu0 0.0
  %2437 = vmatprep.subr.mxu0 0.0
  %2438 = vmatpush2.msra.mxu0 0.0
  %2439 = vmatprep.subr.mxu0 0.0
  %2440 = vmatpush2.msra.mxu0 0.0
  %2441 = vmatprep.subr.mxu0 0.0
  %2442 = vmatpush2.msra.mxu0 0.0
  %2443 = vmatprep.mubr.f32.mxu0 0.0
  %2444 = vmatmul.mubr.f32.gmra.mxu0 %v2377
  %v2445 = vpop.f32.mrf.mxu0
  %v2446 = vadd.f32 0.0, %v2445
  %v2447 = vpop.f32.mrf.mxu0
  %2448 = vdwg.mxu0
  %2449 = vmatprep.subr.mxu0 0.0
  %2450 = vmatpush1.msra.mxu0 0.0
  %2451 = vmatprep.subr.mxu0 0.0
  %2452 = vmatpush1.msra.mxu0 0.0
  %2453 = vmatprep.subr.mxu0 0.0
  %2454 = vmatpush1.msra.mxu0 0.0
  %2455 = vmatprep.subr.mxu0 0.0
  %2456 = vmatpush1.msra.mxu0 0.0
  %2457 = vmatprep.subr.mxu0 0.0
  %2458 = vmatpush1.msra.mxu0 0.0
  %2459 = vmatprep.subr.mxu0 0.0
  %2460 = vmatpush1.msra.mxu0 0.0
  %2461 = vmatprep.subr.mxu0 0.0
  %2462 = vmatpush1.msra.mxu0 0.0
  %2463 = vmatprep.subr.mxu0 0.0
  %2464 = vmatpush1.msra.mxu0 0.0
  %2465 = vmatprep.subr.mxu0 0.0
  %2466 = vmatpush1.msra.mxu0 0.0
  %2467 = vmatprep.subr.mxu0 0.0
  %2468 = vmatpush1.msra.mxu0 0.0
  %2469 = vmatprep.subr.mxu0 0.0
  %2470 = vmatpush1.msra.mxu0 0.0
  %2471 = vmatprep.subr.mxu0 0.0
  %2472 = vmatpush1.msra.mxu0 0.0
  %2473 = vmatprep.subr.mxu0 0.0
  %2474 = vmatpush1.msra.mxu0 %v450
  %2475 = vmatprep.subr.mxu0 0.0
  %2476 = vmatpush1.msra.mxu0 %v449
  %2477 = vmatprep.subr.mxu0 0.0
  %2478 = vmatpush1.msra.mxu0 %v448
  %2479 = vmatprep.subr.mxu0 0.0
  %2480 = vmatpush1.msra.mxu0 %v447
  %2481 = vmatprep.subr.mxu0 0.0
  %2482 = vmatpush2.msra.mxu0 0.0
  %2483 = vmatprep.subr.mxu0 0.0
  %2484 = vmatpush2.msra.mxu0 0.0
  %2485 = vmatprep.subr.mxu0 0.0
  %2486 = vmatpush2.msra.mxu0 0.0
  %2487 = vmatprep.subr.mxu0 0.0
  %2488 = vmatpush2.msra.mxu0 0.0
  %2489 = vmatprep.subr.mxu0 0.0
  %2490 = vmatpush2.msra.mxu0 0.0
  %2491 = vmatprep.subr.mxu0 0.0
  %2492 = vmatpush2.msra.mxu0 0.0
  %2493 = vmatprep.subr.mxu0 0.0
  %2494 = vmatpush2.msra.mxu0 0.0
  %2495 = vmatprep.subr.mxu0 0.0
  %2496 = vmatpush2.msra.mxu0 0.0
  %2497 = vmatprep.subr.mxu0 0.0
  %2498 = vmatpush2.msra.mxu0 0.0
  %2499 = vmatprep.subr.mxu0 0.0
  %2500 = vmatpush2.msra.mxu0 0.0
  %2501 = vmatprep.subr.mxu0 0.0
  %2502 = vmatpush2.msra.mxu0 0.0
  %2503 = vmatprep.subr.mxu0 0.0
  %2504 = vmatpush2.msra.mxu0 0.0
  %2505 = vmatprep.subr.mxu0 0.0
  %2506 = vmatpush2.msra.mxu0 0.0
  %2507 = vmatprep.subr.mxu0 0.0
  %2508 = vmatpush2.msra.mxu0 0.0
  %2509 = vmatprep.subr.mxu0 0.0
  %2510 = vmatpush2.msra.mxu0 0.0
  %2511 = vmatprep.subr.mxu0 0.0
  %2512 = vmatpush2.msra.mxu0 0.0
  %2513 = vmatprep.mubr.f32.mxu0 0.0
  %2514 = vmatmul.mubr.f32.gmra.mxu0 %v2377
  %v2515 = vpop.f32.mrf.mxu0
  %v2516 = vadd.f32 0.0, %v2515
  %v2517 = vpop.f32.mrf.mxu0
  %2518 = vdwg.mxu0
  %2519 = vmatprep.subr.mxu0 0.0
  %2520 = vmatpush1.msra.mxu0 0.0
  %2521 = vmatprep.subr.mxu0 0.0
  %2522 = vmatpush1.msra.mxu0 0.0
  %2523 = vmatprep.subr.mxu0 0.0
  %2524 = vmatpush1.msra.mxu0 0.0
  %2525 = vmatprep.subr.mxu0 0.0
  %2526 = vmatpush1.msra.mxu0 0.0
  %2527 = vmatprep.subr.mxu0 0.0
  %2528 = vmatpush1.msra.mxu0 0.0
  %2529 = vmatprep.subr.mxu0 0.0
  %2530 = vmatpush1.msra.mxu0 0.0
  %2531 = vmatprep.subr.mxu0 0.0
  %2532 = vmatpush1.msra.mxu0 0.0
  %2533 = vmatprep.subr.mxu0 0.0
  %2534 = vmatpush1.msra.mxu0 0.0
  %2535 = vmatprep.subr.mxu0 0.0
  %2536 = vmatpush1.msra.mxu0 0.0
  %2537 = vmatprep.subr.mxu0 0.0
  %2538 = vmatpush1.msra.mxu0 0.0
  %2539 = vmatprep.subr.mxu0 0.0
  %2540 = vmatpush1.msra.mxu0 0.0
  %2541 = vmatprep.subr.mxu0 0.0
  %2542 = vmatpush1.msra.mxu0 0.0
  %2543 = vmatprep.subr.mxu0 0.0
  %2544 = vmatpush1.msra.mxu0 %v454
  %2545 = vmatprep.subr.mxu0 0.0
  %2546 = vmatpush1.msra.mxu0 %v453
  %2547 = vmatprep.subr.mxu0 0.0
  %2548 = vmatpush1.msra.mxu0 %v452
  %2549 = vmatprep.subr.mxu0 0.0
  %2550 = vmatpush1.msra.mxu0 %v451
  %2551 = vmatprep.subr.mxu0 0.0
  %2552 = vmatpush2.msra.mxu0 0.0
  %2553 = vmatprep.subr.mxu0 0.0
  %2554 = vmatpush2.msra.mxu0 0.0
  %2555 = vmatprep.subr.mxu0 0.0
  %2556 = vmatpush2.msra.mxu0 0.0
  %2557 = vmatprep.subr.mxu0 0.0
  %2558 = vmatpush2.msra.mxu0 0.0
  %2559 = vmatprep.subr.mxu0 0.0
  %2560 = vmatpush2.msra.mxu0 0.0
  %2561 = vmatprep.subr.mxu0 0.0
  %2562 = vmatpush2.msra.mxu0 0.0
  %2563 = vmatprep.subr.mxu0 0.0
  %2564 = vmatpush2.msra.mxu0 0.0
  %2565 = vmatprep.subr.mxu0 0.0
  %2566 = vmatpush2.msra.mxu0 0.0
  %2567 = vmatprep.subr.mxu0 0.0
  %2568 = vmatpush2.msra.mxu0 0.0
  %2569 = vmatprep.subr.mxu0 0.0
  %2570 = vmatpush2.msra.mxu0 0.0
  %2571 = vmatprep.subr.mxu0 0.0
  %2572 = vmatpush2.msra.mxu0 0.0
  %2573 = vmatprep.subr.mxu0 0.0
  %2574 = vmatpush2.msra.mxu0 0.0
  %2575 = vmatprep.subr.mxu0 0.0
  %2576 = vmatpush2.msra.mxu0 0.0
  %2577 = vmatprep.subr.mxu0 0.0
  %2578 = vmatpush2.msra.mxu0 0.0
  %2579 = vmatprep.subr.mxu0 0.0
  %2580 = vmatpush2.msra.mxu0 0.0
  %2581 = vmatprep.subr.mxu0 0.0
  %2582 = vmatpush2.msra.mxu0 0.0
  %2583 = vmatprep.mubr.f32.mxu0 0.0
  %2584 = vmatmul.mubr.f32.gmra.mxu0 %v2377
  %v2585 = vpop.f32.mrf.mxu0
  %v2586 = vadd.f32 %v460, %v2585
  %v2587 = vpop.f32.mrf.mxu0
  %2588 = vdwg.mxu0
  %v2590 = vrot.slane %v2446, 4
  %v2591 = vrot.slane %v2446, 5
  %v2592 = vrot.slane %v2446, 6
  %v2593 = vrot.slane %v2446, 7
  %v2594 = vrot.slane %v2446, 1
  %v2595 = vrot.slane %v2446, 2
  %v2596 = vrot.slane %v2446, 3
  %v2605 = vadd.f32 %v173, %v2590
  %v2606 = vadd.f32 %v178, %v2591
  %v2607 = vadd.f32 %v183, %v2592
  %v2608 = vadd.f32 %v188, %v2593
  %v2609 = vadd.f32 %v193, %v2446
  %v2610 = vadd.f32 %v198, %v2594
  %v2611 = vadd.f32 %v203, %v2595
  %v2612 = vadd.f32 %v208, %v2596
  %v2613 = vxor.u32 %v2605, 2147483648
  %v2614 = vxor.u32 %v2606, 2147483648
  %v2615 = vxor.u32 %v2607, 2147483648
  %v2616 = vxor.u32 %v2608, 2147483648
  %v2617 = vxor.u32 %v2609, 2147483648
  %v2618 = vxor.u32 %v2610, 2147483648
  %v2619 = vxor.u32 %v2611, 2147483648
  %v2620 = vxor.u32 %v2612, 2147483648
  %v2621 = vmul.f32 %v2613, 1.442695
  %v2622 = vpow.pop %v2621
  %v2623 = vmul.f32 %v2614, 1.442695
  %v2624 = vpow.pop %v2623
  %v2625 = vmul.f32 %v2615, 1.442695
  %v2626 = vpow.pop %v2625
  %v2627 = vmul.f32 %v2616, 1.442695
  %v2628 = vpow.pop %v2627
  %v2629 = vmul.f32 %v2617, 1.442695
  %v2630 = vpow.pop %v2629
  %v2631 = vmul.f32 %v2618, 1.442695
  %v2632 = vpow.pop %v2631
  %v2633 = vmul.f32 %v2619, 1.442695
  %v2634 = vpow.pop %v2633
  %v2635 = vmul.f32 %v2620, 1.442695
  %v2636 = vpow.pop %v2635
  %v2637 = vadd.f32 %v2622, 1.0
  %v2638 = vadd.f32 %v2624, 1.0
  %v2639 = vadd.f32 %v2626, 1.0
  %v2640 = vadd.f32 %v2628, 1.0
  %v2641 = vadd.f32 %v2630, 1.0
  %v2642 = vadd.f32 %v2632, 1.0
  %v2643 = vadd.f32 %v2634, 1.0
  %v2644 = vadd.f32 %v2636, 1.0
  %v2645 = vrcp.pop %v2637
  %v2646 = vmul.f32 1.0, %v2645
  %v2647 = vrcp.pop %v2638
  %v2648 = vmul.f32 1.0, %v2647
  %v2649 = vrcp.pop %v2639
  %v2650 = vmul.f32 1.0, %v2649
  %v2651 = vrcp.pop %v2640
  %v2652 = vmul.f32 1.0, %v2651
  %v2653 = vrcp.pop %v2641
  %v2654 = vmul.f32 1.0, %v2653
  %v2655 = vrcp.pop %v2642
  %v2656 = vmul.f32 1.0, %v2655
  %v2657 = vrcp.pop %v2643
  %v2658 = vmul.f32 1.0, %v2657
  %v2659 = vrcp.pop %v2644
  %v2660 = vmul.f32 1.0, %v2659
  %v2662 = vrot.slane %v2516, 4
  %v2663 = vrot.slane %v2516, 5
  %v2664 = vrot.slane %v2516, 6
  %v2665 = vrot.slane %v2516, 7
  %v2666 = vrot.slane %v2516, 1
  %v2667 = vrot.slane %v2516, 2
  %v2668 = vrot.slane %v2516, 3
  %v2677 = vadd.f32 %v289, %v2662
  %v2678 = vadd.f32 %v294, %v2663
  %v2679 = vadd.f32 %v299, %v2664
  %v2680 = vadd.f32 %v304, %v2665
  %v2681 = vadd.f32 %v309, %v2516
  %v2682 = vadd.f32 %v314, %v2666
  %v2683 = vadd.f32 %v319, %v2667
  %v2684 = vadd.f32 %v324, %v2668
  %v2685 = vxor.u32 %v2677, 2147483648
  %v2686 = vxor.u32 %v2678, 2147483648
  %v2687 = vxor.u32 %v2679, 2147483648
  %v2688 = vxor.u32 %v2680, 2147483648
  %v2689 = vxor.u32 %v2681, 2147483648
  %v2690 = vxor.u32 %v2682, 2147483648
  %v2691 = vxor.u32 %v2683, 2147483648
  %v2692 = vxor.u32 %v2684, 2147483648
  %v2693 = vmul.f32 %v2685, 1.442695
  %v2694 = vpow.pop %v2693
  %v2695 = vmul.f32 %v2686, 1.442695
  %v2696 = vpow.pop %v2695
  %v2697 = vmul.f32 %v2687, 1.442695
  %v2698 = vpow.pop %v2697
  %v2699 = vmul.f32 %v2688, 1.442695
  %v2700 = vpow.pop %v2699
  %v2701 = vmul.f32 %v2689, 1.442695
  %v2702 = vpow.pop %v2701
  %v2703 = vmul.f32 %v2690, 1.442695
  %v2704 = vpow.pop %v2703
  %v2705 = vmul.f32 %v2691, 1.442695
  %v2706 = vpow.pop %v2705
  %v2707 = vmul.f32 %v2692, 1.442695
  %v2708 = vpow.pop %v2707
  %v2709 = vadd.f32 %v2694, 1.0
  %v2710 = vadd.f32 %v2696, 1.0
  %v2711 = vadd.f32 %v2698, 1.0
  %v2712 = vadd.f32 %v2700, 1.0
  %v2713 = vadd.f32 %v2702, 1.0
  %v2714 = vadd.f32 %v2704, 1.0
  %v2715 = vadd.f32 %v2706, 1.0
  %v2716 = vadd.f32 %v2708, 1.0
  %v2717 = vrcp.pop %v2709
  %v2718 = vmul.f32 1.0, %v2717
  %v2719 = vrcp.pop %v2710
  %v2720 = vmul.f32 1.0, %v2719
  %v2721 = vrcp.pop %v2711
  %v2722 = vmul.f32 1.0, %v2721
  %v2723 = vrcp.pop %v2712
  %v2724 = vmul.f32 1.0, %v2723
  %v2725 = vrcp.pop %v2713
  %v2726 = vmul.f32 1.0, %v2725
  %v2727 = vrcp.pop %v2714
  %v2728 = vmul.f32 1.0, %v2727
  %v2729 = vrcp.pop %v2715
  %v2730 = vmul.f32 1.0, %v2729
  %v2731 = vrcp.pop %v2716
  %v2732 = vmul.f32 1.0, %v2731
  %v2734 = vrot.slane %v2586, 4
  %v2735 = vrot.slane %v2586, 5
  %v2736 = vrot.slane %v2586, 6
  %v2737 = vrot.slane %v2586, 7
  %v2738 = vrot.slane %v2586, 1
  %v2739 = vrot.slane %v2586, 2
  %v2740 = vrot.slane %v2586, 3
  %v2749 = vmul.f32 %v2646, %v2734
  %v2750 = vmul.f32 %v2648, %v2735
  %v2751 = vmul.f32 %v2650, %v2736
  %v2752 = vmul.f32 %v2652, %v2737
  %v2753 = vmul.f32 %v2654, %v2586
  %v2754 = vmul.f32 %v2656, %v2738
  %v2755 = vmul.f32 %v2658, %v2739
  %v2756 = vmul.f32 %v2660, %v2740
  %v2757 = vadd.f32 %v405, %v2749
  %v2758 = vadd.f32 %v410, %v2750
  %v2759 = vadd.f32 %v415, %v2751
  %v2760 = vadd.f32 %v420, %v2752
  %v2761 = vadd.f32 %v425, %v2753
  %v2762 = vadd.f32 %v430, %v2754
  %v2763 = vadd.f32 %v435, %v2755
  %v2764 = vadd.f32 %v440, %v2756
  %v2765 = vtanh.pop %v2757
  %v2766 = vtanh.pop %v2758
  %v2767 = vtanh.pop %v2759
  %v2768 = vtanh.pop %v2760
  %v2769 = vtanh.pop %v2761
  %v2770 = vtanh.pop %v2762
  %v2771 = vtanh.pop %v2763
  %v2772 = vtanh.pop %v2764
  %v2773 = vsub.f32 1.0, %v2718
  %v2774 = vsub.f32 1.0, %v2720
  %v2775 = vsub.f32 1.0, %v2722
  %v2776 = vsub.f32 1.0, %v2724
  %v2777 = vsub.f32 1.0, %v2726
  %v2778 = vsub.f32 1.0, %v2728
  %v2779 = vsub.f32 1.0, %v2730
  %v2780 = vsub.f32 1.0, %v2732
  %v2781 = vmul.f32 %v2773, %v2765
  %v2782 = vmul.f32 %v2774, %v2766
  %v2783 = vmul.f32 %v2775, %v2767
  %v2784 = vmul.f32 %v2776, %v2768
  %v2785 = vmul.f32 %v2777, %v2769
  %v2786 = vmul.f32 %v2778, %v2770
  %v2787 = vmul.f32 %v2779, %v2771
  %v2788 = vmul.f32 %v2780, %v2772
  %v2789 = vrot.slane %v2375, 4
  %v2790 = vrot.slane %v2375, 5
  %v2791 = vrot.slane %v2375, 6
  %v2792 = vrot.slane %v2375, 7
  %v2793 = vrot.slane %v2375, 1
  %v2794 = vrot.slane %v2375, 2
  %v2795 = vrot.slane %v2375, 3
  %v2804 = vmul.f32 %v2718, %v2789
  %v2805 = vmul.f32 %v2720, %v2790
  %v2806 = vmul.f32 %v2722, %v2791
  %v2807 = vmul.f32 %v2724, %v2792
  %v2808 = vmul.f32 %v2726, %v2375
  %v2809 = vmul.f32 %v2728, %v2793
  %v2810 = vmul.f32 %v2730, %v2794
  %v2811 = vmul.f32 %v2732, %v2795
  %v2812 = vadd.f32 %v2781, %v2804
  %v2813 = vadd.f32 %v2782, %v2805
  %v2814 = vadd.f32 %v2783, %v2806
  %v2815 = vadd.f32 %v2784, %v2807
  %v2816 = vadd.f32 %v2785, %v2808
  %v2817 = vadd.f32 %v2786, %v2809
  %v2818 = vadd.f32 %v2787, %v2810
  %v2819 = vadd.f32 %v2788, %v2811
  %s2820 = sadd.s32 %s463, 4
  %v2821 = vstv %s2820
  %vm2822 = vcmp.lt.s32.totalorder %v2821, %v462
  %v2823 = vsel %vm2822, 1, 0
  %2824 = vset.pattern.permute.xlu0 0
  %2825 = vperm.xlu0 %2824, %v2823
  %v2826 = vpop.permute.xlu0 %2825
  %vm2827 = vcmp.eq.s32.totalorder %v2826, 1
  %v2836 = vrot.slane %v2812, 4
  %v2837 = vrot.slane %v2813, 3
  %v2838 = vsel %vm926, %v2837, %v2836
  %v2839 = vrot.slane %v2814, 2
  %v2840 = vsel %vm929, %v2839, %v2838
  %v2841 = vrot.slane %v2815, 1
  %v2842 = vsel %vm932, %v2841, %v2840
  %v2843 = vsel %vm935, %v2816, %v2842
  %v2844 = vrot.slane %v2817, 7
  %v2845 = vsel %vm938, %v2844, %v2843
  %v2846 = vrot.slane %v2818, 6
  %v2847 = vsel %vm941, %v2846, %v2845
  %v2848 = vrot.slane %v2819, 5
  %v2849 = vsel %vm944, %v2848, %v2847
  %v2851 = vsel %vm2827, %v2849, %v2375
  %v2853 = vsel %vm465, %v2851, 0
  %2855 = vmatprep.subr.mxu0 0.0
  %2856 = vmatpush1.msra.mxu0 0.0
  %2857 = vmatprep.subr.mxu0 0.0
  %2858 = vmatpush1.msra.mxu0 0.0
  %2859 = vmatprep.subr.mxu0 0.0
  %2860 = vmatpush1.msra.mxu0 0.0
  %2861 = vmatprep.subr.mxu0 0.0
  %2862 = vmatpush1.msra.mxu0 0.0
  %2863 = vmatprep.subr.mxu0 0.0
  %2864 = vmatpush1.msra.mxu0 0.0
  %2865 = vmatprep.subr.mxu0 0.0
  %2866 = vmatpush1.msra.mxu0 0.0
  %2867 = vmatprep.subr.mxu0 0.0
  %2868 = vmatpush1.msra.mxu0 0.0
  %2869 = vmatprep.subr.mxu0 0.0
  %2870 = vmatpush1.msra.mxu0 0.0
  %2871 = vmatprep.subr.mxu0 0.0
  %2872 = vmatpush1.msra.mxu0 0.0
  %2873 = vmatprep.subr.mxu0 0.0
  %2874 = vmatpush1.msra.mxu0 0.0
  %2875 = vmatprep.subr.mxu0 0.0
  %2876 = vmatpush1.msra.mxu0 0.0
  %2877 = vmatprep.subr.mxu0 0.0
  %2878 = vmatpush1.msra.mxu0 0.0
  %2879 = vmatprep.subr.mxu0 0.0
  %2880 = vmatpush1.msra.mxu0 %v446
  %2881 = vmatprep.subr.mxu0 0.0
  %2882 = vmatpush1.msra.mxu0 %v445
  %2883 = vmatprep.subr.mxu0 0.0
  %2884 = vmatpush1.msra.mxu0 %v444
  %2885 = vmatprep.subr.mxu0 0.0
  %2886 = vmatpush1.msra.mxu0 %v443
  %2887 = vmatprep.subr.mxu0 0.0
  %2888 = vmatpush2.msra.mxu0 0.0
  %2889 = vmatprep.subr.mxu0 0.0
  %2890 = vmatpush2.msra.mxu0 0.0
  %2891 = vmatprep.subr.mxu0 0.0
  %2892 = vmatpush2.msra.mxu0 0.0
  %2893 = vmatprep.subr.mxu0 0.0
  %2894 = vmatpush2.msra.mxu0 0.0
  %2895 = vmatprep.subr.mxu0 0.0
  %2896 = vmatpush2.msra.mxu0 0.0
  %2897 = vmatprep.subr.mxu0 0.0
  %2898 = vmatpush2.msra.mxu0 0.0
  %2899 = vmatprep.subr.mxu0 0.0
  %2900 = vmatpush2.msra.mxu0 0.0
  %2901 = vmatprep.subr.mxu0 0.0
  %2902 = vmatpush2.msra.mxu0 0.0
  %2903 = vmatprep.subr.mxu0 0.0
  %2904 = vmatpush2.msra.mxu0 0.0
  %2905 = vmatprep.subr.mxu0 0.0
  %2906 = vmatpush2.msra.mxu0 0.0
  %2907 = vmatprep.subr.mxu0 0.0
  %2908 = vmatpush2.msra.mxu0 0.0
  %2909 = vmatprep.subr.mxu0 0.0
  %2910 = vmatpush2.msra.mxu0 0.0
  %2911 = vmatprep.subr.mxu0 0.0
  %2912 = vmatpush2.msra.mxu0 0.0
  %2913 = vmatprep.subr.mxu0 0.0
  %2914 = vmatpush2.msra.mxu0 0.0
  %2915 = vmatprep.subr.mxu0 0.0
  %2916 = vmatpush2.msra.mxu0 0.0
  %2917 = vmatprep.subr.mxu0 0.0
  %2918 = vmatpush2.msra.mxu0 0.0
  %2919 = vmatprep.mubr.f32.mxu0 0.0
  %2920 = vmatmul.mubr.f32.gmra.mxu0 %v2853
  %v2921 = vpop.f32.mrf.mxu0
  %v2922 = vadd.f32 0.0, %v2921
  %v2923 = vpop.f32.mrf.mxu0
  %2924 = vdwg.mxu0
  %2925 = vmatprep.subr.mxu0 0.0
  %2926 = vmatpush1.msra.mxu0 0.0
  %2927 = vmatprep.subr.mxu0 0.0
  %2928 = vmatpush1.msra.mxu0 0.0
  %2929 = vmatprep.subr.mxu0 0.0
  %2930 = vmatpush1.msra.mxu0 0.0
  %2931 = vmatprep.subr.mxu0 0.0
  %2932 = vmatpush1.msra.mxu0 0.0
  %2933 = vmatprep.subr.mxu0 0.0
  %2934 = vmatpush1.msra.mxu0 0.0
  %2935 = vmatprep.subr.mxu0 0.0
  %2936 = vmatpush1.msra.mxu0 0.0
  %2937 = vmatprep.subr.mxu0 0.0
  %2938 = vmatpush1.msra.mxu0 0.0
  %2939 = vmatprep.subr.mxu0 0.0
  %2940 = vmatpush1.msra.mxu0 0.0
  %2941 = vmatprep.subr.mxu0 0.0
  %2942 = vmatpush1.msra.mxu0 0.0
  %2943 = vmatprep.subr.mxu0 0.0
  %2944 = vmatpush1.msra.mxu0 0.0
  %2945 = vmatprep.subr.mxu0 0.0
  %2946 = vmatpush1.msra.mxu0 0.0
  %2947 = vmatprep.subr.mxu0 0.0
  %2948 = vmatpush1.msra.mxu0 0.0
  %2949 = vmatprep.subr.mxu0 0.0
  %2950 = vmatpush1.msra.mxu0 %v450
  %2951 = vmatprep.subr.mxu0 0.0
  %2952 = vmatpush1.msra.mxu0 %v449
  %2953 = vmatprep.subr.mxu0 0.0
  %2954 = vmatpush1.msra.mxu0 %v448
  %2955 = vmatprep.subr.mxu0 0.0
  %2956 = vmatpush1.msra.mxu0 %v447
  %2957 = vmatprep.subr.mxu0 0.0
  %2958 = vmatpush2.msra.mxu0 0.0
  %2959 = vmatprep.subr.mxu0 0.0
  %2960 = vmatpush2.msra.mxu0 0.0
  %2961 = vmatprep.subr.mxu0 0.0
  %2962 = vmatpush2.msra.mxu0 0.0
  %2963 = vmatprep.subr.mxu0 0.0
  %2964 = vmatpush2.msra.mxu0 0.0
  %2965 = vmatprep.subr.mxu0 0.0
  %2966 = vmatpush2.msra.mxu0 0.0
  %2967 = vmatprep.subr.mxu0 0.0
  %2968 = vmatpush2.msra.mxu0 0.0
  %2969 = vmatprep.subr.mxu0 0.0
  %2970 = vmatpush2.msra.mxu0 0.0
  %2971 = vmatprep.subr.mxu0 0.0
  %2972 = vmatpush2.msra.mxu0 0.0
  %2973 = vmatprep.subr.mxu0 0.0
  %2974 = vmatpush2.msra.mxu0 0.0
  %2975 = vmatprep.subr.mxu0 0.0
  %2976 = vmatpush2.msra.mxu0 0.0
  %2977 = vmatprep.subr.mxu0 0.0
  %2978 = vmatpush2.msra.mxu0 0.0
  %2979 = vmatprep.subr.mxu0 0.0
  %2980 = vmatpush2.msra.mxu0 0.0
  %2981 = vmatprep.subr.mxu0 0.0
  %2982 = vmatpush2.msra.mxu0 0.0
  %2983 = vmatprep.subr.mxu0 0.0
  %2984 = vmatpush2.msra.mxu0 0.0
  %2985 = vmatprep.subr.mxu0 0.0
  %2986 = vmatpush2.msra.mxu0 0.0
  %2987 = vmatprep.subr.mxu0 0.0
  %2988 = vmatpush2.msra.mxu0 0.0
  %2989 = vmatprep.mubr.f32.mxu0 0.0
  %2990 = vmatmul.mubr.f32.gmra.mxu0 %v2853
  %v2991 = vpop.f32.mrf.mxu0
  %v2992 = vadd.f32 0.0, %v2991
  %v2993 = vpop.f32.mrf.mxu0
  %2994 = vdwg.mxu0
  %2995 = vmatprep.subr.mxu0 0.0
  %2996 = vmatpush1.msra.mxu0 0.0
  %2997 = vmatprep.subr.mxu0 0.0
  %2998 = vmatpush1.msra.mxu0 0.0
  %2999 = vmatprep.subr.mxu0 0.0
  %3000 = vmatpush1.msra.mxu0 0.0
  %3001 = vmatprep.subr.mxu0 0.0
  %3002 = vmatpush1.msra.mxu0 0.0
  %3003 = vmatprep.subr.mxu0 0.0
  %3004 = vmatpush1.msra.mxu0 0.0
  %3005 = vmatprep.subr.mxu0 0.0
  %3006 = vmatpush1.msra.mxu0 0.0
  %3007 = vmatprep.subr.mxu0 0.0
  %3008 = vmatpush1.msra.mxu0 0.0
  %3009 = vmatprep.subr.mxu0 0.0
  %3010 = vmatpush1.msra.mxu0 0.0
  %3011 = vmatprep.subr.mxu0 0.0
  %3012 = vmatpush1.msra.mxu0 0.0
  %3013 = vmatprep.subr.mxu0 0.0
  %3014 = vmatpush1.msra.mxu0 0.0
  %3015 = vmatprep.subr.mxu0 0.0
  %3016 = vmatpush1.msra.mxu0 0.0
  %3017 = vmatprep.subr.mxu0 0.0
  %3018 = vmatpush1.msra.mxu0 0.0
  %3019 = vmatprep.subr.mxu0 0.0
  %3020 = vmatpush1.msra.mxu0 %v454
  %3021 = vmatprep.subr.mxu0 0.0
  %3022 = vmatpush1.msra.mxu0 %v453
  %3023 = vmatprep.subr.mxu0 0.0
  %3024 = vmatpush1.msra.mxu0 %v452
  %3025 = vmatprep.subr.mxu0 0.0
  %3026 = vmatpush1.msra.mxu0 %v451
  %3027 = vmatprep.subr.mxu0 0.0
  %3028 = vmatpush2.msra.mxu0 0.0
  %3029 = vmatprep.subr.mxu0 0.0
  %3030 = vmatpush2.msra.mxu0 0.0
  %3031 = vmatprep.subr.mxu0 0.0
  %3032 = vmatpush2.msra.mxu0 0.0
  %3033 = vmatprep.subr.mxu0 0.0
  %3034 = vmatpush2.msra.mxu0 0.0
  %3035 = vmatprep.subr.mxu0 0.0
  %3036 = vmatpush2.msra.mxu0 0.0
  %3037 = vmatprep.subr.mxu0 0.0
  %3038 = vmatpush2.msra.mxu0 0.0
  %3039 = vmatprep.subr.mxu0 0.0
  %3040 = vmatpush2.msra.mxu0 0.0
  %3041 = vmatprep.subr.mxu0 0.0
  %3042 = vmatpush2.msra.mxu0 0.0
  %3043 = vmatprep.subr.mxu0 0.0
  %3044 = vmatpush2.msra.mxu0 0.0
  %3045 = vmatprep.subr.mxu0 0.0
  %3046 = vmatpush2.msra.mxu0 0.0
  %3047 = vmatprep.subr.mxu0 0.0
  %3048 = vmatpush2.msra.mxu0 0.0
  %3049 = vmatprep.subr.mxu0 0.0
  %3050 = vmatpush2.msra.mxu0 0.0
  %3051 = vmatprep.subr.mxu0 0.0
  %3052 = vmatpush2.msra.mxu0 0.0
  %3053 = vmatprep.subr.mxu0 0.0
  %3054 = vmatpush2.msra.mxu0 0.0
  %3055 = vmatprep.subr.mxu0 0.0
  %3056 = vmatpush2.msra.mxu0 0.0
  %3057 = vmatprep.subr.mxu0 0.0
  %3058 = vmatpush2.msra.mxu0 0.0
  %3059 = vmatprep.mubr.f32.mxu0 0.0
  %3060 = vmatmul.mubr.f32.gmra.mxu0 %v2853
  %v3061 = vpop.f32.mrf.mxu0
  %v3062 = vadd.f32 %v460, %v3061
  %v3063 = vpop.f32.mrf.mxu0
  %3064 = vdwg.mxu0
  %v3066 = vrot.slane %v2922, 3
  %v3067 = vrot.slane %v2922, 4
  %v3068 = vrot.slane %v2922, 5
  %v3069 = vrot.slane %v2922, 6
  %v3070 = vrot.slane %v2922, 7
  %v3071 = vrot.slane %v2922, 1
  %v3072 = vrot.slane %v2922, 2
  %v3081 = vadd.f32 %v173, %v3066
  %v3082 = vadd.f32 %v178, %v3067
  %v3083 = vadd.f32 %v183, %v3068
  %v3084 = vadd.f32 %v188, %v3069
  %v3085 = vadd.f32 %v193, %v3070
  %v3086 = vadd.f32 %v198, %v2922
  %v3087 = vadd.f32 %v203, %v3071
  %v3088 = vadd.f32 %v208, %v3072
  %v3089 = vxor.u32 %v3081, 2147483648
  %v3090 = vxor.u32 %v3082, 2147483648
  %v3091 = vxor.u32 %v3083, 2147483648
  %v3092 = vxor.u32 %v3084, 2147483648
  %v3093 = vxor.u32 %v3085, 2147483648
  %v3094 = vxor.u32 %v3086, 2147483648
  %v3095 = vxor.u32 %v3087, 2147483648
  %v3096 = vxor.u32 %v3088, 2147483648
  %v3097 = vmul.f32 %v3089, 1.442695
  %v3098 = vpow.pop %v3097
  %v3099 = vmul.f32 %v3090, 1.442695
  %v3100 = vpow.pop %v3099
  %v3101 = vmul.f32 %v3091, 1.442695
  %v3102 = vpow.pop %v3101
  %v3103 = vmul.f32 %v3092, 1.442695
  %v3104 = vpow.pop %v3103
  %v3105 = vmul.f32 %v3093, 1.442695
  %v3106 = vpow.pop %v3105
  %v3107 = vmul.f32 %v3094, 1.442695
  %v3108 = vpow.pop %v3107
  %v3109 = vmul.f32 %v3095, 1.442695
  %v3110 = vpow.pop %v3109
  %v3111 = vmul.f32 %v3096, 1.442695
  %v3112 = vpow.pop %v3111
  %v3113 = vadd.f32 %v3098, 1.0
  %v3114 = vadd.f32 %v3100, 1.0
  %v3115 = vadd.f32 %v3102, 1.0
  %v3116 = vadd.f32 %v3104, 1.0
  %v3117 = vadd.f32 %v3106, 1.0
  %v3118 = vadd.f32 %v3108, 1.0
  %v3119 = vadd.f32 %v3110, 1.0
  %v3120 = vadd.f32 %v3112, 1.0
  %v3121 = vrcp.pop %v3113
  %v3122 = vmul.f32 1.0, %v3121
  %v3123 = vrcp.pop %v3114
  %v3124 = vmul.f32 1.0, %v3123
  %v3125 = vrcp.pop %v3115
  %v3126 = vmul.f32 1.0, %v3125
  %v3127 = vrcp.pop %v3116
  %v3128 = vmul.f32 1.0, %v3127
  %v3129 = vrcp.pop %v3117
  %v3130 = vmul.f32 1.0, %v3129
  %v3131 = vrcp.pop %v3118
  %v3132 = vmul.f32 1.0, %v3131
  %v3133 = vrcp.pop %v3119
  %v3134 = vmul.f32 1.0, %v3133
  %v3135 = vrcp.pop %v3120
  %v3136 = vmul.f32 1.0, %v3135
  %v3138 = vrot.slane %v2992, 3
  %v3139 = vrot.slane %v2992, 4
  %v3140 = vrot.slane %v2992, 5
  %v3141 = vrot.slane %v2992, 6
  %v3142 = vrot.slane %v2992, 7
  %v3143 = vrot.slane %v2992, 1
  %v3144 = vrot.slane %v2992, 2
  %v3153 = vadd.f32 %v289, %v3138
  %v3154 = vadd.f32 %v294, %v3139
  %v3155 = vadd.f32 %v299, %v3140
  %v3156 = vadd.f32 %v304, %v3141
  %v3157 = vadd.f32 %v309, %v3142
  %v3158 = vadd.f32 %v314, %v2992
  %v3159 = vadd.f32 %v319, %v3143
  %v3160 = vadd.f32 %v324, %v3144
  %v3161 = vxor.u32 %v3153, 2147483648
  %v3162 = vxor.u32 %v3154, 2147483648
  %v3163 = vxor.u32 %v3155, 2147483648
  %v3164 = vxor.u32 %v3156, 2147483648
  %v3165 = vxor.u32 %v3157, 2147483648
  %v3166 = vxor.u32 %v3158, 2147483648
  %v3167 = vxor.u32 %v3159, 2147483648
  %v3168 = vxor.u32 %v3160, 2147483648
  %v3169 = vmul.f32 %v3161, 1.442695
  %v3170 = vpow.pop %v3169
  %v3171 = vmul.f32 %v3162, 1.442695
  %v3172 = vpow.pop %v3171
  %v3173 = vmul.f32 %v3163, 1.442695
  %v3174 = vpow.pop %v3173
  %v3175 = vmul.f32 %v3164, 1.442695
  %v3176 = vpow.pop %v3175
  %v3177 = vmul.f32 %v3165, 1.442695
  %v3178 = vpow.pop %v3177
  %v3179 = vmul.f32 %v3166, 1.442695
  %v3180 = vpow.pop %v3179
  %v3181 = vmul.f32 %v3167, 1.442695
  %v3182 = vpow.pop %v3181
  %v3183 = vmul.f32 %v3168, 1.442695
  %v3184 = vpow.pop %v3183
  %v3185 = vadd.f32 %v3170, 1.0
  %v3186 = vadd.f32 %v3172, 1.0
  %v3187 = vadd.f32 %v3174, 1.0
  %v3188 = vadd.f32 %v3176, 1.0
  %v3189 = vadd.f32 %v3178, 1.0
  %v3190 = vadd.f32 %v3180, 1.0
  %v3191 = vadd.f32 %v3182, 1.0
  %v3192 = vadd.f32 %v3184, 1.0
  %v3193 = vrcp.pop %v3185
  %v3194 = vmul.f32 1.0, %v3193
  %v3195 = vrcp.pop %v3186
  %v3196 = vmul.f32 1.0, %v3195
  %v3197 = vrcp.pop %v3187
  %v3198 = vmul.f32 1.0, %v3197
  %v3199 = vrcp.pop %v3188
  %v3200 = vmul.f32 1.0, %v3199
  %v3201 = vrcp.pop %v3189
  %v3202 = vmul.f32 1.0, %v3201
  %v3203 = vrcp.pop %v3190
  %v3204 = vmul.f32 1.0, %v3203
  %v3205 = vrcp.pop %v3191
  %v3206 = vmul.f32 1.0, %v3205
  %v3207 = vrcp.pop %v3192
  %v3208 = vmul.f32 1.0, %v3207
  %v3210 = vrot.slane %v3062, 3
  %v3211 = vrot.slane %v3062, 4
  %v3212 = vrot.slane %v3062, 5
  %v3213 = vrot.slane %v3062, 6
  %v3214 = vrot.slane %v3062, 7
  %v3215 = vrot.slane %v3062, 1
  %v3216 = vrot.slane %v3062, 2
  %v3225 = vmul.f32 %v3122, %v3210
  %v3226 = vmul.f32 %v3124, %v3211
  %v3227 = vmul.f32 %v3126, %v3212
  %v3228 = vmul.f32 %v3128, %v3213
  %v3229 = vmul.f32 %v3130, %v3214
  %v3230 = vmul.f32 %v3132, %v3062
  %v3231 = vmul.f32 %v3134, %v3215
  %v3232 = vmul.f32 %v3136, %v3216
  %v3233 = vadd.f32 %v405, %v3225
  %v3234 = vadd.f32 %v410, %v3226
  %v3235 = vadd.f32 %v415, %v3227
  %v3236 = vadd.f32 %v420, %v3228
  %v3237 = vadd.f32 %v425, %v3229
  %v3238 = vadd.f32 %v430, %v3230
  %v3239 = vadd.f32 %v435, %v3231
  %v3240 = vadd.f32 %v440, %v3232
  %v3241 = vtanh.pop %v3233
  %v3242 = vtanh.pop %v3234
  %v3243 = vtanh.pop %v3235
  %v3244 = vtanh.pop %v3236
  %v3245 = vtanh.pop %v3237
  %v3246 = vtanh.pop %v3238
  %v3247 = vtanh.pop %v3239
  %v3248 = vtanh.pop %v3240
  %v3249 = vsub.f32 1.0, %v3194
  %v3250 = vsub.f32 1.0, %v3196
  %v3251 = vsub.f32 1.0, %v3198
  %v3252 = vsub.f32 1.0, %v3200
  %v3253 = vsub.f32 1.0, %v3202
  %v3254 = vsub.f32 1.0, %v3204
  %v3255 = vsub.f32 1.0, %v3206
  %v3256 = vsub.f32 1.0, %v3208
  %v3257 = vmul.f32 %v3249, %v3241
  %v3258 = vmul.f32 %v3250, %v3242
  %v3259 = vmul.f32 %v3251, %v3243
  %v3260 = vmul.f32 %v3252, %v3244
  %v3261 = vmul.f32 %v3253, %v3245
  %v3262 = vmul.f32 %v3254, %v3246
  %v3263 = vmul.f32 %v3255, %v3247
  %v3264 = vmul.f32 %v3256, %v3248
  %v3265 = vrot.slane %v2851, 3
  %v3266 = vrot.slane %v2851, 4
  %v3267 = vrot.slane %v2851, 5
  %v3268 = vrot.slane %v2851, 6
  %v3269 = vrot.slane %v2851, 7
  %v3270 = vrot.slane %v2851, 1
  %v3271 = vrot.slane %v2851, 2
  %v3280 = vmul.f32 %v3194, %v3265
  %v3281 = vmul.f32 %v3196, %v3266
  %v3282 = vmul.f32 %v3198, %v3267
  %v3283 = vmul.f32 %v3200, %v3268
  %v3284 = vmul.f32 %v3202, %v3269
  %v3285 = vmul.f32 %v3204, %v2851
  %v3286 = vmul.f32 %v3206, %v3270
  %v3287 = vmul.f32 %v3208, %v3271
  %v3288 = vadd.f32 %v3257, %v3280
  %v3289 = vadd.f32 %v3258, %v3281
  %v3290 = vadd.f32 %v3259, %v3282
  %v3291 = vadd.f32 %v3260, %v3283
  %v3292 = vadd.f32 %v3261, %v3284
  %v3293 = vadd.f32 %v3262, %v3285
  %v3294 = vadd.f32 %v3263, %v3286
  %v3295 = vadd.f32 %v3264, %v3287
  %s3296 = sadd.s32 %s463, 5
  %v3297 = vstv %s3296
  %vm3298 = vcmp.lt.s32.totalorder %v3297, %v462
  %v3299 = vsel %vm3298, 1, 0
  %3300 = vset.pattern.permute.xlu0 0
  %3301 = vperm.xlu0 %3300, %v3299
  %v3302 = vpop.permute.xlu0 %3301
  %vm3303 = vcmp.eq.s32.totalorder %v3302, 1
  %v3312 = vrot.slane %v3288, 5
  %v3313 = vrot.slane %v3289, 4
  %v3314 = vsel %vm926, %v3313, %v3312
  %v3315 = vrot.slane %v3290, 3
  %v3316 = vsel %vm929, %v3315, %v3314
  %v3317 = vrot.slane %v3291, 2
  %v3318 = vsel %vm932, %v3317, %v3316
  %v3319 = vrot.slane %v3292, 1
  %v3320 = vsel %vm935, %v3319, %v3318
  %v3321 = vsel %vm938, %v3293, %v3320
  %v3322 = vrot.slane %v3294, 7
  %v3323 = vsel %vm941, %v3322, %v3321
  %v3324 = vrot.slane %v3295, 6
  %v3325 = vsel %vm944, %v3324, %v3323
  %v3327 = vsel %vm3303, %v3325, %v2851
  %v3329 = vsel %vm465, %v3327, 0
  %3331 = vmatprep.subr.mxu0 0.0
  %3332 = vmatpush1.msra.mxu0 0.0
  %3333 = vmatprep.subr.mxu0 0.0
  %3334 = vmatpush1.msra.mxu0 0.0
  %3335 = vmatprep.subr.mxu0 0.0
  %3336 = vmatpush1.msra.mxu0 0.0
  %3337 = vmatprep.subr.mxu0 0.0
  %3338 = vmatpush1.msra.mxu0 0.0
  %3339 = vmatprep.subr.mxu0 0.0
  %3340 = vmatpush1.msra.mxu0 0.0
  %3341 = vmatprep.subr.mxu0 0.0
  %3342 = vmatpush1.msra.mxu0 0.0
  %3343 = vmatprep.subr.mxu0 0.0
  %3344 = vmatpush1.msra.mxu0 0.0
  %3345 = vmatprep.subr.mxu0 0.0
  %3346 = vmatpush1.msra.mxu0 0.0
  %3347 = vmatprep.subr.mxu0 0.0
  %3348 = vmatpush1.msra.mxu0 0.0
  %3349 = vmatprep.subr.mxu0 0.0
  %3350 = vmatpush1.msra.mxu0 0.0
  %3351 = vmatprep.subr.mxu0 0.0
  %3352 = vmatpush1.msra.mxu0 0.0
  %3353 = vmatprep.subr.mxu0 0.0
  %3354 = vmatpush1.msra.mxu0 0.0
  %3355 = vmatprep.subr.mxu0 0.0
  %3356 = vmatpush1.msra.mxu0 %v446
  %3357 = vmatprep.subr.mxu0 0.0
  %3358 = vmatpush1.msra.mxu0 %v445
  %3359 = vmatprep.subr.mxu0 0.0
  %3360 = vmatpush1.msra.mxu0 %v444
  %3361 = vmatprep.subr.mxu0 0.0
  %3362 = vmatpush1.msra.mxu0 %v443
  %3363 = vmatprep.subr.mxu0 0.0
  %3364 = vmatpush2.msra.mxu0 0.0
  %3365 = vmatprep.subr.mxu0 0.0
  %3366 = vmatpush2.msra.mxu0 0.0
  %3367 = vmatprep.subr.mxu0 0.0
  %3368 = vmatpush2.msra.mxu0 0.0
  %3369 = vmatprep.subr.mxu0 0.0
  %3370 = vmatpush2.msra.mxu0 0.0
  %3371 = vmatprep.subr.mxu0 0.0
  %3372 = vmatpush2.msra.mxu0 0.0
  %3373 = vmatprep.subr.mxu0 0.0
  %3374 = vmatpush2.msra.mxu0 0.0
  %3375 = vmatprep.subr.mxu0 0.0
  %3376 = vmatpush2.msra.mxu0 0.0
  %3377 = vmatprep.subr.mxu0 0.0
  %3378 = vmatpush2.msra.mxu0 0.0
  %3379 = vmatprep.subr.mxu0 0.0
  %3380 = vmatpush2.msra.mxu0 0.0
  %3381 = vmatprep.subr.mxu0 0.0
  %3382 = vmatpush2.msra.mxu0 0.0
  %3383 = vmatprep.subr.mxu0 0.0
  %3384 = vmatpush2.msra.mxu0 0.0
  %3385 = vmatprep.subr.mxu0 0.0
  %3386 = vmatpush2.msra.mxu0 0.0
  %3387 = vmatprep.subr.mxu0 0.0
  %3388 = vmatpush2.msra.mxu0 0.0
  %3389 = vmatprep.subr.mxu0 0.0
  %3390 = vmatpush2.msra.mxu0 0.0
  %3391 = vmatprep.subr.mxu0 0.0
  %3392 = vmatpush2.msra.mxu0 0.0
  %3393 = vmatprep.subr.mxu0 0.0
  %3394 = vmatpush2.msra.mxu0 0.0
  %3395 = vmatprep.mubr.f32.mxu0 0.0
  %3396 = vmatmul.mubr.f32.gmra.mxu0 %v3329
  %v3397 = vpop.f32.mrf.mxu0
  %v3398 = vadd.f32 0.0, %v3397
  %v3399 = vpop.f32.mrf.mxu0
  %3400 = vdwg.mxu0
  %3401 = vmatprep.subr.mxu0 0.0
  %3402 = vmatpush1.msra.mxu0 0.0
  %3403 = vmatprep.subr.mxu0 0.0
  %3404 = vmatpush1.msra.mxu0 0.0
  %3405 = vmatprep.subr.mxu0 0.0
  %3406 = vmatpush1.msra.mxu0 0.0
  %3407 = vmatprep.subr.mxu0 0.0
  %3408 = vmatpush1.msra.mxu0 0.0
  %3409 = vmatprep.subr.mxu0 0.0
  %3410 = vmatpush1.msra.mxu0 0.0
  %3411 = vmatprep.subr.mxu0 0.0
  %3412 = vmatpush1.msra.mxu0 0.0
  %3413 = vmatprep.subr.mxu0 0.0
  %3414 = vmatpush1.msra.mxu0 0.0
  %3415 = vmatprep.subr.mxu0 0.0
  %3416 = vmatpush1.msra.mxu0 0.0
  %3417 = vmatprep.subr.mxu0 0.0
  %3418 = vmatpush1.msra.mxu0 0.0
  %3419 = vmatprep.subr.mxu0 0.0
  %3420 = vmatpush1.msra.mxu0 0.0
  %3421 = vmatprep.subr.mxu0 0.0
  %3422 = vmatpush1.msra.mxu0 0.0
  %3423 = vmatprep.subr.mxu0 0.0
  %3424 = vmatpush1.msra.mxu0 0.0
  %3425 = vmatprep.subr.mxu0 0.0
  %3426 = vmatpush1.msra.mxu0 %v450
  %3427 = vmatprep.subr.mxu0 0.0
  %3428 = vmatpush1.msra.mxu0 %v449
  %3429 = vmatprep.subr.mxu0 0.0
  %3430 = vmatpush1.msra.mxu0 %v448
  %3431 = vmatprep.subr.mxu0 0.0
  %3432 = vmatpush1.msra.mxu0 %v447
  %3433 = vmatprep.subr.mxu0 0.0
  %3434 = vmatpush2.msra.mxu0 0.0
  %3435 = vmatprep.subr.mxu0 0.0
  %3436 = vmatpush2.msra.mxu0 0.0
  %3437 = vmatprep.subr.mxu0 0.0
  %3438 = vmatpush2.msra.mxu0 0.0
  %3439 = vmatprep.subr.mxu0 0.0
  %3440 = vmatpush2.msra.mxu0 0.0
  %3441 = vmatprep.subr.mxu0 0.0
  %3442 = vmatpush2.msra.mxu0 0.0
  %3443 = vmatprep.subr.mxu0 0.0
  %3444 = vmatpush2.msra.mxu0 0.0
  %3445 = vmatprep.subr.mxu0 0.0
  %3446 = vmatpush2.msra.mxu0 0.0
  %3447 = vmatprep.subr.mxu0 0.0
  %3448 = vmatpush2.msra.mxu0 0.0
  %3449 = vmatprep.subr.mxu0 0.0
  %3450 = vmatpush2.msra.mxu0 0.0
  %3451 = vmatprep.subr.mxu0 0.0
  %3452 = vmatpush2.msra.mxu0 0.0
  %3453 = vmatprep.subr.mxu0 0.0
  %3454 = vmatpush2.msra.mxu0 0.0
  %3455 = vmatprep.subr.mxu0 0.0
  %3456 = vmatpush2.msra.mxu0 0.0
  %3457 = vmatprep.subr.mxu0 0.0
  %3458 = vmatpush2.msra.mxu0 0.0
  %3459 = vmatprep.subr.mxu0 0.0
  %3460 = vmatpush2.msra.mxu0 0.0
  %3461 = vmatprep.subr.mxu0 0.0
  %3462 = vmatpush2.msra.mxu0 0.0
  %3463 = vmatprep.subr.mxu0 0.0
  %3464 = vmatpush2.msra.mxu0 0.0
  %3465 = vmatprep.mubr.f32.mxu0 0.0
  %3466 = vmatmul.mubr.f32.gmra.mxu0 %v3329
  %v3467 = vpop.f32.mrf.mxu0
  %v3468 = vadd.f32 0.0, %v3467
  %v3469 = vpop.f32.mrf.mxu0
  %3470 = vdwg.mxu0
  %3471 = vmatprep.subr.mxu0 0.0
  %3472 = vmatpush1.msra.mxu0 0.0
  %3473 = vmatprep.subr.mxu0 0.0
  %3474 = vmatpush1.msra.mxu0 0.0
  %3475 = vmatprep.subr.mxu0 0.0
  %3476 = vmatpush1.msra.mxu0 0.0
  %3477 = vmatprep.subr.mxu0 0.0
  %3478 = vmatpush1.msra.mxu0 0.0
  %3479 = vmatprep.subr.mxu0 0.0
  %3480 = vmatpush1.msra.mxu0 0.0
  %3481 = vmatprep.subr.mxu0 0.0
  %3482 = vmatpush1.msra.mxu0 0.0
  %3483 = vmatprep.subr.mxu0 0.0
  %3484 = vmatpush1.msra.mxu0 0.0
  %3485 = vmatprep.subr.mxu0 0.0
  %3486 = vmatpush1.msra.mxu0 0.0
  %3487 = vmatprep.subr.mxu0 0.0
  %3488 = vmatpush1.msra.mxu0 0.0
  %3489 = vmatprep.subr.mxu0 0.0
  %3490 = vmatpush1.msra.mxu0 0.0
  %3491 = vmatprep.subr.mxu0 0.0
  %3492 = vmatpush1.msra.mxu0 0.0
  %3493 = vmatprep.subr.mxu0 0.0
  %3494 = vmatpush1.msra.mxu0 0.0
  %3495 = vmatprep.subr.mxu0 0.0
  %3496 = vmatpush1.msra.mxu0 %v454
  %3497 = vmatprep.subr.mxu0 0.0
  %3498 = vmatpush1.msra.mxu0 %v453
  %3499 = vmatprep.subr.mxu0 0.0
  %3500 = vmatpush1.msra.mxu0 %v452
  %3501 = vmatprep.subr.mxu0 0.0
  %3502 = vmatpush1.msra.mxu0 %v451
  %3503 = vmatprep.subr.mxu0 0.0
  %3504 = vmatpush2.msra.mxu0 0.0
  %3505 = vmatprep.subr.mxu0 0.0
  %3506 = vmatpush2.msra.mxu0 0.0
  %3507 = vmatprep.subr.mxu0 0.0
  %3508 = vmatpush2.msra.mxu0 0.0
  %3509 = vmatprep.subr.mxu0 0.0
  %3510 = vmatpush2.msra.mxu0 0.0
  %3511 = vmatprep.subr.mxu0 0.0
  %3512 = vmatpush2.msra.mxu0 0.0
  %3513 = vmatprep.subr.mxu0 0.0
  %3514 = vmatpush2.msra.mxu0 0.0
  %3515 = vmatprep.subr.mxu0 0.0
  %3516 = vmatpush2.msra.mxu0 0.0
  %3517 = vmatprep.subr.mxu0 0.0
  %3518 = vmatpush2.msra.mxu0 0.0
  %3519 = vmatprep.subr.mxu0 0.0
  %3520 = vmatpush2.msra.mxu0 0.0
  %3521 = vmatprep.subr.mxu0 0.0
  %3522 = vmatpush2.msra.mxu0 0.0
  %3523 = vmatprep.subr.mxu0 0.0
  %3524 = vmatpush2.msra.mxu0 0.0
  %3525 = vmatprep.subr.mxu0 0.0
  %3526 = vmatpush2.msra.mxu0 0.0
  %3527 = vmatprep.subr.mxu0 0.0
  %3528 = vmatpush2.msra.mxu0 0.0
  %3529 = vmatprep.subr.mxu0 0.0
  %3530 = vmatpush2.msra.mxu0 0.0
  %3531 = vmatprep.subr.mxu0 0.0
  %3532 = vmatpush2.msra.mxu0 0.0
  %3533 = vmatprep.subr.mxu0 0.0
  %3534 = vmatpush2.msra.mxu0 0.0
  %3535 = vmatprep.mubr.f32.mxu0 0.0
  %3536 = vmatmul.mubr.f32.gmra.mxu0 %v3329
  %v3537 = vpop.f32.mrf.mxu0
  %v3538 = vadd.f32 %v460, %v3537
  %v3539 = vpop.f32.mrf.mxu0
  %3540 = vdwg.mxu0
  %v3542 = vrot.slane %v3398, 2
  %v3543 = vrot.slane %v3398, 3
  %v3544 = vrot.slane %v3398, 4
  %v3545 = vrot.slane %v3398, 5
  %v3546 = vrot.slane %v3398, 6
  %v3547 = vrot.slane %v3398, 7
  %v3548 = vrot.slane %v3398, 1
  %v3557 = vadd.f32 %v173, %v3542
  %v3558 = vadd.f32 %v178, %v3543
  %v3559 = vadd.f32 %v183, %v3544
  %v3560 = vadd.f32 %v188, %v3545
  %v3561 = vadd.f32 %v193, %v3546
  %v3562 = vadd.f32 %v198, %v3547
  %v3563 = vadd.f32 %v203, %v3398
  %v3564 = vadd.f32 %v208, %v3548
  %v3565 = vxor.u32 %v3557, 2147483648
  %v3566 = vxor.u32 %v3558, 2147483648
  %v3567 = vxor.u32 %v3559, 2147483648
  %v3568 = vxor.u32 %v3560, 2147483648
  %v3569 = vxor.u32 %v3561, 2147483648
  %v3570 = vxor.u32 %v3562, 2147483648
  %v3571 = vxor.u32 %v3563, 2147483648
  %v3572 = vxor.u32 %v3564, 2147483648
  %v3573 = vmul.f32 %v3565, 1.442695
  %v3574 = vpow.pop %v3573
  %v3575 = vmul.f32 %v3566, 1.442695
  %v3576 = vpow.pop %v3575
  %v3577 = vmul.f32 %v3567, 1.442695
  %v3578 = vpow.pop %v3577
  %v3579 = vmul.f32 %v3568, 1.442695
  %v3580 = vpow.pop %v3579
  %v3581 = vmul.f32 %v3569, 1.442695
  %v3582 = vpow.pop %v3581
  %v3583 = vmul.f32 %v3570, 1.442695
  %v3584 = vpow.pop %v3583
  %v3585 = vmul.f32 %v3571, 1.442695
  %v3586 = vpow.pop %v3585
  %v3587 = vmul.f32 %v3572, 1.442695
  %v3588 = vpow.pop %v3587
  %v3589 = vadd.f32 %v3574, 1.0
  %v3590 = vadd.f32 %v3576, 1.0
  %v3591 = vadd.f32 %v3578, 1.0
  %v3592 = vadd.f32 %v3580, 1.0
  %v3593 = vadd.f32 %v3582, 1.0
  %v3594 = vadd.f32 %v3584, 1.0
  %v3595 = vadd.f32 %v3586, 1.0
  %v3596 = vadd.f32 %v3588, 1.0
  %v3597 = vrcp.pop %v3589
  %v3598 = vmul.f32 1.0, %v3597
  %v3599 = vrcp.pop %v3590
  %v3600 = vmul.f32 1.0, %v3599
  %v3601 = vrcp.pop %v3591
  %v3602 = vmul.f32 1.0, %v3601
  %v3603 = vrcp.pop %v3592
  %v3604 = vmul.f32 1.0, %v3603
  %v3605 = vrcp.pop %v3593
  %v3606 = vmul.f32 1.0, %v3605
  %v3607 = vrcp.pop %v3594
  %v3608 = vmul.f32 1.0, %v3607
  %v3609 = vrcp.pop %v3595
  %v3610 = vmul.f32 1.0, %v3609
  %v3611 = vrcp.pop %v3596
  %v3612 = vmul.f32 1.0, %v3611
  %v3614 = vrot.slane %v3468, 2
  %v3615 = vrot.slane %v3468, 3
  %v3616 = vrot.slane %v3468, 4
  %v3617 = vrot.slane %v3468, 5
  %v3618 = vrot.slane %v3468, 6
  %v3619 = vrot.slane %v3468, 7
  %v3620 = vrot.slane %v3468, 1
  %v3629 = vadd.f32 %v289, %v3614
  %v3630 = vadd.f32 %v294, %v3615
  %v3631 = vadd.f32 %v299, %v3616
  %v3632 = vadd.f32 %v304, %v3617
  %v3633 = vadd.f32 %v309, %v3618
  %v3634 = vadd.f32 %v314, %v3619
  %v3635 = vadd.f32 %v319, %v3468
  %v3636 = vadd.f32 %v324, %v3620
  %v3637 = vxor.u32 %v3629, 2147483648
  %v3638 = vxor.u32 %v3630, 2147483648
  %v3639 = vxor.u32 %v3631, 2147483648
  %v3640 = vxor.u32 %v3632, 2147483648
  %v3641 = vxor.u32 %v3633, 2147483648
  %v3642 = vxor.u32 %v3634, 2147483648
  %v3643 = vxor.u32 %v3635, 2147483648
  %v3644 = vxor.u32 %v3636, 2147483648
  %v3645 = vmul.f32 %v3637, 1.442695
  %v3646 = vpow.pop %v3645
  %v3647 = vmul.f32 %v3638, 1.442695
  %v3648 = vpow.pop %v3647
  %v3649 = vmul.f32 %v3639, 1.442695
  %v3650 = vpow.pop %v3649
  %v3651 = vmul.f32 %v3640, 1.442695
  %v3652 = vpow.pop %v3651
  %v3653 = vmul.f32 %v3641, 1.442695
  %v3654 = vpow.pop %v3653
  %v3655 = vmul.f32 %v3642, 1.442695
  %v3656 = vpow.pop %v3655
  %v3657 = vmul.f32 %v3643, 1.442695
  %v3658 = vpow.pop %v3657
  %v3659 = vmul.f32 %v3644, 1.442695
  %v3660 = vpow.pop %v3659
  %v3661 = vadd.f32 %v3646, 1.0
  %v3662 = vadd.f32 %v3648, 1.0
  %v3663 = vadd.f32 %v3650, 1.0
  %v3664 = vadd.f32 %v3652, 1.0
  %v3665 = vadd.f32 %v3654, 1.0
  %v3666 = vadd.f32 %v3656, 1.0
  %v3667 = vadd.f32 %v3658, 1.0
  %v3668 = vadd.f32 %v3660, 1.0
  %v3669 = vrcp.pop %v3661
  %v3670 = vmul.f32 1.0, %v3669
  %v3671 = vrcp.pop %v3662
  %v3672 = vmul.f32 1.0, %v3671
  %v3673 = vrcp.pop %v3663
  %v3674 = vmul.f32 1.0, %v3673
  %v3675 = vrcp.pop %v3664
  %v3676 = vmul.f32 1.0, %v3675
  %v3677 = vrcp.pop %v3665
  %v3678 = vmul.f32 1.0, %v3677
  %v3679 = vrcp.pop %v3666
  %v3680 = vmul.f32 1.0, %v3679
  %v3681 = vrcp.pop %v3667
  %v3682 = vmul.f32 1.0, %v3681
  %v3683 = vrcp.pop %v3668
  %v3684 = vmul.f32 1.0, %v3683
  %v3686 = vrot.slane %v3538, 2
  %v3687 = vrot.slane %v3538, 3
  %v3688 = vrot.slane %v3538, 4
  %v3689 = vrot.slane %v3538, 5
  %v3690 = vrot.slane %v3538, 6
  %v3691 = vrot.slane %v3538, 7
  %v3692 = vrot.slane %v3538, 1
  %v3701 = vmul.f32 %v3598, %v3686
  %v3702 = vmul.f32 %v3600, %v3687
  %v3703 = vmul.f32 %v3602, %v3688
  %v3704 = vmul.f32 %v3604, %v3689
  %v3705 = vmul.f32 %v3606, %v3690
  %v3706 = vmul.f32 %v3608, %v3691
  %v3707 = vmul.f32 %v3610, %v3538
  %v3708 = vmul.f32 %v3612, %v3692
  %v3709 = vadd.f32 %v405, %v3701
  %v3710 = vadd.f32 %v410, %v3702
  %v3711 = vadd.f32 %v415, %v3703
  %v3712 = vadd.f32 %v420, %v3704
  %v3713 = vadd.f32 %v425, %v3705
  %v3714 = vadd.f32 %v430, %v3706
  %v3715 = vadd.f32 %v435, %v3707
  %v3716 = vadd.f32 %v440, %v3708
  %v3717 = vtanh.pop %v3709
  %v3718 = vtanh.pop %v3710
  %v3719 = vtanh.pop %v3711
  %v3720 = vtanh.pop %v3712
  %v3721 = vtanh.pop %v3713
  %v3722 = vtanh.pop %v3714
  %v3723 = vtanh.pop %v3715
  %v3724 = vtanh.pop %v3716
  %v3725 = vsub.f32 1.0, %v3670
  %v3726 = vsub.f32 1.0, %v3672
  %v3727 = vsub.f32 1.0, %v3674
  %v3728 = vsub.f32 1.0, %v3676
  %v3729 = vsub.f32 1.0, %v3678
  %v3730 = vsub.f32 1.0, %v3680
  %v3731 = vsub.f32 1.0, %v3682
  %v3732 = vsub.f32 1.0, %v3684
  %v3733 = vmul.f32 %v3725, %v3717
  %v3734 = vmul.f32 %v3726, %v3718
  %v3735 = vmul.f32 %v3727, %v3719
  %v3736 = vmul.f32 %v3728, %v3720
  %v3737 = vmul.f32 %v3729, %v3721
  %v3738 = vmul.f32 %v3730, %v3722
  %v3739 = vmul.f32 %v3731, %v3723
  %v3740 = vmul.f32 %v3732, %v3724
  %v3741 = vrot.slane %v3327, 2
  %v3742 = vrot.slane %v3327, 3
  %v3743 = vrot.slane %v3327, 4
  %v3744 = vrot.slane %v3327, 5
  %v3745 = vrot.slane %v3327, 6
  %v3746 = vrot.slane %v3327, 7
  %v3747 = vrot.slane %v3327, 1
  %v3756 = vmul.f32 %v3670, %v3741
  %v3757 = vmul.f32 %v3672, %v3742
  %v3758 = vmul.f32 %v3674, %v3743
  %v3759 = vmul.f32 %v3676, %v3744
  %v3760 = vmul.f32 %v3678, %v3745
  %v3761 = vmul.f32 %v3680, %v3746
  %v3762 = vmul.f32 %v3682, %v3327
  %v3763 = vmul.f32 %v3684, %v3747
  %v3764 = vadd.f32 %v3733, %v3756
  %v3765 = vadd.f32 %v3734, %v3757
  %v3766 = vadd.f32 %v3735, %v3758
  %v3767 = vadd.f32 %v3736, %v3759
  %v3768 = vadd.f32 %v3737, %v3760
  %v3769 = vadd.f32 %v3738, %v3761
  %v3770 = vadd.f32 %v3739, %v3762
  %v3771 = vadd.f32 %v3740, %v3763
  %s3772 = sadd.s32 %s463, 6
  %v3773 = vstv %s3772
  %vm3774 = vcmp.lt.s32.totalorder %v3773, %v462
  %v3775 = vsel %vm3774, 1, 0
  %3776 = vset.pattern.permute.xlu0 0
  %3777 = vperm.xlu0 %3776, %v3775
  %v3778 = vpop.permute.xlu0 %3777
  %vm3779 = vcmp.eq.s32.totalorder %v3778, 1
  %v3788 = vrot.slane %v3764, 6
  %v3789 = vrot.slane %v3765, 5
  %v3790 = vsel %vm926, %v3789, %v3788
  %v3791 = vrot.slane %v3766, 4
  %v3792 = vsel %vm929, %v3791, %v3790
  %v3793 = vrot.slane %v3767, 3
  %v3794 = vsel %vm932, %v3793, %v3792
  %v3795 = vrot.slane %v3768, 2
  %v3796 = vsel %vm935, %v3795, %v3794
  %v3797 = vrot.slane %v3769, 1
  %v3798 = vsel %vm938, %v3797, %v3796
  %v3799 = vsel %vm941, %v3770, %v3798
  %v3800 = vrot.slane %v3771, 7
  %v3801 = vsel %vm944, %v3800, %v3799
  %v3803 = vsel %vm3779, %v3801, %v3327
  %v3805 = vsel %vm465, %v3803, 0
  %3807 = vmatprep.subr.mxu0 0.0
  %3808 = vmatpush1.msra.mxu0 0.0
  %3809 = vmatprep.subr.mxu0 0.0
  %3810 = vmatpush1.msra.mxu0 0.0
  %3811 = vmatprep.subr.mxu0 0.0
  %3812 = vmatpush1.msra.mxu0 0.0
  %3813 = vmatprep.subr.mxu0 0.0
  %3814 = vmatpush1.msra.mxu0 0.0
  %3815 = vmatprep.subr.mxu0 0.0
  %3816 = vmatpush1.msra.mxu0 0.0
  %3817 = vmatprep.subr.mxu0 0.0
  %3818 = vmatpush1.msra.mxu0 0.0
  %3819 = vmatprep.subr.mxu0 0.0
  %3820 = vmatpush1.msra.mxu0 0.0
  %3821 = vmatprep.subr.mxu0 0.0
  %3822 = vmatpush1.msra.mxu0 0.0
  %3823 = vmatprep.subr.mxu0 0.0
  %3824 = vmatpush1.msra.mxu0 0.0
  %3825 = vmatprep.subr.mxu0 0.0
  %3826 = vmatpush1.msra.mxu0 0.0
  %3827 = vmatprep.subr.mxu0 0.0
  %3828 = vmatpush1.msra.mxu0 0.0
  %3829 = vmatprep.subr.mxu0 0.0
  %3830 = vmatpush1.msra.mxu0 0.0
  %3831 = vmatprep.subr.mxu0 0.0
  %3832 = vmatpush1.msra.mxu0 %v446
  %3833 = vmatprep.subr.mxu0 0.0
  %3834 = vmatpush1.msra.mxu0 %v445
  %3835 = vmatprep.subr.mxu0 0.0
  %3836 = vmatpush1.msra.mxu0 %v444
  %3837 = vmatprep.subr.mxu0 0.0
  %3838 = vmatpush1.msra.mxu0 %v443
  %3839 = vmatprep.subr.mxu0 0.0
  %3840 = vmatpush2.msra.mxu0 0.0
  %3841 = vmatprep.subr.mxu0 0.0
  %3842 = vmatpush2.msra.mxu0 0.0
  %3843 = vmatprep.subr.mxu0 0.0
  %3844 = vmatpush2.msra.mxu0 0.0
  %3845 = vmatprep.subr.mxu0 0.0
  %3846 = vmatpush2.msra.mxu0 0.0
  %3847 = vmatprep.subr.mxu0 0.0
  %3848 = vmatpush2.msra.mxu0 0.0
  %3849 = vmatprep.subr.mxu0 0.0
  %3850 = vmatpush2.msra.mxu0 0.0
  %3851 = vmatprep.subr.mxu0 0.0
  %3852 = vmatpush2.msra.mxu0 0.0
  %3853 = vmatprep.subr.mxu0 0.0
  %3854 = vmatpush2.msra.mxu0 0.0
  %3855 = vmatprep.subr.mxu0 0.0
  %3856 = vmatpush2.msra.mxu0 0.0
  %3857 = vmatprep.subr.mxu0 0.0
  %3858 = vmatpush2.msra.mxu0 0.0
  %3859 = vmatprep.subr.mxu0 0.0
  %3860 = vmatpush2.msra.mxu0 0.0
  %3861 = vmatprep.subr.mxu0 0.0
  %3862 = vmatpush2.msra.mxu0 0.0
  %3863 = vmatprep.subr.mxu0 0.0
  %3864 = vmatpush2.msra.mxu0 0.0
  %3865 = vmatprep.subr.mxu0 0.0
  %3866 = vmatpush2.msra.mxu0 0.0
  %3867 = vmatprep.subr.mxu0 0.0
  %3868 = vmatpush2.msra.mxu0 0.0
  %3869 = vmatprep.subr.mxu0 0.0
  %3870 = vmatpush2.msra.mxu0 0.0
  %3871 = vmatprep.mubr.f32.mxu0 0.0
  %3872 = vmatmul.mubr.f32.gmra.mxu0 %v3805
  %v3873 = vpop.f32.mrf.mxu0
  %v3874 = vadd.f32 0.0, %v3873
  %v3875 = vpop.f32.mrf.mxu0
  %3876 = vdwg.mxu0
  %3877 = vmatprep.subr.mxu0 0.0
  %3878 = vmatpush1.msra.mxu0 0.0
  %3879 = vmatprep.subr.mxu0 0.0
  %3880 = vmatpush1.msra.mxu0 0.0
  %3881 = vmatprep.subr.mxu0 0.0
  %3882 = vmatpush1.msra.mxu0 0.0
  %3883 = vmatprep.subr.mxu0 0.0
  %3884 = vmatpush1.msra.mxu0 0.0
  %3885 = vmatprep.subr.mxu0 0.0
  %3886 = vmatpush1.msra.mxu0 0.0
  %3887 = vmatprep.subr.mxu0 0.0
  %3888 = vmatpush1.msra.mxu0 0.0
  %3889 = vmatprep.subr.mxu0 0.0
  %3890 = vmatpush1.msra.mxu0 0.0
  %3891 = vmatprep.subr.mxu0 0.0
  %3892 = vmatpush1.msra.mxu0 0.0
  %3893 = vmatprep.subr.mxu0 0.0
  %3894 = vmatpush1.msra.mxu0 0.0
  %3895 = vmatprep.subr.mxu0 0.0
  %3896 = vmatpush1.msra.mxu0 0.0
  %3897 = vmatprep.subr.mxu0 0.0
  %3898 = vmatpush1.msra.mxu0 0.0
  %3899 = vmatprep.subr.mxu0 0.0
  %3900 = vmatpush1.msra.mxu0 0.0
  %3901 = vmatprep.subr.mxu0 0.0
  %3902 = vmatpush1.msra.mxu0 %v450
  %3903 = vmatprep.subr.mxu0 0.0
  %3904 = vmatpush1.msra.mxu0 %v449
  %3905 = vmatprep.subr.mxu0 0.0
  %3906 = vmatpush1.msra.mxu0 %v448
  %3907 = vmatprep.subr.mxu0 0.0
  %3908 = vmatpush1.msra.mxu0 %v447
  %3909 = vmatprep.subr.mxu0 0.0
  %3910 = vmatpush2.msra.mxu0 0.0
  %3911 = vmatprep.subr.mxu0 0.0
  %3912 = vmatpush2.msra.mxu0 0.0
  %3913 = vmatprep.subr.mxu0 0.0
  %3914 = vmatpush2.msra.mxu0 0.0
  %3915 = vmatprep.subr.mxu0 0.0
  %3916 = vmatpush2.msra.mxu0 0.0
  %3917 = vmatprep.subr.mxu0 0.0
  %3918 = vmatpush2.msra.mxu0 0.0
  %3919 = vmatprep.subr.mxu0 0.0
  %3920 = vmatpush2.msra.mxu0 0.0
  %3921 = vmatprep.subr.mxu0 0.0
  %3922 = vmatpush2.msra.mxu0 0.0
  %3923 = vmatprep.subr.mxu0 0.0
  %3924 = vmatpush2.msra.mxu0 0.0
  %3925 = vmatprep.subr.mxu0 0.0
  %3926 = vmatpush2.msra.mxu0 0.0
  %3927 = vmatprep.subr.mxu0 0.0
  %3928 = vmatpush2.msra.mxu0 0.0
  %3929 = vmatprep.subr.mxu0 0.0
  %3930 = vmatpush2.msra.mxu0 0.0
  %3931 = vmatprep.subr.mxu0 0.0
  %3932 = vmatpush2.msra.mxu0 0.0
  %3933 = vmatprep.subr.mxu0 0.0
  %3934 = vmatpush2.msra.mxu0 0.0
  %3935 = vmatprep.subr.mxu0 0.0
  %3936 = vmatpush2.msra.mxu0 0.0
  %3937 = vmatprep.subr.mxu0 0.0
  %3938 = vmatpush2.msra.mxu0 0.0
  %3939 = vmatprep.subr.mxu0 0.0
  %3940 = vmatpush2.msra.mxu0 0.0
  %3941 = vmatprep.mubr.f32.mxu0 0.0
  %3942 = vmatmul.mubr.f32.gmra.mxu0 %v3805
  %v3943 = vpop.f32.mrf.mxu0
  %v3944 = vadd.f32 0.0, %v3943
  %v3945 = vpop.f32.mrf.mxu0
  %3946 = vdwg.mxu0
  %3947 = vmatprep.subr.mxu0 0.0
  %3948 = vmatpush1.msra.mxu0 0.0
  %3949 = vmatprep.subr.mxu0 0.0
  %3950 = vmatpush1.msra.mxu0 0.0
  %3951 = vmatprep.subr.mxu0 0.0
  %3952 = vmatpush1.msra.mxu0 0.0
  %3953 = vmatprep.subr.mxu0 0.0
  %3954 = vmatpush1.msra.mxu0 0.0
  %3955 = vmatprep.subr.mxu0 0.0
  %3956 = vmatpush1.msra.mxu0 0.0
  %3957 = vmatprep.subr.mxu0 0.0
  %3958 = vmatpush1.msra.mxu0 0.0
  %3959 = vmatprep.subr.mxu0 0.0
  %3960 = vmatpush1.msra.mxu0 0.0
  %3961 = vmatprep.subr.mxu0 0.0
  %3962 = vmatpush1.msra.mxu0 0.0
  %3963 = vmatprep.subr.mxu0 0.0
  %3964 = vmatpush1.msra.mxu0 0.0
  %3965 = vmatprep.subr.mxu0 0.0
  %3966 = vmatpush1.msra.mxu0 0.0
  %3967 = vmatprep.subr.mxu0 0.0
  %3968 = vmatpush1.msra.mxu0 0.0
  %3969 = vmatprep.subr.mxu0 0.0
  %3970 = vmatpush1.msra.mxu0 0.0
  %3971 = vmatprep.subr.mxu0 0.0
  %3972 = vmatpush1.msra.mxu0 %v454
  %3973 = vmatprep.subr.mxu0 0.0
  %3974 = vmatpush1.msra.mxu0 %v453
  %3975 = vmatprep.subr.mxu0 0.0
  %3976 = vmatpush1.msra.mxu0 %v452
  %3977 = vmatprep.subr.mxu0 0.0
  %3978 = vmatpush1.msra.mxu0 %v451
  %3979 = vmatprep.subr.mxu0 0.0
  %3980 = vmatpush2.msra.mxu0 0.0
  %3981 = vmatprep.subr.mxu0 0.0
  %3982 = vmatpush2.msra.mxu0 0.0
  %3983 = vmatprep.subr.mxu0 0.0
  %3984 = vmatpush2.msra.mxu0 0.0
  %3985 = vmatprep.subr.mxu0 0.0
  %3986 = vmatpush2.msra.mxu0 0.0
  %3987 = vmatprep.subr.mxu0 0.0
  %3988 = vmatpush2.msra.mxu0 0.0
  %3989 = vmatprep.subr.mxu0 0.0
  %3990 = vmatpush2.msra.mxu0 0.0
  %3991 = vmatprep.subr.mxu0 0.0
  %3992 = vmatpush2.msra.mxu0 0.0
  %3993 = vmatprep.subr.mxu0 0.0
  %3994 = vmatpush2.msra.mxu0 0.0
  %3995 = vmatprep.subr.mxu0 0.0
  %3996 = vmatpush2.msra.mxu0 0.0
  %3997 = vmatprep.subr.mxu0 0.0
  %3998 = vmatpush2.msra.mxu0 0.0
  %3999 = vmatprep.subr.mxu0 0.0
  %4000 = vmatpush2.msra.mxu0 0.0
  %4001 = vmatprep.subr.mxu0 0.0
  %4002 = vmatpush2.msra.mxu0 0.0
  %4003 = vmatprep.subr.mxu0 0.0
  %4004 = vmatpush2.msra.mxu0 0.0
  %4005 = vmatprep.subr.mxu0 0.0
  %4006 = vmatpush2.msra.mxu0 0.0
  %4007 = vmatprep.subr.mxu0 0.0
  %4008 = vmatpush2.msra.mxu0 0.0
  %4009 = vmatprep.subr.mxu0 0.0
  %4010 = vmatpush2.msra.mxu0 0.0
  %4011 = vmatprep.mubr.f32.mxu0 0.0
  %4012 = vmatmul.mubr.f32.gmra.mxu0 %v3805
  %v4013 = vpop.f32.mrf.mxu0
  %v4014 = vadd.f32 %v460, %v4013
  %v4015 = vpop.f32.mrf.mxu0
  %4016 = vdwg.mxu0
  %v4018 = vrot.slane %v3874, 1
  %v4019 = vrot.slane %v3874, 2
  %v4020 = vrot.slane %v3874, 3
  %v4021 = vrot.slane %v3874, 4
  %v4022 = vrot.slane %v3874, 5
  %v4023 = vrot.slane %v3874, 6
  %v4024 = vrot.slane %v3874, 7
  %v4033 = vadd.f32 %v173, %v4018
  %v4034 = vadd.f32 %v178, %v4019
  %v4035 = vadd.f32 %v183, %v4020
  %v4036 = vadd.f32 %v188, %v4021
  %v4037 = vadd.f32 %v193, %v4022
  %v4038 = vadd.f32 %v198, %v4023
  %v4039 = vadd.f32 %v203, %v4024
  %v4040 = vadd.f32 %v208, %v3874
  %v4041 = vxor.u32 %v4033, 2147483648
  %v4042 = vxor.u32 %v4034, 2147483648
  %v4043 = vxor.u32 %v4035, 2147483648
  %v4044 = vxor.u32 %v4036, 2147483648
  %v4045 = vxor.u32 %v4037, 2147483648
  %v4046 = vxor.u32 %v4038, 2147483648
  %v4047 = vxor.u32 %v4039, 2147483648
  %v4048 = vxor.u32 %v4040, 2147483648
  %v4049 = vmul.f32 %v4041, 1.442695
  %v4050 = vpow.pop %v4049
  %v4051 = vmul.f32 %v4042, 1.442695
  %v4052 = vpow.pop %v4051
  %v4053 = vmul.f32 %v4043, 1.442695
  %v4054 = vpow.pop %v4053
  %v4055 = vmul.f32 %v4044, 1.442695
  %v4056 = vpow.pop %v4055
  %v4057 = vmul.f32 %v4045, 1.442695
  %v4058 = vpow.pop %v4057
  %v4059 = vmul.f32 %v4046, 1.442695
  %v4060 = vpow.pop %v4059
  %v4061 = vmul.f32 %v4047, 1.442695
  %v4062 = vpow.pop %v4061
  %v4063 = vmul.f32 %v4048, 1.442695
  %v4064 = vpow.pop %v4063
  %v4065 = vadd.f32 %v4050, 1.0
  %v4066 = vadd.f32 %v4052, 1.0
  %v4067 = vadd.f32 %v4054, 1.0
  %v4068 = vadd.f32 %v4056, 1.0
  %v4069 = vadd.f32 %v4058, 1.0
  %v4070 = vadd.f32 %v4060, 1.0
  %v4071 = vadd.f32 %v4062, 1.0
  %v4072 = vadd.f32 %v4064, 1.0
  %v4073 = vrcp.pop %v4065
  %v4074 = vmul.f32 1.0, %v4073
  %v4075 = vrcp.pop %v4066
  %v4076 = vmul.f32 1.0, %v4075
  %v4077 = vrcp.pop %v4067
  %v4078 = vmul.f32 1.0, %v4077
  %v4079 = vrcp.pop %v4068
  %v4080 = vmul.f32 1.0, %v4079
  %v4081 = vrcp.pop %v4069
  %v4082 = vmul.f32 1.0, %v4081
  %v4083 = vrcp.pop %v4070
  %v4084 = vmul.f32 1.0, %v4083
  %v4085 = vrcp.pop %v4071
  %v4086 = vmul.f32 1.0, %v4085
  %v4087 = vrcp.pop %v4072
  %v4088 = vmul.f32 1.0, %v4087
  %v4090 = vrot.slane %v3944, 1
  %v4091 = vrot.slane %v3944, 2
  %v4092 = vrot.slane %v3944, 3
  %v4093 = vrot.slane %v3944, 4
  %v4094 = vrot.slane %v3944, 5
  %v4095 = vrot.slane %v3944, 6
  %v4096 = vrot.slane %v3944, 7
  %v4105 = vadd.f32 %v289, %v4090
  %v4106 = vadd.f32 %v294, %v4091
  %v4107 = vadd.f32 %v299, %v4092
  %v4108 = vadd.f32 %v304, %v4093
  %v4109 = vadd.f32 %v309, %v4094
  %v4110 = vadd.f32 %v314, %v4095
  %v4111 = vadd.f32 %v319, %v4096
  %v4112 = vadd.f32 %v324, %v3944
  %v4113 = vxor.u32 %v4105, 2147483648
  %v4114 = vxor.u32 %v4106, 2147483648
  %v4115 = vxor.u32 %v4107, 2147483648
  %v4116 = vxor.u32 %v4108, 2147483648
  %v4117 = vxor.u32 %v4109, 2147483648
  %v4118 = vxor.u32 %v4110, 2147483648
  %v4119 = vxor.u32 %v4111, 2147483648
  %v4120 = vxor.u32 %v4112, 2147483648
  %v4121 = vmul.f32 %v4113, 1.442695
  %v4122 = vpow.pop %v4121
  %v4123 = vmul.f32 %v4114, 1.442695
  %v4124 = vpow.pop %v4123
  %v4125 = vmul.f32 %v4115, 1.442695
  %v4126 = vpow.pop %v4125
  %v4127 = vmul.f32 %v4116, 1.442695
  %v4128 = vpow.pop %v4127
  %v4129 = vmul.f32 %v4117, 1.442695
  %v4130 = vpow.pop %v4129
  %v4131 = vmul.f32 %v4118, 1.442695
  %v4132 = vpow.pop %v4131
  %v4133 = vmul.f32 %v4119, 1.442695
  %v4134 = vpow.pop %v4133
  %v4135 = vmul.f32 %v4120, 1.442695
  %v4136 = vpow.pop %v4135
  %v4137 = vadd.f32 %v4122, 1.0
  %v4138 = vadd.f32 %v4124, 1.0
  %v4139 = vadd.f32 %v4126, 1.0
  %v4140 = vadd.f32 %v4128, 1.0
  %v4141 = vadd.f32 %v4130, 1.0
  %v4142 = vadd.f32 %v4132, 1.0
  %v4143 = vadd.f32 %v4134, 1.0
  %v4144 = vadd.f32 %v4136, 1.0
  %v4145 = vrcp.pop %v4137
  %v4146 = vmul.f32 1.0, %v4145
  %v4147 = vrcp.pop %v4138
  %v4148 = vmul.f32 1.0, %v4147
  %v4149 = vrcp.pop %v4139
  %v4150 = vmul.f32 1.0, %v4149
  %v4151 = vrcp.pop %v4140
  %v4152 = vmul.f32 1.0, %v4151
  %v4153 = vrcp.pop %v4141
  %v4154 = vmul.f32 1.0, %v4153
  %v4155 = vrcp.pop %v4142
  %v4156 = vmul.f32 1.0, %v4155
  %v4157 = vrcp.pop %v4143
  %v4158 = vmul.f32 1.0, %v4157
  %v4159 = vrcp.pop %v4144
  %v4160 = vmul.f32 1.0, %v4159
  %v4162 = vrot.slane %v4014, 1
  %v4163 = vrot.slane %v4014, 2
  %v4164 = vrot.slane %v4014, 3
  %v4165 = vrot.slane %v4014, 4
  %v4166 = vrot.slane %v4014, 5
  %v4167 = vrot.slane %v4014, 6
  %v4168 = vrot.slane %v4014, 7
  %v4177 = vmul.f32 %v4074, %v4162
  %v4178 = vmul.f32 %v4076, %v4163
  %v4179 = vmul.f32 %v4078, %v4164
  %v4180 = vmul.f32 %v4080, %v4165
  %v4181 = vmul.f32 %v4082, %v4166
  %v4182 = vmul.f32 %v4084, %v4167
  %v4183 = vmul.f32 %v4086, %v4168
  %v4184 = vmul.f32 %v4088, %v4014
  %v4185 = vadd.f32 %v405, %v4177
  %v4186 = vadd.f32 %v410, %v4178
  %v4187 = vadd.f32 %v415, %v4179
  %v4188 = vadd.f32 %v420, %v4180
  %v4189 = vadd.f32 %v425, %v4181
  %v4190 = vadd.f32 %v430, %v4182
  %v4191 = vadd.f32 %v435, %v4183
  %v4192 = vadd.f32 %v440, %v4184
  %v4193 = vtanh.pop %v4185
  %v4194 = vtanh.pop %v4186
  %v4195 = vtanh.pop %v4187
  %v4196 = vtanh.pop %v4188
  %v4197 = vtanh.pop %v4189
  %v4198 = vtanh.pop %v4190
  %v4199 = vtanh.pop %v4191
  %v4200 = vtanh.pop %v4192
  %v4201 = vsub.f32 1.0, %v4146
  %v4202 = vsub.f32 1.0, %v4148
  %v4203 = vsub.f32 1.0, %v4150
  %v4204 = vsub.f32 1.0, %v4152
  %v4205 = vsub.f32 1.0, %v4154
  %v4206 = vsub.f32 1.0, %v4156
  %v4207 = vsub.f32 1.0, %v4158
  %v4208 = vsub.f32 1.0, %v4160
  %v4209 = vmul.f32 %v4201, %v4193
  %v4210 = vmul.f32 %v4202, %v4194
  %v4211 = vmul.f32 %v4203, %v4195
  %v4212 = vmul.f32 %v4204, %v4196
  %v4213 = vmul.f32 %v4205, %v4197
  %v4214 = vmul.f32 %v4206, %v4198
  %v4215 = vmul.f32 %v4207, %v4199
  %v4216 = vmul.f32 %v4208, %v4200
  %v4217 = vrot.slane %v3803, 1
  %v4218 = vrot.slane %v3803, 2
  %v4219 = vrot.slane %v3803, 3
  %v4220 = vrot.slane %v3803, 4
  %v4221 = vrot.slane %v3803, 5
  %v4222 = vrot.slane %v3803, 6
  %v4223 = vrot.slane %v3803, 7
  %v4232 = vmul.f32 %v4146, %v4217
  %v4233 = vmul.f32 %v4148, %v4218
  %v4234 = vmul.f32 %v4150, %v4219
  %v4235 = vmul.f32 %v4152, %v4220
  %v4236 = vmul.f32 %v4154, %v4221
  %v4237 = vmul.f32 %v4156, %v4222
  %v4238 = vmul.f32 %v4158, %v4223
  %v4239 = vmul.f32 %v4160, %v3803
  %v4240 = vadd.f32 %v4209, %v4232
  %v4241 = vadd.f32 %v4210, %v4233
  %v4242 = vadd.f32 %v4211, %v4234
  %v4243 = vadd.f32 %v4212, %v4235
  %v4244 = vadd.f32 %v4213, %v4236
  %v4245 = vadd.f32 %v4214, %v4237
  %v4246 = vadd.f32 %v4215, %v4238
  %v4247 = vadd.f32 %v4216, %v4239
  %s4248 = sadd.s32 %s463, 7
  %v4249 = vstv %s4248
  %vm4250 = vcmp.lt.s32.totalorder %v4249, %v462
  %v4251 = vsel %vm4250, 1, 0
  %4252 = vset.pattern.permute.xlu0 0
  %4253 = vperm.xlu0 %4252, %v4251
  %v4254 = vpop.permute.xlu0 %4253
  %vm4255 = vcmp.eq.s32.totalorder %v4254, 1
  %v4264 = vrot.slane %v4240, 7
  %v4265 = vrot.slane %v4241, 6
  %v4266 = vsel %vm926, %v4265, %v4264
  %v4267 = vrot.slane %v4242, 5
  %v4268 = vsel %vm929, %v4267, %v4266
  %v4269 = vrot.slane %v4243, 4
  %v4270 = vsel %vm932, %v4269, %v4268
  %v4271 = vrot.slane %v4244, 3
  %v4272 = vsel %vm935, %v4271, %v4270
  %v4273 = vrot.slane %v4245, 2
  %v4274 = vsel %vm938, %v4273, %v4272
  %v4275 = vrot.slane %v4246, 1
  %v4276 = vsel %vm941, %v4275, %v4274
  %v4277 = vsel %vm944, %v4247, %v4276
  %v4279 = vsel %vm4255, %v4277, %v3803
  %4280 = vst.msk [vmem:[#allocation2] sm:$0xff] %vm465, %v4279
  // Predicated region
  $region70: #{vnet_forward.1} parent=0 // pred_check
    %p4281 = pneg %p55
  $region71: #{vnet_forward.1} parent=0 // pred_check_branch
    %4283 = sbr.rel (%p4281) target = $region73
  $region72: #{vnet_forward.1} parent=0 // pred_region
    %v4284 = vld [vmem:[%s12] sm:$0xff]
    %v4285 = vld [vmem:[%s12 + $0x8] sm:$0xff]
    %v4286 = vld [vmem:[%s12 + $0x10] sm:$0xff]
    %v4287 = vld [vmem:[%s12 + $0x18] sm:$0xff]
    %v4288 = vld [vmem:[%s13] sm:$0x1]
    %v4290 = vlaneseq
    %v4291 = vshrl.u32 %v4290, 7
    %v4292 = vsub.s32 0, %v4291
    %v4293 = vrot.slane %v4288, %v4292
    %v4296 = vsel %vm465, %v4279, 0
    %4298 = vmatprep.subr.mxu0 0.0
    %4299 = vmatpush1.msra.mxu0 0.0
    %4300 = vmatprep.subr.mxu0 0.0
    %4301 = vmatpush1.msra.mxu0 0.0
    %4302 = vmatprep.subr.mxu0 0.0
    %4303 = vmatpush1.msra.mxu0 0.0
    %4304 = vmatprep.subr.mxu0 0.0
    %4305 = vmatpush1.msra.mxu0 0.0
    %4306 = vmatprep.subr.mxu0 0.0
    %4307 = vmatpush1.msra.mxu0 0.0
    %4308 = vmatprep.subr.mxu0 0.0
    %4309 = vmatpush1.msra.mxu0 0.0
    %4310 = vmatprep.subr.mxu0 0.0
    %4311 = vmatpush1.msra.mxu0 0.0
    %4312 = vmatprep.subr.mxu0 0.0
    %4313 = vmatpush1.msra.mxu0 0.0
    %4314 = vmatprep.subr.mxu0 0.0
    %4315 = vmatpush1.msra.mxu0 0.0
    %4316 = vmatprep.subr.mxu0 0.0
    %4317 = vmatpush1.msra.mxu0 0.0
    %4318 = vmatprep.subr.mxu0 0.0
    %4319 = vmatpush1.msra.mxu0 0.0
    %4320 = vmatprep.subr.mxu0 0.0
    %4321 = vmatpush1.msra.mxu0 0.0
    %4322 = vmatprep.subr.mxu0 0.0
    %4323 = vmatpush1.msra.mxu0 %v4287
    %4324 = vmatprep.subr.mxu0 0.0
    %4325 = vmatpush1.msra.mxu0 %v4286
    %4326 = vmatprep.subr.mxu0 0.0
    %4327 = vmatpush1.msra.mxu0 %v4285
    %4328 = vmatprep.subr.mxu0 0.0
    %4329 = vmatpush1.msra.mxu0 %v4284
    %4330 = vmatprep.subr.mxu0 0.0
    %4331 = vmatpush2.msra.mxu0 0.0
    %4332 = vmatprep.subr.mxu0 0.0
    %4333 = vmatpush2.msra.mxu0 0.0
    %4334 = vmatprep.subr.mxu0 0.0
    %4335 = vmatpush2.msra.mxu0 0.0
    %4336 = vmatprep.subr.mxu0 0.0
    %4337 = vmatpush2.msra.mxu0 0.0
    %4338 = vmatprep.subr.mxu0 0.0
    %4339 = vmatpush2.msra.mxu0 0.0
    %4340 = vmatprep.subr.mxu0 0.0
    %4341 = vmatpush2.msra.mxu0 0.0
    %4342 = vmatprep.subr.mxu0 0.0
    %4343 = vmatpush2.msra.mxu0 0.0
    %4344 = vmatprep.subr.mxu0 0.0
    %4345 = vmatpush2.msra.mxu0 0.0
    %4346 = vmatprep.subr.mxu0 0.0
    %4347 = vmatpush2.msra.mxu0 0.0
    %4348 = vmatprep.subr.mxu0 0.0
    %4349 = vmatpush2.msra.mxu0 0.0
    %4350 = vmatprep.subr.mxu0 0.0
    %4351 = vmatpush2.msra.mxu0 0.0
    %4352 = vmatprep.subr.mxu0 0.0
    %4353 = vmatpush2.msra.mxu0 0.0
    %4354 = vmatprep.subr.mxu0 0.0
    %4355 = vmatpush2.msra.mxu0 0.0
    %4356 = vmatprep.subr.mxu0 0.0
    %4357 = vmatpush2.msra.mxu0 0.0
    %4358 = vmatprep.subr.mxu0 0.0
    %4359 = vmatpush2.msra.mxu0 0.0
    %4360 = vmatprep.subr.mxu0 0.0
    %4361 = vmatpush2.msra.mxu0 0.0
    %4362 = vmatprep.mubr.f32.mxu0 0.0
    %4363 = vmatmul.mubr.f32.gmra.mxu0 %v4296
    %v4364 = vpop.f32.mrf.mxu0
    %v4365 = vadd.f32 %v4293, %v4364
    %v4366 = vpop.f32.mrf.mxu0
    %4367 = vdwg.mxu0
    %v4368 = vmax.f32 %v4365, 0.0
    %v4369 = vld [vmem:[%s14] sm:$0x1]
    %v4371 = vlaneseq
    %v4372 = vshrl.u32 %v4371, 7
    %v4373 = vsub.s32 0, %v4372
    %v4374 = vrot.slane %v4369, %v4373
    %v4376 = vmul.f32 %v4368, %v4374
    %v4377 = vsel %vm465, %v4376, 0.0
    %4378 = vadd.xlane.f32.xlu0 %v4377
    %v4379 = vpop.xlane.xlu0 %4378
    %v4380 = vld [vmem:[#allocation3] sm:$0x1]
    %v4382 = vlaneseq
    %v4383 = vshrl.u32 %v4382, 7
    %v4384 = vsub.s32 0, %v4383
    %v4385 = vrot.slane %v4380, %v4384
    %v4387 = vadd.f32 %v4379, %v4385
    %vm4388 = vcmask 7168
    %4389 = vst.msk [vmem:[%s16] sm:$0xff] %vm4388, %v4387
  $region73: #{vnet_forward.1} parent=0 // pred_fallthru
    _
  // Predicated region
  $region74: #{vnet_forward.1} parent=0 // pred_check
    _
  $region75: #{vnet_forward.1} parent=0 // pred_check_branch
    %4391 = sbr.rel (0) target = $region77
  $region76: #{vnet_forward.1} parent=0 // pred_region
    _
  $region77: #{vnet_forward.1} parent=0 // pred_fallthru
    _
  // Predicated region
  $region78: #{vnet_forward.1} parent=0 // pred_check
    _
  $region79: #{vnet_forward.1} parent=0 // pred_check_branch
    %4393 = sbr.rel (0) target = $region81
  $region80: #{vnet_forward.1} parent=0 // pred_region
    _
  $region81: #{vnet_forward.1} parent=0 // pred_fallthru
    _

</llo_original>
